<compile_context>
chip_gen: v7x
topology: tpu7x:2x2x1
jax: 0.10.0
libtpu: 0.0.40
codegen_flags: <defaults>
</compile_context>

<pallas_src>
import jax
import jax.numpy as jnp
from jax import lax
from jax.experimental import pallas as pl
from jax.experimental.pallas import tpu as pltpu

LANE = 128
SUB = 16  # sublane tile multiple for bf16 operands ((16, 128) packing)


def _round_up(x, m):
    return (x + m - 1) // m * m


def _choose_m_tile(m, target=256):
    """M tile that is a multiple of 16 and minimizes zero-padding waste."""
    g = max(1, -(-m // target))            # number of grid steps
    tm = _round_up(-(-m // g), SUB)        # rows per step
    return tm, g * tm                      # (tile, padded M)


# ----------------------------------------------------------------------------
# Kernel 1: fused conv-as-matmul + bias + ReLU + 2x2 max-pool.
#   a_ref : (4, TM, Kp) bf16   -- the 4 pooling taps of the im2col patches
#   w_ref : (Kp, Np)    bf16   -- padded (K, O) conv weight (VMEM resident)
#   b_ref : (1,  Np)    f32    -- padded bias
#   o_ref : (TM, Np)    bf16   -- pooled + relu'd output tile (lane-dense)
# ----------------------------------------------------------------------------
def _conv_relu_pool_kernel(a_ref, w_ref, b_ref, o_ref):
    w = w_ref[...]
    b = b_ref[...]
    d0 = jnp.dot(a_ref[0], w, preferred_element_type=jnp.float32)
    d1 = jnp.dot(a_ref[1], w, preferred_element_type=jnp.float32)
    d2 = jnp.dot(a_ref[2], w, preferred_element_type=jnp.float32)
    d3 = jnp.dot(a_ref[3], w, preferred_element_type=jnp.float32)
    # relu(max(.)) == max(relu(.)) and the bias is tap-invariant -> add once.
    m = jnp.maximum(jnp.maximum(d0, d1), jnp.maximum(d2, d3))
    o_ref[...] = jnp.maximum(m + b, 0.0).astype(o_ref.dtype)


def conv_relu_pool_call(patches4, w_mat, b_row, tm):
    _, mp_pad, kp = patches4.shape
    np_ = w_mat.shape[1]
    return pl.pallas_call(
        _conv_relu_pool_kernel,
        out_shape=jax.ShapeDtypeStruct((mp_pad, np_), jnp.bfloat16),
        grid=(mp_pad // tm,),
        in_specs=[
            pl.BlockSpec((4, tm, kp), lambda i: (0, i, 0)),
            pl.BlockSpec((kp, np_), lambda i: (0, 0)),
            pl.BlockSpec((1, np_), lambda i: (0, 0)),
        ],
        out_specs=pl.BlockSpec((tm, np_), lambda i: (i, 0)),
        compiler_params=pltpu.CompilerParams(
            dimension_semantics=("parallel",),
            vmem_limit_bytes=32 * 1024 * 1024,
        ),
    )(patches4, w_mat, b_row)


# ----------------------------------------------------------------------------
# Kernel 2: fused FC stack  relu(x@W1+b1) -> relu(@W2+b2) -> @W3+b3.
# All weights (padded, bf16) stay resident in VMEM; one launch total.
# ----------------------------------------------------------------------------
def _fc_stack_kernel(x_ref, w1_ref, b1_ref, w2_ref, b2_ref, w3_ref, b3_ref,
                     o_ref):
    h = jnp.dot(x_ref[...], w1_ref[...], preferred_element_type=jnp.float32)
    h = jnp.maximum(h + b1_ref[...], 0.0)
    h = jnp.dot(h.astype(w2_ref.dtype), w2_ref[...],
                preferred_element_type=jnp.float32)
    h = jnp.maximum(h + b2_ref[...], 0.0)
    h = jnp.dot(h.astype(w3_ref.dtype), w3_ref[...],
                preferred_element_type=jnp.float32)
    o_ref[...] = (h + b3_ref[...]).astype(o_ref.dtype)


def fc_stack_call(x, w1, b1, w2, b2, w3, b3, tb):
    mb_pad, k1 = x.shape
    np_ = w3.shape[1]
    return pl.pallas_call(
        _fc_stack_kernel,
        out_shape=jax.ShapeDtypeStruct((mb_pad, np_), jnp.float32),
        grid=(mb_pad // tb,),
        in_specs=[
            pl.BlockSpec((tb, k1), lambda i: (i, 0)),
            pl.BlockSpec(w1.shape, lambda i: (0, 0)),
            pl.BlockSpec(b1.shape, lambda i: (0, 0)),
            pl.BlockSpec(w2.shape, lambda i: (0, 0)),
            pl.BlockSpec(b2.shape, lambda i: (0, 0)),
            pl.BlockSpec(w3.shape, lambda i: (0, 0)),
            pl.BlockSpec(b3.shape, lambda i: (0, 0)),
        ],
        out_specs=pl.BlockSpec((tb, np_), lambda i: (i, 0)),
        compiler_params=pltpu.CompilerParams(
            dimension_semantics=("parallel",),
            vmem_limit_bytes=32 * 1024 * 1024,
        ),
    )(x, w1, b1, w2, b2, w3, b3)


# ----------------------------------------------------------------------------
# Wrapper glue: im2col in pool-tap-major layout, padding, layer composition.
# ----------------------------------------------------------------------------
def _im2col_pooled(x_nhwc, kh_sz, kw_sz):
    """Returns (4, N*Hp*Wp, KH*KW*C) patches: leading axis = 2x2 pool tap."""
    nb, h, w, c = x_nhwc.shape
    ho, wo = h - kh_sz + 1, w - kw_sz + 1
    hp, wp = ho // 2, wo // 2
    taps = []
    for di in (0, 1):
        for dj in (0, 1):
            cols = [
                x_nhwc[:, di + kh: di + kh + 2 * hp: 2,
                       dj + kw: dj + kw + 2 * wp: 2, :]
                for kh in range(kh_sz) for kw in range(kw_sz)
            ]
            tap = jnp.stack(cols, axis=3)            # (N, Hp, Wp, KH*KW, C)
            taps.append(tap.reshape(nb * hp * wp, kh_sz * kw_sz * c))
    return jnp.stack(taps, axis=0), (nb, hp, wp)


def conv_relu_pool_layer(x_nhwc, w_mat, b_row, out_ch, kh_sz=5, kw_sz=5):
    x_nhwc = x_nhwc.astype(jnp.bfloat16)
    patches, (nb, hp, wp) = _im2col_pooled(x_nhwc, kh_sz, kw_sz)
    mp = nb * hp * wp
    k = patches.shape[-1]
    kp = w_mat.shape[0]
    tm, mp_pad = _choose_m_tile(mp)
    patches = jnp.pad(patches, ((0, 0), (0, mp_pad - mp), (0, kp - k)))
    out = conv_relu_pool_call(patches, w_mat, b_row, tm)   # (mp_pad, 128) bf16
    return out[:mp, :out_ch].reshape(nb, hp, wp, out_ch)


def follower_cifar_forward(x_nchw, prep):
    (w1k, b1k, w2k, b2k, fw1k, fb1k, fw2k, fb2k, fw3k, fb3k) = prep
    x = jnp.transpose(x_nchw, (0, 2, 3, 1))                 # NCHW -> NHWC
    x = conv_relu_pool_layer(x, w1k, b1k, out_ch=6)         # (N,14,14,6)
    x = conv_relu_pool_layer(x, w2k, b2k, out_ch=16)        # (N,5,5,16) bf16
    nb = x.shape[0]
    feat = x.reshape(nb, -1)                                # (N,400) in (h,w,c)
    k1 = fw1k.shape[0]                                      # 512
    tb, mb_pad = _choose_m_tile(nb)
    feat = jnp.pad(feat, ((0, mb_pad - nb), (0, k1 - feat.shape[1])))
    out = fc_stack_call(feat, fw1k, fb1k, fw2k, fb2k, fw3k, fb3k, tb)
    return out[:nb, :10]


# ----------------------------------------------------------------------------
# One-time parameter re-layout: transpose to (K,N), fold PyTorch flatten order
# into fc1, zero-pad K/N to multiples of 128, cast matmul operands to bf16.
# ----------------------------------------------------------------------------
def prepare_params(params):
    w1, b1, w2, b2, fw1, fb1, fw2, fb2, fw3, fb3 = params

    def prep_conv(w_oihw, b):
        o, ci, kh, kw = w_oihw.shape
        k = kh * kw * ci
        kp, np_ = _round_up(k, LANE), _round_up(o, LANE)
        wm = jnp.transpose(w_oihw, (2, 3, 1, 0)).reshape(k, o)
        wm = jnp.pad(wm, ((0, kp - k), (0, np_ - o))).astype(jnp.bfloat16)
        bm = jnp.pad(b.reshape(1, o), ((0, 0), (0, np_ - o))).astype(jnp.float32)
        return wm, bm

    def prep_fc(w, b, kp, np_):
        out_f, in_f = w.shape
        wm = jnp.pad(w.T, ((0, kp - in_f), (0, np_ - out_f))).astype(jnp.bfloat16)
        bm = jnp.pad(b.reshape(1, out_f),
                     ((0, 0), (0, np_ - out_f))).astype(jnp.float32)
        return wm, bm

    w1k, b1k = prep_conv(w1, b1)          # (128,128), K=75 padded
    w2k, b2k = prep_conv(w2, b2)          # (256,128), K=150 padded
    # fold torch.flatten's (c,h,w) feature order into fc1 rows -> (h,w,c) order
    fw1_hwc = fw1.reshape(120, 16, 5, 5).transpose(0, 2, 3, 1).reshape(120, 400)
    fw1k, fb1k = prep_fc(fw1_hwc, fb1, 512, 128)
    fw2k, fb2k = prep_fc(fw2, fb2, 128, 128)
    fw3k, fb3k = prep_fc(fw3, fb3, 128, 128)
    return (w1k, b1k, w2k, b2k, fw1k, fb1k, fw2k, fb2k, fw3k, fb3k)


# ----------------------------------------------------------------------------
# Pure-JAX reference (sanity check only)
# ----------------------------------------------------------------------------
def reference_forward(x_nchw, params):
    w1, b1, w2, b2, fw1, fb1, fw2, fb2, fw3, fb3 = params
    dn = ("NCHW", "OIHW", "NCHW")

    def conv(x, w, b):
        y = lax.conv_general_dilated(x, w, (1, 1), "VALID", dimension_numbers=dn)
        return jax.nn.relu(y + b[None, :, None, None])

    def pool(x):
        return lax.reduce_window(
            x, -jnp.inf, lax.max, (1, 1, 2, 2), (1, 1, 2, 2), "VALID")

    y = pool(conv(x_nchw, w1, b1))
    y = pool(conv(y, w2, b2))
    y = y.reshape(y.shape[0], -1)
    y = jax.nn.relu(y @ fw1.T + fb1)
    y = jax.nn.relu(y @ fw2.T + fb2)
    return y @ fw3.T + fb3


# ----------------------------------------------------------------------------
# Deterministic parameter init (PyTorch-style shapes, uniform(-1/sqrt(fan_in)))
# ----------------------------------------------------------------------------
def init_params(key):
    ks = jax.random.split(key, 10)

    def u(k, shape, fan_in):
        bound = 1.0 / float(fan_in) ** 0.5
        return jax.random.uniform(k, shape, jnp.float32, -bound, bound)

    w1 = u(ks[0], (6, 3, 5, 5), 3 * 25)
    b1 = u(ks[1], (6,), 3 * 25)
    w2 = u(ks[2], (16, 6, 5, 5), 6 * 25)
    b2 = u(ks[3], (16,), 6 * 25)
    fw1 = u(ks[4], (120, 400), 400)
    fb1 = u(ks[5], (120,), 400)
    fw2 = u(ks[6], (84, 120), 120)
    fb2 = u(ks[7], (84,), 120)
    fw3 = u(ks[8], (10, 84), 84)
    fb3 = u(ks[9], (10,), 84)
    return (w1, b1, w2, b2, fw1, fb1, fw2, fb2, fw3, fb3)


if __name__ == "__main__":
    key = jax.random.PRNGKey(0)
    k_x, k_p = jax.random.split(key)
    x = jax.random.normal(k_x, (2, 3, 32, 32), dtype=jnp.float32)  # NCHW CIFAR
    params = init_params(k_p)
    prep = prepare_params(params)

    fwd = jax.jit(follower_cifar_forward)
    out = jax.block_until_ready(fwd(x, prep))
    assert out.shape == (2, 10)

    ref = jax.block_until_ready(reference_forward(x, params))
    assert jnp.allclose(out, ref, rtol=2e-2, atol=2e-2), "mismatch vs reference"

    print("KERNEL_OK")
</pallas_src>

<mosaic_0001>
module attributes {stable_mosaic.version = 11 : i64} {
  func.func @_conv_relu_pool_kernel(%arg0: i32, %arg1: memref<4x208x128xbf16, #tpu.memory_space<vmem>>, %arg2: memref<128x128xbf16, #tpu.memory_space<vmem>>, %arg3: memref<1x128xf32, #tpu.memory_space<vmem>>, %arg4: memref<208x128xbf16, #tpu.memory_space<vmem>>) attributes {dimension_semantics = [#tpu.dimension_semantics<parallel>], iteration_bounds = array<i64: 2>, scalar_prefetch = 0 : i64, scratch_operands = 0 : i64, tpu.core_type = #tpu.core_type<tc>, window_params = [{transform_indices = @transform_0, window_bounds = array<i64: 4, 208, 128>}, {pipeline_mode = #tpu.pipeline_mode<synchronous>, transform_indices = @transform_1, window_bounds = array<i64: 128, 128>}, {pipeline_mode = #tpu.pipeline_mode<synchronous>, transform_indices = @transform_2, window_bounds = array<i64: 1, 128>}, {transform_indices = @transform_3, window_bounds = array<i64: 208, 128>}]} {
    %c0 = arith.constant 0 : index
    %c0_0 = arith.constant 0 : index
    %0 = vector.load %arg2[%c0, %c0_0] : memref<128x128xbf16, #tpu.memory_space<vmem>>, vector<128x128xbf16>
    %c0_1 = arith.constant 0 : index
    %c0_2 = arith.constant 0 : index
    %1 = vector.load %arg3[%c0_1, %c0_2] : memref<1x128xf32, #tpu.memory_space<vmem>>, vector<1x128xf32>
    %c0_3 = arith.constant 0 : index
    %c0_4 = arith.constant 0 : index
    %c0_5 = arith.constant 0 : index
    %2 = vector.load %arg1[%c0_3, %c0_4, %c0_5] : memref<4x208x128xbf16, #tpu.memory_space<vmem>>, vector<1x208x128xbf16>
    %3 = vector.shape_cast %2 : vector<1x208x128xbf16> to vector<208x128xbf16>
    %cst = arith.constant dense<0.000000e+00> : vector<208x128xf32>
    %4 = tpu.matmul %3, %0, %cst {dimension_numbers = #tpu.dot_dimension_numbers<[1], [0], [0], [1], [0, 0, 1, 1], [], []>} : vector<208x128xbf16>, vector<128x128xbf16>, vector<208x128xf32> -> vector<208x128xf32>
    %c1 = arith.constant 1 : index
    %c0_6 = arith.constant 0 : index
    %c0_7 = arith.constant 0 : index
    %5 = vector.load %arg1[%c1, %c0_6, %c0_7] : memref<4x208x128xbf16, #tpu.memory_space<vmem>>, vector<1x208x128xbf16>
    %6 = vector.shape_cast %5 : vector<1x208x128xbf16> to vector<208x128xbf16>
    %cst_8 = arith.constant dense<0.000000e+00> : vector<208x128xf32>
    %7 = tpu.matmul %6, %0, %cst_8 {dimension_numbers = #tpu.dot_dimension_numbers<[1], [0], [0], [1], [0, 0, 1, 1], [], []>} : vector<208x128xbf16>, vector<128x128xbf16>, vector<208x128xf32> -> vector<208x128xf32>
    %c2 = arith.constant 2 : index
    %c0_9 = arith.constant 0 : index
    %c0_10 = arith.constant 0 : index
    %8 = vector.load %arg1[%c2, %c0_9, %c0_10] : memref<4x208x128xbf16, #tpu.memory_space<vmem>>, vector<1x208x128xbf16>
    %9 = vector.shape_cast %8 : vector<1x208x128xbf16> to vector<208x128xbf16>
    %cst_11 = arith.constant dense<0.000000e+00> : vector<208x128xf32>
    %10 = tpu.matmul %9, %0, %cst_11 {dimension_numbers = #tpu.dot_dimension_numbers<[1], [0], [0], [1], [0, 0, 1, 1], [], []>} : vector<208x128xbf16>, vector<128x128xbf16>, vector<208x128xf32> -> vector<208x128xf32>
    %c3 = arith.constant 3 : index
    %c0_12 = arith.constant 0 : index
    %c0_13 = arith.constant 0 : index
    %11 = vector.load %arg1[%c3, %c0_12, %c0_13] : memref<4x208x128xbf16, #tpu.memory_space<vmem>>, vector<1x208x128xbf16>
    %12 = vector.shape_cast %11 : vector<1x208x128xbf16> to vector<208x128xbf16>
    %cst_14 = arith.constant dense<0.000000e+00> : vector<208x128xf32>
    %13 = tpu.matmul %12, %0, %cst_14 {dimension_numbers = #tpu.dot_dimension_numbers<[1], [0], [0], [1], [0, 0, 1, 1], [], []>} : vector<208x128xbf16>, vector<128x128xbf16>, vector<208x128xf32> -> vector<208x128xf32>
    %14 = arith.maximumf %4, %7 : vector<208x128xf32>
    %15 = arith.maximumf %10, %13 : vector<208x128xf32>
    %16 = arith.maximumf %14, %15 : vector<208x128xf32>
    %17 = vector.broadcast %1 : vector<1x128xf32> to vector<208x128xf32>
    %18 = arith.addf %16, %17 : vector<208x128xf32>
    %cst_15 = arith.constant 0.000000e+00 : f32
    %19 = vector.broadcast %cst_15 : f32 to vector<208x128xf32>
    %20 = arith.maximumf %18, %19 : vector<208x128xf32>
    %21 = arith.truncf %20 : vector<208x128xf32> to vector<208x128xbf16>
    %c0_16 = arith.constant 0 : index
    %c0_17 = arith.constant 0 : index
    %22 = vector.load %arg4[%c0_16, %c0_17] : memref<208x128xbf16, #tpu.memory_space<vmem>>, vector<208x128xbf16>
    tpu.vector_store %arg4[%c0_16, %c0_17], %21 {strides = array<i32>} : memref<208x128xbf16, #tpu.memory_space<vmem>>, vector<208x128xbf16>,
    return
  }
  func.func @transform_0(%arg0: i32) -> (i32, i32, i32) {
    %c0_i32 = arith.constant 0 : i32
    %c0_i32_0 = arith.constant 0 : i32
    %c0_i32_1 = arith.constant 0 : i32
    return %c0_i32, %arg0, %c0_i32_0 : i32, i32, i32
  }
  func.func @transform_1(%arg0: i32) -> (i32, i32) {
    %c0_i32 = arith.constant 0 : i32
    %c0_i32_0 = arith.constant 0 : i32
    %c0_i32_1 = arith.constant 0 : i32
    return %c0_i32, %c0_i32_0 : i32, i32
  }
  func.func @transform_2(%arg0: i32) -> (i32, i32) {
    %c0_i32 = arith.constant 0 : i32
    %c0_i32_0 = arith.constant 0 : i32
    %c0_i32_1 = arith.constant 0 : i32
    return %c0_i32, %c0_i32_0 : i32, i32
  }
  func.func @transform_3(%arg0: i32) -> (i32, i32) {
    %c0_i32 = arith.constant 0 : i32
    %c0_i32_0 = arith.constant 0 : i32
    return %arg0, %c0_i32 : i32, i32
  }
}

module attributes {stable_mosaic.version = 11 : i64} {
  func.func @_conv_relu_pool_kernel(%arg0: i32, %arg1: memref<4x64x256xbf16, #tpu.memory_space<vmem>>, %arg2: memref<256x128xbf16, #tpu.memory_space<vmem>>, %arg3: memref<1x128xf32, #tpu.memory_space<vmem>>, %arg4: memref<64x128xbf16, #tpu.memory_space<vmem>>) attributes {dimension_semantics = [#tpu.dimension_semantics<parallel>], iteration_bounds = array<i64: 1>, scalar_prefetch = 0 : i64, scratch_operands = 0 : i64, tpu.core_type = #tpu.core_type<tc>, window_params = [{transform_indices = @transform_0, window_bounds = array<i64: 4, 64, 256>}, {pipeline_mode = #tpu.pipeline_mode<synchronous>, transform_indices = @transform_1, window_bounds = array<i64: 256, 128>}, {pipeline_mode = #tpu.pipeline_mode<synchronous>, transform_indices = @transform_2, window_bounds = array<i64: 1, 128>}, {transform_indices = @transform_3, window_bounds = array<i64: 64, 128>}]} {
    %c0 = arith.constant 0 : index
    %c0_0 = arith.constant 0 : index
    %0 = vector.load %arg2[%c0, %c0_0] : memref<256x128xbf16, #tpu.memory_space<vmem>>, vector<256x128xbf16>
    %c0_1 = arith.constant 0 : index
    %c0_2 = arith.constant 0 : index
    %1 = vector.load %arg3[%c0_1, %c0_2] : memref<1x128xf32, #tpu.memory_space<vmem>>, vector<1x128xf32>
    %c0_3 = arith.constant 0 : index
    %c0_4 = arith.constant 0 : index
    %c0_5 = arith.constant 0 : index
    %2 = vector.load %arg1[%c0_3, %c0_4, %c0_5] : memref<4x64x256xbf16, #tpu.memory_space<vmem>>, vector<1x64x256xbf16>
    %3 = vector.shape_cast %2 : vector<1x64x256xbf16> to vector<64x256xbf16>
    %cst = arith.constant dense<0.000000e+00> : vector<64x128xf32>
    %4 = tpu.matmul %3, %0, %cst {dimension_numbers = #tpu.dot_dimension_numbers<[1], [0], [0], [1], [0, 0, 1, 1], [], []>} : vector<64x256xbf16>, vector<256x128xbf16>, vector<64x128xf32> -> vector<64x128xf32>
    %c1 = arith.constant 1 : index
    %c0_6 = arith.constant 0 : index
    %c0_7 = arith.constant 0 : index
    %5 = vector.load %arg1[%c1, %c0_6, %c0_7] : memref<4x64x256xbf16, #tpu.memory_space<vmem>>, vector<1x64x256xbf16>
    %6 = vector.shape_cast %5 : vector<1x64x256xbf16> to vector<64x256xbf16>
    %cst_8 = arith.constant dense<0.000000e+00> : vector<64x128xf32>
    %7 = tpu.matmul %6, %0, %cst_8 {dimension_numbers = #tpu.dot_dimension_numbers<[1], [0], [0], [1], [0, 0, 1, 1], [], []>} : vector<64x256xbf16>, vector<256x128xbf16>, vector<64x128xf32> -> vector<64x128xf32>
    %c2 = arith.constant 2 : index
    %c0_9 = arith.constant 0 : index
    %c0_10 = arith.constant 0 : index
    %8 = vector.load %arg1[%c2, %c0_9, %c0_10] : memref<4x64x256xbf16, #tpu.memory_space<vmem>>, vector<1x64x256xbf16>
    %9 = vector.shape_cast %8 : vector<1x64x256xbf16> to vector<64x256xbf16>
    %cst_11 = arith.constant dense<0.000000e+00> : vector<64x128xf32>
    %10 = tpu.matmul %9, %0, %cst_11 {dimension_numbers = #tpu.dot_dimension_numbers<[1], [0], [0], [1], [0, 0, 1, 1], [], []>} : vector<64x256xbf16>, vector<256x128xbf16>, vector<64x128xf32> -> vector<64x128xf32>
    %c3 = arith.constant 3 : index
    %c0_12 = arith.constant 0 : index
    %c0_13 = arith.constant 0 : index
    %11 = vector.load %arg1[%c3, %c0_12, %c0_13] : memref<4x64x256xbf16, #tpu.memory_space<vmem>>, vector<1x64x256xbf16>
    %12 = vector.shape_cast %11 : vector<1x64x256xbf16> to vector<64x256xbf16>
    %cst_14 = arith.constant dense<0.000000e+00> : vector<64x128xf32>
    %13 = tpu.matmul %12, %0, %cst_14 {dimension_numbers = #tpu.dot_dimension_numbers<[1], [0], [0], [1], [0, 0, 1, 1], [], []>} : vector<64x256xbf16>, vector<256x128xbf16>, vector<64x128xf32> -> vector<64x128xf32>
    %14 = arith.maximumf %4, %7 : vector<64x128xf32>
    %15 = arith.maximumf %10, %13 : vector<64x128xf32>
    %16 = arith.maximumf %14, %15 : vector<64x128xf32>
    %17 = vector.broadcast %1 : vector<1x128xf32> to vector<64x128xf32>
    %18 = arith.addf %16, %17 : vector<64x128xf32>
    %cst_15 = arith.constant 0.000000e+00 : f32
    %19 = vector.broadcast %cst_15 : f32 to vector<64x128xf32>
    %20 = arith.maximumf %18, %19 : vector<64x128xf32>
    %21 = arith.truncf %20 : vector<64x128xf32> to vector<64x128xbf16>
    %c0_16 = arith.constant 0 : index
    %c0_17 = arith.constant 0 : index
    %22 = vector.load %arg4[%c0_16, %c0_17] : memref<64x128xbf16, #tpu.memory_space<vmem>>, vector<64x128xbf16>
    tpu.vector_store %arg4[%c0_16, %c0_17], %21 {strides = array<i32>} : memref<64x128xbf16, #tpu.memory_space<vmem>>, vector<64x128xbf16>,
    return
  }
  func.func @transform_0(%arg0: i32) -> (i32, i32, i32) {
    %c0_i32 = arith.constant 0 : i32
    %c0_i32_0 = arith.constant 0 : i32
    %c0_i32_1 = arith.constant 0 : i32
    return %c0_i32, %arg0, %c0_i32_0 : i32, i32, i32
  }
  func.func @transform_1(%arg0: i32) -> (i32, i32) {
    %c0_i32 = arith.constant 0 : i32
    %c0_i32_0 = arith.constant 0 : i32
    %c0_i32_1 = arith.constant 0 : i32
    return %c0_i32, %c0_i32_0 : i32, i32
  }
  func.func @transform_2(%arg0: i32) -> (i32, i32) {
    %c0_i32 = arith.constant 0 : i32
    %c0_i32_0 = arith.constant 0 : i32
    %c0_i32_1 = arith.constant 0 : i32
    return %c0_i32, %c0_i32_0 : i32, i32
  }
  func.func @transform_3(%arg0: i32) -> (i32, i32) {
    %c0_i32 = arith.constant 0 : i32
    %c0_i32_0 = arith.constant 0 : i32
    return %arg0, %c0_i32 : i32, i32
  }
}

module attributes {stable_mosaic.version = 11 : i64} {
  func.func @_fc_stack_kernel(%arg0: i32, %arg1: memref<16x512xbf16, #tpu.memory_space<vmem>>, %arg2: memref<512x128xbf16, #tpu.memory_space<vmem>>, %arg3: memref<1x128xf32, #tpu.memory_space<vmem>>, %arg4: memref<128x128xbf16, #tpu.memory_space<vmem>>, %arg5: memref<1x128xf32, #tpu.memory_space<vmem>>, %arg6: memref<128x128xbf16, #tpu.memory_space<vmem>>, %arg7: memref<1x128xf32, #tpu.memory_space<vmem>>, %arg8: memref<16x128xf32, #tpu.memory_space<vmem>>) attributes {dimension_semantics = [#tpu.dimension_semantics<parallel>], iteration_bounds = array<i64: 1>, scalar_prefetch = 0 : i64, scratch_operands = 0 : i64, tpu.core_type = #tpu.core_type<tc>, window_params = [{transform_indices = @transform_0, window_bounds = array<i64: 16, 512>}, {pipeline_mode = #tpu.pipeline_mode<synchronous>, transform_indices = @transform_1, window_bounds = array<i64: 512, 128>}, {pipeline_mode = #tpu.pipeline_mode<synchronous>, transform_indices = @transform_2, window_bounds = array<i64: 1, 128>}, {pipeline_mode = #tpu.pipeline_mode<synchronous>, transform_indices = @transform_3, window_bounds = array<i64: 128, 128>}, {pipeline_mode = #tpu.pipeline_mode<synchronous>, transform_indices = @transform_4, window_bounds = array<i64: 1, 128>}, {pipeline_mode = #tpu.pipeline_mode<synchronous>, transform_indices = @transform_5, window_bounds = array<i64: 128, 128>}, {pipeline_mode = #tpu.pipeline_mode<synchronous>, transform_indices = @transform_6, window_bounds = array<i64: 1, 128>}, {transform_indices = @transform_7, window_bounds = array<i64: 16, 128>}]} {
    %c0 = arith.constant 0 : index
    %c0_0 = arith.constant 0 : index
    %0 = vector.load %arg1[%c0, %c0_0] : memref<16x512xbf16, #tpu.memory_space<vmem>>, vector<16x512xbf16>
    %c0_1 = arith.constant 0 : index
    %c0_2 = arith.constant 0 : index
    %1 = vector.load %arg2[%c0_1, %c0_2] : memref<512x128xbf16, #tpu.memory_space<vmem>>, vector<512x128xbf16>
    %cst = arith.constant dense<0.000000e+00> : vector<16x128xf32>
    %2 = tpu.matmul %0, %1, %cst {dimension_numbers = #tpu.dot_dimension_numbers<[1], [0], [0], [1], [0, 0, 1, 1], [], []>} : vector<16x512xbf16>, vector<512x128xbf16>, vector<16x128xf32> -> vector<16x128xf32>
    %c0_3 = arith.constant 0 : index
    %c0_4 = arith.constant 0 : index
    %3 = vector.load %arg3[%c0_3, %c0_4] : memref<1x128xf32, #tpu.memory_space<vmem>>, vector<1x128xf32>
    %4 = vector.broadcast %3 : vector<1x128xf32> to vector<16x128xf32>
    %5 = arith.addf %2, %4 : vector<16x128xf32>
    %cst_5 = arith.constant 0.000000e+00 : f32
    %6 = vector.broadcast %cst_5 : f32 to vector<16x128xf32>
    %7 = arith.maximumf %5, %6 : vector<16x128xf32>
    %8 = arith.truncf %7 : vector<16x128xf32> to vector<16x128xbf16>
    %c0_6 = arith.constant 0 : index
    %c0_7 = arith.constant 0 : index
    %9 = vector.load %arg4[%c0_6, %c0_7] : memref<128x128xbf16, #tpu.memory_space<vmem>>, vector<128x128xbf16>
    %cst_8 = arith.constant dense<0.000000e+00> : vector<16x128xf32>
    %10 = tpu.matmul %8, %9, %cst_8 {dimension_numbers = #tpu.dot_dimension_numbers<[1], [0], [0], [1], [0, 0, 1, 1], [], []>} : vector<16x128xbf16>, vector<128x128xbf16>, vector<16x128xf32> -> vector<16x128xf32>
    %c0_9 = arith.constant 0 : index
    %c0_10 = arith.constant 0 : index
    %11 = vector.load %arg5[%c0_9, %c0_10] : memref<1x128xf32, #tpu.memory_space<vmem>>, vector<1x128xf32>
    %12 = vector.broadcast %11 : vector<1x128xf32> to vector<16x128xf32>
    %13 = arith.addf %10, %12 : vector<16x128xf32>
    %cst_11 = arith.constant 0.000000e+00 : f32
    %14 = vector.broadcast %cst_11 : f32 to vector<16x128xf32>
    %15 = arith.maximumf %13, %14 : vector<16x128xf32>
    %16 = arith.truncf %15 : vector<16x128xf32> to vector<16x128xbf16>
    %c0_12 = arith.constant 0 : index
    %c0_13 = arith.constant 0 : index
    %17 = vector.load %arg6[%c0_12, %c0_13] : memref<128x128xbf16, #tpu.memory_space<vmem>>, vector<128x128xbf16>
    %cst_14 = arith.constant dense<0.000000e+00> : vector<16x128xf32>
    %18 = tpu.matmul %16, %17, %cst_14 {dimension_numbers = #tpu.dot_dimension_numbers<[1], [0], [0], [1], [0, 0, 1, 1], [], []>} : vector<16x128xbf16>, vector<128x128xbf16>, vector<16x128xf32> -> vector<16x128xf32>
    %c0_15 = arith.constant 0 : index
    %c0_16 = arith.constant 0 : index
    %19 = vector.load %arg7[%c0_15, %c0_16] : memref<1x128xf32, #tpu.memory_space<vmem>>, vector<1x128xf32>
    %20 = vector.broadcast %19 : vector<1x128xf32> to vector<16x128xf32>
    %21 = arith.addf %18, %20 : vector<16x128xf32>
    %c0_17 = arith.constant 0 : index
    %c0_18 = arith.constant 0 : index
    %22 = vector.load %arg8[%c0_17, %c0_18] : memref<16x128xf32, #tpu.memory_space<vmem>>, vector<16x128xf32>
    tpu.vector_store %arg8[%c0_17, %c0_18], %21 {strides = array<i32>} : memref<16x128xf32, #tpu.memory_space<vmem>>, vector<16x128xf32>,
    return
  }
  func.func @transform_0(%arg0: i32) -> (i32, i32) {
    %c0_i32 = arith.constant 0 : i32
    %c0_i32_0 = arith.constant 0 : i32
    return %arg0, %c0_i32 : i32, i32
  }
  func.func @transform_1(%arg0: i32) -> (i32, i32) {
    %c0_i32 = arith.constant 0 : i32
    %c0_i32_0 = arith.constant 0 : i32
    %c0_i32_1 = arith.constant 0 : i32
    return %c0_i32, %c0_i32_0 : i32, i32
  }
  func.func @transform_2(%arg0: i32) -> (i32, i32) {
    %c0_i32 = arith.constant 0 : i32
    %c0_i32_0 = arith.constant 0 : i32
    %c0_i32_1 = arith.constant 0 : i32
    return %c0_i32, %c0_i32_0 : i32, i32
  }
  func.func @transform_3(%arg0: i32) -> (i32, i32) {
    %c0_i32 = arith.constant 0 : i32
    %c0_i32_0 = arith.constant 0 : i32
    %c0_i32_1 = arith.constant 0 : i32
    return %c0_i32, %c0_i32_0 : i32, i32
  }
  func.func @transform_4(%arg0: i32) -> (i32, i32) {
    %c0_i32 = arith.constant 0 : i32
    %c0_i32_0 = arith.constant 0 : i32
    %c0_i32_1 = arith.constant 0 : i32
    return %c0_i32, %c0_i32_0 : i32, i32
  }
  func.func @transform_5(%arg0: i32) -> (i32, i32) {
    %c0_i32 = arith.constant 0 : i32
    %c0_i32_0 = arith.constant 0 : i32
    %c0_i32_1 = arith.constant 0 : i32
    return %c0_i32, %c0_i32_0 : i32, i32
  }
  func.func @transform_6(%arg0: i32) -> (i32, i32) {
    %c0_i32 = arith.constant 0 : i32
    %c0_i32_0 = arith.constant 0 : i32
    %c0_i32_1 = arith.constant 0 : i32
    return %c0_i32, %c0_i32_0 : i32, i32
  }
  func.func @transform_7(%arg0: i32) -> (i32, i32) {
    %c0_i32 = arith.constant 0 : i32
    %c0_i32_0 = arith.constant 0 : i32
    return %arg0, %c0_i32 : i32, i32
  }
}

</mosaic_0001>

<llo_original>
// kernel: follower_cifar_forward.3
$region0: #{follower_cifar_forward.3}
  #allocation0 [shape = 'u32[]', space=smem, size = 0x4, offset = 0x4, fixed_abs, tag = 'smem constant byte address 0x4 - core index']
  #allocation1 [shape = 'u32[144,128]{1,0:T(1,128)}', space=vmem, size = 0x12000, scoped, tag = 'internal scratch']
  %s0 = inlined_call_operand.vmem [shape: bf16[4,416,128], index: 0, kind: input, shape index: {}]
  %s1 = inlined_call_operand.vmem [shape: bf16[128,128], index: 1, kind: input, shape index: {}]
  %s2 = inlined_call_operand.vmem [shape: f32[1,128], index: 2, kind: input, shape index: {}]
  %s3 = inlined_call_operand.vmem [shape: bf16[416,128], index: 3, kind: output, shape index: {}]
  %s4 = sld [smem:[#allocation0]]
  $region86: #{follower_cifar_forward.3} parent=0
    _
  %s6 = ssub.s32 1, %s4
  %s7 = scalar_select 0, %s6, %s4
  $region1: #{follower_cifar_forward.3} parent=0
    #allocation2 [shape = 'u8[425984]{0}', space=vmem, size = 0x68000, scoped, tag = 'input window, operand 0']
    loop: start=0, step=1, limit=4
    $region2: #{follower_cifar_forward.3} parent=1 // loop_pre_header
      _
    $region3: #{follower_cifar_forward.3} parent=1 // loop_header
      %s9 = sphi 0, %s13
      %p10 = scmp.ge.s32.totalorder %s9, 4
      %s19 = sphi 0, %s21
      %s22 = sphi 0, %s19
      %s23 = sphi 0, %s22
      %s39 = sphi 0, %s23
      %s43 = sphi 0, %s43
      %s45 = sphi 0, %s43
      %s46 = sphi 0, %s45
      %s60 = sphi 0, %s46
      %s64 = sphi 0, %s64
      %s66 = sphi 0, %s64
      %s67 = sphi 0, %s66
      %s81 = sphi 0, %s67
      %s87 = sphi 0, %s89
      %s90 = sphi 0, %s87
      %s91 = sphi 0, %s90
      %s107 = sphi 0, %s91
    $region4: #{follower_cifar_forward.3} parent=1 // loop_header_branch
      %12 = sbr.rel (%p10) target = $region8
    $region5: #{follower_cifar_forward.3} parent=1 // loop_body
      %s14 = ssub.s32 %s9, 1
      %s15 = ssub.s32 %s9, 2
      %s16 = sadd.s32 %s9, 1
      %s17 = ssub.s32 %s9, %s16
      %p18 = scmp.eq.s32.totalorder %s17, 0
      %s20 = sadd.s32 %s19, 1
      %s21 = scalar_select %p18, %s19, %s20
      %p24 = pneg %p18
      %p25 = scmp.eq.s32.totalorder %s9, 1
      %p26 = por %p24, %p25
      %p27 = scmp.ne.s32.totalorder %s19, %s22
      %p28 = scmp.eq.s32.totalorder %s9, 0
      %p29 = por %p27, %p28
      %p30 = scmp.ne.s32.totalorder %s19, %s22
      %p31 = scmp.eq.s32.totalorder %s14, 1
      %p32 = por %p30, %p31
      %p33 = scmp.ne.s32.totalorder %s22, %s23
      %p34 = scmp.eq.s32.totalorder %s14, 0
      %p35 = por %p33, %p34
      %p36 = scmp.ne.s32.totalorder %s22, %s23
      %p37 = scmp.eq.s32.totalorder %s15, 1
      %p38 = por %p36, %p37
      %p40 = scmp.ne.s32.totalorder %s23, %s39
      %p41 = scmp.eq.s32.totalorder %s15, 0
      %p42 = por %p40, %p41
      %s44 = sadd.s32 %s43, 1
      %p47 = scmp.eq.s32.totalorder %s9, 1
      %p48 = scmp.ne.s32.totalorder %s43, %s45
      %p49 = scmp.eq.s32.totalorder %s9, 0
      %p50 = por %p48, %p49
      %p51 = scmp.ne.s32.totalorder %s43, %s45
      %p52 = scmp.eq.s32.totalorder %s14, 1
      %p53 = por %p51, %p52
      %p54 = scmp.ne.s32.totalorder %s45, %s46
      %p55 = scmp.eq.s32.totalorder %s14, 0
      %p56 = por %p54, %p55
      %p57 = scmp.ne.s32.totalorder %s45, %s46
      %p58 = scmp.eq.s32.totalorder %s15, 1
      %p59 = por %p57, %p58
      %p61 = scmp.ne.s32.totalorder %s46, %s60
      %p62 = scmp.eq.s32.totalorder %s15, 0
      %p63 = por %p61, %p62
      %s65 = sadd.s32 %s64, 1
      %p68 = scmp.eq.s32.totalorder %s9, 1
      %p69 = scmp.ne.s32.totalorder %s64, %s66
      %p70 = scmp.eq.s32.totalorder %s9, 0
      %p71 = por %p69, %p70
      %p72 = scmp.ne.s32.totalorder %s64, %s66
      %p73 = scmp.eq.s32.totalorder %s14, 1
      %p74 = por %p72, %p73
      %p75 = scmp.ne.s32.totalorder %s66, %s67
      %p76 = scmp.eq.s32.totalorder %s14, 0
      %p77 = por %p75, %p76
      %p78 = scmp.ne.s32.totalorder %s66, %s67
      %p79 = scmp.eq.s32.totalorder %s15, 1
      %p80 = por %p78, %p79
      %p82 = scmp.ne.s32.totalorder %s67, %s81
      %p83 = scmp.eq.s32.totalorder %s15, 0
      %p84 = por %p82, %p83
      %s85 = ssub.s32 %s9, %s16
      %p86 = scmp.eq.s32.totalorder %s85, 0
      %s88 = sadd.s32 %s87, 1
      %s89 = scalar_select %p86, %s87, %s88
      %p92 = pneg %p86
      %p93 = scmp.eq.s32.totalorder %s9, 1
      %p94 = por %p92, %p93
      %p95 = scmp.ne.s32.totalorder %s87, %s90
      %p96 = scmp.eq.s32.totalorder %s9, 0
      %p97 = por %p95, %p96
      %p98 = scmp.ne.s32.totalorder %s87, %s90
      %p99 = scmp.eq.s32.totalorder %s14, 1
      %p100 = por %p98, %p99
      %p101 = scmp.ne.s32.totalorder %s90, %s91
      %p102 = scmp.eq.s32.totalorder %s14, 0
      %p103 = por %p101, %p102
      %p104 = scmp.ne.s32.totalorder %s90, %s91
      %p105 = scmp.eq.s32.totalorder %s15, 1
      %p106 = por %p104, %p105
      %p108 = scmp.ne.s32.totalorder %s91, %s107
      %p109 = scmp.eq.s32.totalorder %s15, 0
      %p110 = por %p108, %p109
      %p111 = scmp.le.s32.totalorder 1, %s9
      %p112 = scmp.lt.s32.totalorder %s9, 3
      %p113 = pnand %p111, %p112
      %p114 = pneg %p113
      // Predicated region
      $region9: #{follower_cifar_forward.3} parent=5 // pred_check
        _
      $region10: #{follower_cifar_forward.3} parent=5 // pred_check_branch
        %116 = sbr.rel (%p113) target = $region12
      $region11: #{follower_cifar_forward.3} parent=5 // pred_region
        %s117 = ssub.s32 %s9, 1
        // Predicated region
        $region13: #{follower_cifar_forward.3} parent=11 // pred_check
          %p118 = pneg %p56
        $region14: #{follower_cifar_forward.3} parent=11 // pred_check_branch
          %120 = sbr.rel (%p118) target = $region16
        $region15: #{follower_cifar_forward.3} parent=11 // pred_region
          _
        $region16: #{follower_cifar_forward.3} parent=11 // pred_fallthru
          _
        // Predicated region
        $region17: #{follower_cifar_forward.3} parent=11 // pred_check
          %p121 = pneg %p77
        $region18: #{follower_cifar_forward.3} parent=11 // pred_check_branch
          %123 = sbr.rel (%p121) target = $region20
        $region19: #{follower_cifar_forward.3} parent=11 // pred_region
          _
        $region20: #{follower_cifar_forward.3} parent=11 // pred_fallthru
          _
      $region12: #{follower_cifar_forward.3} parent=5 // pred_fallthru
        _
      %p124 = scmp.lt.s32.totalorder %s9, 2
      // Predicated region
      $region21: #{follower_cifar_forward.3} parent=5 // pred_check
        %p125 = pneg %p124
      $region22: #{follower_cifar_forward.3} parent=5 // pred_check_branch
        %127 = sbr.rel (%p125) target = $region24
      $region23: #{follower_cifar_forward.3} parent=5 // pred_region
        // Predicated region
        $region25: #{follower_cifar_forward.3} parent=23 // pred_check
          %p128 = pneg %p29
        $region26: #{follower_cifar_forward.3} parent=23 // pred_check_branch
          %130 = sbr.rel (%p128) target = $region28
        $region27: #{follower_cifar_forward.3} parent=23 // pred_region
          %s131 = sand.u32 %s19, 1
          %s132 = sand.u32 %s19, 1
          %s133 = smul.addr %s132, 416
          %s134 = scalar_lea.vmem [#allocation2], %s133
          %s135 = smul.u32 26, %s9
          %s136 = smul.addr %s135, 4
          %s137 = scalar_lea.vmem %s0, %s136
          // Predicated region
          $region29: #{follower_cifar_forward.3} parent=27 // pred_check
            _
          $region30: #{follower_cifar_forward.3} parent=27 // pred_check_branch
            %139 = sbr.rel (0) target = $region32
          $region31: #{follower_cifar_forward.3} parent=27 // pred_region
            // Predicated region
            $region33: #{follower_cifar_forward.3} parent=31 // pred_check
              _
            $region34: #{follower_cifar_forward.3} parent=31 // pred_check_branch
              %141 = sbr.rel target = $region36
            $region35: #{follower_cifar_forward.3} parent=31 // pred_region
              // Predicated region
              $region48: #{follower_cifar_forward.3} parent=35 // pred_check
                _
              $region49: #{follower_cifar_forward.3} parent=35 // pred_check_branch
                %362 = sbr.rel (0) target = $region51
              $region50: #{follower_cifar_forward.3} parent=35 // pred_region
                loop: start=0, step=1, limit=1
                $region52: #{follower_cifar_forward.3} parent=50 // loop_pre_header
                  _
                $region53: #{follower_cifar_forward.3} parent=50 // loop_header
                  %s364 = sphi 0, %s368
                  %p365 = scmp.ge.s32.totalorder %s364, 1
                  %s369 = sphi %s137, %s137
                  %s370 = sphi %s134, %s134
                $region54: #{follower_cifar_forward.3} parent=50 // loop_header_branch
                  %367 = sbr.rel (%p365) target = $region58
                $region55: #{follower_cifar_forward.3} parent=50 // loop_body
                  _
                $region56: #{follower_cifar_forward.3} parent=50 // loop_footer
                  %s368 = sadd.s32 1, %s364
                $region57: #{follower_cifar_forward.3} parent=50 // loop_footer_branch
                  %363 = sbr.rel target = $region53
                $region58: #{follower_cifar_forward.3} parent=50 // loop_exit
                  _
                loop: start=0, step=1, limit=1
                $region59: #{follower_cifar_forward.3} parent=50 // loop_pre_header
                  _
                $region60: #{follower_cifar_forward.3} parent=50 // loop_header
                  %s373 = sphi 0, %s377
                  %p374 = scmp.ge.s32.totalorder %s373, 1
                  %s378 = sphi %s137, %s137
                  %s379 = sphi %s134, %s134
                $region61: #{follower_cifar_forward.3} parent=50 // loop_header_branch
                  %376 = sbr.rel (%p374) target = $region65
                $region62: #{follower_cifar_forward.3} parent=50 // loop_body
                  %v380 = vld [vmem:[%s378] sm:$0xf]
                  %381 = vst [vmem:[%s379] sm:$0xf] %v380
                  %v382 = vld [vmem:[%s378 + $0x4] sm:$0xf]
                  %383 = vst [vmem:[%s379 + $0x4] sm:$0xf] %v382
                  %v384 = vld [vmem:[%s378 + $0x8] sm:$0xf]
                  %385 = vst [vmem:[%s379 + $0x8] sm:$0xf] %v384
                  %v386 = vld [vmem:[%s378 + $0xc] sm:$0xf]
                  %387 = vst [vmem:[%s379 + $0xc] sm:$0xf] %v386
                  %v388 = vld [vmem:[%s378 + $0x10] sm:$0xf]
                  %389 = vst [vmem:[%s379 + $0x10] sm:$0xf] %v388
                  %v390 = vld [vmem:[%s378 + $0x14] sm:$0xf]
                  %391 = vst [vmem:[%s379 + $0x14] sm:$0xf] %v390
                  %v392 = vld [vmem:[%s378 + $0x18] sm:$0xf]
                  %393 = vst [vmem:[%s379 + $0x18] sm:$0xf] %v392
                  %v394 = vld [vmem:[%s378 + $0x1c] sm:$0xf]
                  %395 = vst [vmem:[%s379 + $0x1c] sm:$0xf] %v394
                  %v396 = vld [vmem:[%s378 + $0x20] sm:$0xf]
                  %397 = vst [vmem:[%s379 + $0x20] sm:$0xf] %v396
                  %v398 = vld [vmem:[%s378 + $0x24] sm:$0xf]
                  %399 = vst [vmem:[%s379 + $0x24] sm:$0xf] %v398
                  %v400 = vld [vmem:[%s378 + $0x28] sm:$0xf]
                  %401 = vst [vmem:[%s379 + $0x28] sm:$0xf] %v400
                  %v402 = vld [vmem:[%s378 + $0x2c] sm:$0xf]
                  %403 = vst [vmem:[%s379 + $0x2c] sm:$0xf] %v402
                  %v404 = vld [vmem:[%s378 + $0x30] sm:$0xf]
                  %405 = vst [vmem:[%s379 + $0x30] sm:$0xf] %v404
                  %v406 = vld [vmem:[%s378 + $0x34] sm:$0xf]
                  %407 = vst [vmem:[%s379 + $0x34] sm:$0xf] %v406
                  %v408 = vld [vmem:[%s378 + $0x38] sm:$0xf]
                  %409 = vst [vmem:[%s379 + $0x38] sm:$0xf] %v408
                  %v410 = vld [vmem:[%s378 + $0x3c] sm:$0xf]
                  %411 = vst [vmem:[%s379 + $0x3c] sm:$0xf] %v410
                  %v412 = vld [vmem:[%s378 + $0x40] sm:$0xf]
                  %413 = vst [vmem:[%s379 + $0x40] sm:$0xf] %v412
                  %v414 = vld [vmem:[%s378 + $0x44] sm:$0xf]
                  %415 = vst [vmem:[%s379 + $0x44] sm:$0xf] %v414
                  %v416 = vld [vmem:[%s378 + $0x48] sm:$0xf]
                  %417 = vst [vmem:[%s379 + $0x48] sm:$0xf] %v416
                  %v418 = vld [vmem:[%s378 + $0x4c] sm:$0xf]
                  %419 = vst [vmem:[%s379 + $0x4c] sm:$0xf] %v418
                  %v420 = vld [vmem:[%s378 + $0x50] sm:$0xf]
                  %421 = vst [vmem:[%s379 + $0x50] sm:$0xf] %v420
                  %v422 = vld [vmem:[%s378 + $0x54] sm:$0xf]
                  %423 = vst [vmem:[%s379 + $0x54] sm:$0xf] %v422
                  %v424 = vld [vmem:[%s378 + $0x58] sm:$0xf]
                  %425 = vst [vmem:[%s379 + $0x58] sm:$0xf] %v424
                  %v426 = vld [vmem:[%s378 + $0x5c] sm:$0xf]
                  %427 = vst [vmem:[%s379 + $0x5c] sm:$0xf] %v426
                  %v428 = vld [vmem:[%s378 + $0x60] sm:$0xf]
                  %429 = vst [vmem:[%s379 + $0x60] sm:$0xf] %v428
                  %v430 = vld [vmem:[%s378 + $0x64] sm:$0xf]
                  %431 = vst [vmem:[%s379 + $0x64] sm:$0xf] %v430
                  %v432 = vld [vmem:[%s378 + $0xd0] sm:$0xf]
                  %433 = vst [vmem:[%s379 + $0x68] sm:$0xf] %v432
                  %v434 = vld [vmem:[%s378 + $0xd4] sm:$0xf]
                  %435 = vst [vmem:[%s379 + $0x6c] sm:$0xf] %v434
                  %v436 = vld [vmem:[%s378 + $0xd8] sm:$0xf]
                  %437 = vst [vmem:[%s379 + $0x70] sm:$0xf] %v436
                  %v438 = vld [vmem:[%s378 + $0xdc] sm:$0xf]
                  %439 = vst [vmem:[%s379 + $0x74] sm:$0xf] %v438
                  %v440 = vld [vmem:[%s378 + $0xe0] sm:$0xf]
                  %441 = vst [vmem:[%s379 + $0x78] sm:$0xf] %v440
                  %v442 = vld [vmem:[%s378 + $0xe4] sm:$0xf]
                  %443 = vst [vmem:[%s379 + $0x7c] sm:$0xf] %v442
                  %v444 = vld [vmem:[%s378 + $0xe8] sm:$0xf]
                  %445 = vst [vmem:[%s379 + $0x80] sm:$0xf] %v444
                  %v446 = vld [vmem:[%s378 + $0xec] sm:$0xf]
                  %447 = vst [vmem:[%s379 + $0x84] sm:$0xf] %v446
                  %v448 = vld [vmem:[%s378 + $0xf0] sm:$0xf]
                  %449 = vst [vmem:[%s379 + $0x88] sm:$0xf] %v448
                  %v450 = vld [vmem:[%s378 + $0xf4] sm:$0xf]
                  %451 = vst [vmem:[%s379 + $0x8c] sm:$0xf] %v450
                  %v452 = vld [vmem:[%s378 + $0xf8] sm:$0xf]
                  %453 = vst [vmem:[%s379 + $0x90] sm:$0xf] %v452
                  %v454 = vld [vmem:[%s378 + $0xfc] sm:$0xf]
                  %455 = vst [vmem:[%s379 + $0x94] sm:$0xf] %v454
                  %v456 = vld [vmem:[%s378 + $0x100] sm:$0xf]
                  %457 = vst [vmem:[%s379 + $0x98] sm:$0xf] %v456
                  %v458 = vld [vmem:[%s378 + $0x104] sm:$0xf]
                  %459 = vst [vmem:[%s379 + $0x9c] sm:$0xf] %v458
                  %v460 = vld [vmem:[%s378 + $0x108] sm:$0xf]
                  %461 = vst [vmem:[%s379 + $0xa0] sm:$0xf] %v460
                  %v462 = vld [vmem:[%s378 + $0x10c] sm:$0xf]
                  %463 = vst [vmem:[%s379 + $0xa4] sm:$0xf] %v462
                  %v464 = vld [vmem:[%s378 + $0x110] sm:$0xf]
                  %465 = vst [vmem:[%s379 + $0xa8] sm:$0xf] %v464
                  %v466 = vld [vmem:[%s378 + $0x114] sm:$0xf]
                  %467 = vst [vmem:[%s379 + $0xac] sm:$0xf] %v466
                  %v468 = vld [vmem:[%s378 + $0x118] sm:$0xf]
                  %469 = vst [vmem:[%s379 + $0xb0] sm:$0xf] %v468
                  %v470 = vld [vmem:[%s378 + $0x11c] sm:$0xf]
                  %471 = vst [vmem:[%s379 + $0xb4] sm:$0xf] %v470
                  %v472 = vld [vmem:[%s378 + $0x120] sm:$0xf]
                  %473 = vst [vmem:[%s379 + $0xb8] sm:$0xf] %v472
                  %v474 = vld [vmem:[%s378 + $0x124] sm:$0xf]
                  %475 = vst [vmem:[%s379 + $0xbc] sm:$0xf] %v474
                  %v476 = vld [vmem:[%s378 + $0x128] sm:$0xf]
                  %477 = vst [vmem:[%s379 + $0xc0] sm:$0xf] %v476
                  %v478 = vld [vmem:[%s378 + $0x12c] sm:$0xf]
                  %479 = vst [vmem:[%s379 + $0xc4] sm:$0xf] %v478
                  %v480 = vld [vmem:[%s378 + $0x130] sm:$0xf]
                  %481 = vst [vmem:[%s379 + $0xc8] sm:$0xf] %v480
                  %v482 = vld [vmem:[%s378 + $0x134] sm:$0xf]
                  %483 = vst [vmem:[%s379 + $0xcc] sm:$0xf] %v482
                  %v484 = vld [vmem:[%s378 + $0x1a0] sm:$0xf]
                  %485 = vst [vmem:[%s379 + $0xd0] sm:$0xf] %v484
                  %v486 = vld [vmem:[%s378 + $0x1a4] sm:$0xf]
                  %487 = vst [vmem:[%s379 + $0xd4] sm:$0xf] %v486
                  %v488 = vld [vmem:[%s378 + $0x1a8] sm:$0xf]
                  %489 = vst [vmem:[%s379 + $0xd8] sm:$0xf] %v488
                  %v490 = vld [vmem:[%s378 + $0x1ac] sm:$0xf]
                  %491 = vst [vmem:[%s379 + $0xdc] sm:$0xf] %v490
                  %v492 = vld [vmem:[%s378 + $0x1b0] sm:$0xf]
                  %493 = vst [vmem:[%s379 + $0xe0] sm:$0xf] %v492
                  %v494 = vld [vmem:[%s378 + $0x1b4] sm:$0xf]
                  %495 = vst [vmem:[%s379 + $0xe4] sm:$0xf] %v494
                  %v496 = vld [vmem:[%s378 + $0x1b8] sm:$0xf]
                  %497 = vst [vmem:[%s379 + $0xe8] sm:$0xf] %v496
                  %v498 = vld [vmem:[%s378 + $0x1bc] sm:$0xf]
                  %499 = vst [vmem:[%s379 + $0xec] sm:$0xf] %v498
                  %v500 = vld [vmem:[%s378 + $0x1c0] sm:$0xf]
                  %501 = vst [vmem:[%s379 + $0xf0] sm:$0xf] %v500
                  %v502 = vld [vmem:[%s378 + $0x1c4] sm:$0xf]
                  %503 = vst [vmem:[%s379 + $0xf4] sm:$0xf] %v502
                  %v504 = vld [vmem:[%s378 + $0x1c8] sm:$0xf]
                  %505 = vst [vmem:[%s379 + $0xf8] sm:$0xf] %v504
                  %v506 = vld [vmem:[%s378 + $0x1cc] sm:$0xf]
                  %507 = vst [vmem:[%s379 + $0xfc] sm:$0xf] %v506
                  %v508 = vld [vmem:[%s378 + $0x1d0] sm:$0xf]
                  %509 = vst [vmem:[%s379 + $0x100] sm:$0xf] %v508
                  %v510 = vld [vmem:[%s378 + $0x1d4] sm:$0xf]
                  %511 = vst [vmem:[%s379 + $0x104] sm:$0xf] %v510
                  %v512 = vld [vmem:[%s378 + $0x1d8] sm:$0xf]
                  %513 = vst [vmem:[%s379 + $0x108] sm:$0xf] %v512
                  %v514 = vld [vmem:[%s378 + $0x1dc] sm:$0xf]
                  %515 = vst [vmem:[%s379 + $0x10c] sm:$0xf] %v514
                  %v516 = vld [vmem:[%s378 + $0x1e0] sm:$0xf]
                  %517 = vst [vmem:[%s379 + $0x110] sm:$0xf] %v516
                  %v518 = vld [vmem:[%s378 + $0x1e4] sm:$0xf]
                  %519 = vst [vmem:[%s379 + $0x114] sm:$0xf] %v518
                  %v520 = vld [vmem:[%s378 + $0x1e8] sm:$0xf]
                  %521 = vst [vmem:[%s379 + $0x118] sm:$0xf] %v520
                  %v522 = vld [vmem:[%s378 + $0x1ec] sm:$0xf]
                  %523 = vst [vmem:[%s379 + $0x11c] sm:$0xf] %v522
                  %v524 = vld [vmem:[%s378 + $0x1f0] sm:$0xf]
                  %525 = vst [vmem:[%s379 + $0x120] sm:$0xf] %v524
                  %v526 = vld [vmem:[%s378 + $0x1f4] sm:$0xf]
                  %527 = vst [vmem:[%s379 + $0x124] sm:$0xf] %v526
                  %v528 = vld [vmem:[%s378 + $0x1f8] sm:$0xf]
                  %529 = vst [vmem:[%s379 + $0x128] sm:$0xf] %v528
                  %v530 = vld [vmem:[%s378 + $0x1fc] sm:$0xf]
                  %531 = vst [vmem:[%s379 + $0x12c] sm:$0xf] %v530
                  %v532 = vld [vmem:[%s378 + $0x200] sm:$0xf]
                  %533 = vst [vmem:[%s379 + $0x130] sm:$0xf] %v532
                  %v534 = vld [vmem:[%s378 + $0x204] sm:$0xf]
                  %535 = vst [vmem:[%s379 + $0x134] sm:$0xf] %v534
                  %v536 = vld [vmem:[%s378 + $0x270] sm:$0xf]
                  %537 = vst [vmem:[%s379 + $0x138] sm:$0xf] %v536
                  %v538 = vld [vmem:[%s378 + $0x274] sm:$0xf]
                  %539 = vst [vmem:[%s379 + $0x13c] sm:$0xf] %v538
                  %v540 = vld [vmem:[%s378 + $0x278] sm:$0xf]
                  %541 = vst [vmem:[%s379 + $0x140] sm:$0xf] %v540
                  %v542 = vld [vmem:[%s378 + $0x27c] sm:$0xf]
                  %543 = vst [vmem:[%s379 + $0x144] sm:$0xf] %v542
                  %v544 = vld [vmem:[%s378 + $0x280] sm:$0xf]
                  %545 = vst [vmem:[%s379 + $0x148] sm:$0xf] %v544
                  %v546 = vld [vmem:[%s378 + $0x284] sm:$0xf]
                  %547 = vst [vmem:[%s379 + $0x14c] sm:$0xf] %v546
                  %v548 = vld [vmem:[%s378 + $0x288] sm:$0xf]
                  %549 = vst [vmem:[%s379 + $0x150] sm:$0xf] %v548
                  %v550 = vld [vmem:[%s378 + $0x28c] sm:$0xf]
                  %551 = vst [vmem:[%s379 + $0x154] sm:$0xf] %v550
                  %v552 = vld [vmem:[%s378 + $0x290] sm:$0xf]
                  %553 = vst [vmem:[%s379 + $0x158] sm:$0xf] %v552
                  %v554 = vld [vmem:[%s378 + $0x294] sm:$0xf]
                  %555 = vst [vmem:[%s379 + $0x15c] sm:$0xf] %v554
                  %v556 = vld [vmem:[%s378 + $0x298] sm:$0xf]
                  %557 = vst [vmem:[%s379 + $0x160] sm:$0xf] %v556
                  %v558 = vld [vmem:[%s378 + $0x29c] sm:$0xf]
                  %559 = vst [vmem:[%s379 + $0x164] sm:$0xf] %v558
                  %v560 = vld [vmem:[%s378 + $0x2a0] sm:$0xf]
                  %561 = vst [vmem:[%s379 + $0x168] sm:$0xf] %v560
                  %v562 = vld [vmem:[%s378 + $0x2a4] sm:$0xf]
                  %563 = vst [vmem:[%s379 + $0x16c] sm:$0xf] %v562
                  %v564 = vld [vmem:[%s378 + $0x2a8] sm:$0xf]
                  %565 = vst [vmem:[%s379 + $0x170] sm:$0xf] %v564
                  %v566 = vld [vmem:[%s378 + $0x2ac] sm:$0xf]
                  %567 = vst [vmem:[%s379 + $0x174] sm:$0xf] %v566
                  %v568 = vld [vmem:[%s378 + $0x2b0] sm:$0xf]
                  %569 = vst [vmem:[%s379 + $0x178] sm:$0xf] %v568
                  %v570 = vld [vmem:[%s378 + $0x2b4] sm:$0xf]
                  %571 = vst [vmem:[%s379 + $0x17c] sm:$0xf] %v570
                  %v572 = vld [vmem:[%s378 + $0x2b8] sm:$0xf]
                  %573 = vst [vmem:[%s379 + $0x180] sm:$0xf] %v572
                  %v574 = vld [vmem:[%s378 + $0x2bc] sm:$0xf]
                  %575 = vst [vmem:[%s379 + $0x184] sm:$0xf] %v574
                  %v576 = vld [vmem:[%s378 + $0x2c0] sm:$0xf]
                  %577 = vst [vmem:[%s379 + $0x188] sm:$0xf] %v576
                  %v578 = vld [vmem:[%s378 + $0x2c4] sm:$0xf]
                  %579 = vst [vmem:[%s379 + $0x18c] sm:$0xf] %v578
                  %v580 = vld [vmem:[%s378 + $0x2c8] sm:$0xf]
                  %581 = vst [vmem:[%s379 + $0x190] sm:$0xf] %v580
                  %v582 = vld [vmem:[%s378 + $0x2cc] sm:$0xf]
                  %583 = vst [vmem:[%s379 + $0x194] sm:$0xf] %v582
                  %v584 = vld [vmem:[%s378 + $0x2d0] sm:$0xf]
                  %585 = vst [vmem:[%s379 + $0x198] sm:$0xf] %v584
                  %v586 = vld [vmem:[%s378 + $0x2d4] sm:$0xf]
                  %587 = vst [vmem:[%s379 + $0x19c] sm:$0xf] %v586
                $region63: #{follower_cifar_forward.3} parent=50 // loop_footer
                  %s377 = sadd.s32 1, %s373
                $region64: #{follower_cifar_forward.3} parent=50 // loop_footer_branch
                  %372 = sbr.rel target = $region60
                $region65: #{follower_cifar_forward.3} parent=50 // loop_exit
                  _
              $region51: #{follower_cifar_forward.3} parent=35 // pred_fallthru
                _
            $region36: #{follower_cifar_forward.3} parent=31 // pred_fallthru
              _
            // Predicated region
            $region37: #{follower_cifar_forward.3} parent=31 // pred_check
              _
            $region38: #{follower_cifar_forward.3} parent=31 // pred_check_branch
              %143 = sbr.rel (0) target = $region40
            $region39: #{follower_cifar_forward.3} parent=31 // pred_region
              loop: start=0, step=1, limit=1
              $region41: #{follower_cifar_forward.3} parent=39 // loop_pre_header
                _
              $region42: #{follower_cifar_forward.3} parent=39 // loop_header
                %s146 = sphi 0, %s150
                %p147 = scmp.ge.s32.totalorder %s146, 1
                %s151 = sphi %s137, %s137
                %s152 = sphi %s134, %s134
              $region43: #{follower_cifar_forward.3} parent=39 // loop_header_branch
                %149 = sbr.rel (%p147) target = $region47
              $region44: #{follower_cifar_forward.3} parent=39 // loop_body
                %v153 = vld [vmem:[%s151] sm:$0xf]
                %154 = vst [vmem:[%s152] sm:$0xf] %v153
                %v155 = vld [vmem:[%s151 + $0x4] sm:$0xf]
                %156 = vst [vmem:[%s152 + $0x4] sm:$0xf] %v155
                %v157 = vld [vmem:[%s151 + $0x8] sm:$0xf]
                %158 = vst [vmem:[%s152 + $0x8] sm:$0xf] %v157
                %v159 = vld [vmem:[%s151 + $0xc] sm:$0xf]
                %160 = vst [vmem:[%s152 + $0xc] sm:$0xf] %v159
                %v161 = vld [vmem:[%s151 + $0x10] sm:$0xf]
                %162 = vst [vmem:[%s152 + $0x10] sm:$0xf] %v161
                %v163 = vld [vmem:[%s151 + $0x14] sm:$0xf]
                %164 = vst [vmem:[%s152 + $0x14] sm:$0xf] %v163
                %v165 = vld [vmem:[%s151 + $0x18] sm:$0xf]
                %166 = vst [vmem:[%s152 + $0x18] sm:$0xf] %v165
                %v167 = vld [vmem:[%s151 + $0x1c] sm:$0xf]
                %168 = vst [vmem:[%s152 + $0x1c] sm:$0xf] %v167
                %v169 = vld [vmem:[%s151 + $0x20] sm:$0xf]
                %170 = vst [vmem:[%s152 + $0x20] sm:$0xf] %v169
                %v171 = vld [vmem:[%s151 + $0x24] sm:$0xf]
                %172 = vst [vmem:[%s152 + $0x24] sm:$0xf] %v171
                %v173 = vld [vmem:[%s151 + $0x28] sm:$0xf]
                %174 = vst [vmem:[%s152 + $0x28] sm:$0xf] %v173
                %v175 = vld [vmem:[%s151 + $0x2c] sm:$0xf]
                %176 = vst [vmem:[%s152 + $0x2c] sm:$0xf] %v175
                %v177 = vld [vmem:[%s151 + $0x30] sm:$0xf]
                %178 = vst [vmem:[%s152 + $0x30] sm:$0xf] %v177
                %v179 = vld [vmem:[%s151 + $0x34] sm:$0xf]
                %180 = vst [vmem:[%s152 + $0x34] sm:$0xf] %v179
                %v181 = vld [vmem:[%s151 + $0x38] sm:$0xf]
                %182 = vst [vmem:[%s152 + $0x38] sm:$0xf] %v181
                %v183 = vld [vmem:[%s151 + $0x3c] sm:$0xf]
                %184 = vst [vmem:[%s152 + $0x3c] sm:$0xf] %v183
                %v185 = vld [vmem:[%s151 + $0x40] sm:$0xf]
                %186 = vst [vmem:[%s152 + $0x40] sm:$0xf] %v185
                %v187 = vld [vmem:[%s151 + $0x44] sm:$0xf]
                %188 = vst [vmem:[%s152 + $0x44] sm:$0xf] %v187
                %v189 = vld [vmem:[%s151 + $0x48] sm:$0xf]
                %190 = vst [vmem:[%s152 + $0x48] sm:$0xf] %v189
                %v191 = vld [vmem:[%s151 + $0x4c] sm:$0xf]
                %192 = vst [vmem:[%s152 + $0x4c] sm:$0xf] %v191
                %v193 = vld [vmem:[%s151 + $0x50] sm:$0xf]
                %194 = vst [vmem:[%s152 + $0x50] sm:$0xf] %v193
                %v195 = vld [vmem:[%s151 + $0x54] sm:$0xf]
                %196 = vst [vmem:[%s152 + $0x54] sm:$0xf] %v195
                %v197 = vld [vmem:[%s151 + $0x58] sm:$0xf]
                %198 = vst [vmem:[%s152 + $0x58] sm:$0xf] %v197
                %v199 = vld [vmem:[%s151 + $0x5c] sm:$0xf]
                %200 = vst [vmem:[%s152 + $0x5c] sm:$0xf] %v199
                %v201 = vld [vmem:[%s151 + $0x60] sm:$0xf]
                %202 = vst [vmem:[%s152 + $0x60] sm:$0xf] %v201
                %v203 = vld [vmem:[%s151 + $0x64] sm:$0xf]
                %204 = vst [vmem:[%s152 + $0x64] sm:$0xf] %v203
                %v205 = vld [vmem:[%s151 + $0xd0] sm:$0xf]
                %206 = vst [vmem:[%s152 + $0x68] sm:$0xf] %v205
                %v207 = vld [vmem:[%s151 + $0xd4] sm:$0xf]
                %208 = vst [vmem:[%s152 + $0x6c] sm:$0xf] %v207
                %v209 = vld [vmem:[%s151 + $0xd8] sm:$0xf]
                %210 = vst [vmem:[%s152 + $0x70] sm:$0xf] %v209
                %v211 = vld [vmem:[%s151 + $0xdc] sm:$0xf]
                %212 = vst [vmem:[%s152 + $0x74] sm:$0xf] %v211
                %v213 = vld [vmem:[%s151 + $0xe0] sm:$0xf]
                %214 = vst [vmem:[%s152 + $0x78] sm:$0xf] %v213
                %v215 = vld [vmem:[%s151 + $0xe4] sm:$0xf]
                %216 = vst [vmem:[%s152 + $0x7c] sm:$0xf] %v215
                %v217 = vld [vmem:[%s151 + $0xe8] sm:$0xf]
                %218 = vst [vmem:[%s152 + $0x80] sm:$0xf] %v217
                %v219 = vld [vmem:[%s151 + $0xec] sm:$0xf]
                %220 = vst [vmem:[%s152 + $0x84] sm:$0xf] %v219
                %v221 = vld [vmem:[%s151 + $0xf0] sm:$0xf]
                %222 = vst [vmem:[%s152 + $0x88] sm:$0xf] %v221
                %v223 = vld [vmem:[%s151 + $0xf4] sm:$0xf]
                %224 = vst [vmem:[%s152 + $0x8c] sm:$0xf] %v223
                %v225 = vld [vmem:[%s151 + $0xf8] sm:$0xf]
                %226 = vst [vmem:[%s152 + $0x90] sm:$0xf] %v225
                %v227 = vld [vmem:[%s151 + $0xfc] sm:$0xf]
                %228 = vst [vmem:[%s152 + $0x94] sm:$0xf] %v227
                %v229 = vld [vmem:[%s151 + $0x100] sm:$0xf]
                %230 = vst [vmem:[%s152 + $0x98] sm:$0xf] %v229
                %v231 = vld [vmem:[%s151 + $0x104] sm:$0xf]
                %232 = vst [vmem:[%s152 + $0x9c] sm:$0xf] %v231
                %v233 = vld [vmem:[%s151 + $0x108] sm:$0xf]
                %234 = vst [vmem:[%s152 + $0xa0] sm:$0xf] %v233
                %v235 = vld [vmem:[%s151 + $0x10c] sm:$0xf]
                %236 = vst [vmem:[%s152 + $0xa4] sm:$0xf] %v235
                %v237 = vld [vmem:[%s151 + $0x110] sm:$0xf]
                %238 = vst [vmem:[%s152 + $0xa8] sm:$0xf] %v237
                %v239 = vld [vmem:[%s151 + $0x114] sm:$0xf]
                %240 = vst [vmem:[%s152 + $0xac] sm:$0xf] %v239
                %v241 = vld [vmem:[%s151 + $0x118] sm:$0xf]
                %242 = vst [vmem:[%s152 + $0xb0] sm:$0xf] %v241
                %v243 = vld [vmem:[%s151 + $0x11c] sm:$0xf]
                %244 = vst [vmem:[%s152 + $0xb4] sm:$0xf] %v243
                %v245 = vld [vmem:[%s151 + $0x120] sm:$0xf]
                %246 = vst [vmem:[%s152 + $0xb8] sm:$0xf] %v245
                %v247 = vld [vmem:[%s151 + $0x124] sm:$0xf]
                %248 = vst [vmem:[%s152 + $0xbc] sm:$0xf] %v247
                %v249 = vld [vmem:[%s151 + $0x128] sm:$0xf]
                %250 = vst [vmem:[%s152 + $0xc0] sm:$0xf] %v249
                %v251 = vld [vmem:[%s151 + $0x12c] sm:$0xf]
                %252 = vst [vmem:[%s152 + $0xc4] sm:$0xf] %v251
                %v253 = vld [vmem:[%s151 + $0x130] sm:$0xf]
                %254 = vst [vmem:[%s152 + $0xc8] sm:$0xf] %v253
                %v255 = vld [vmem:[%s151 + $0x134] sm:$0xf]
                %256 = vst [vmem:[%s152 + $0xcc] sm:$0xf] %v255
                %v257 = vld [vmem:[%s151 + $0x1a0] sm:$0xf]
                %258 = vst [vmem:[%s152 + $0xd0] sm:$0xf] %v257
                %v259 = vld [vmem:[%s151 + $0x1a4] sm:$0xf]
                %260 = vst [vmem:[%s152 + $0xd4] sm:$0xf] %v259
                %v261 = vld [vmem:[%s151 + $0x1a8] sm:$0xf]
                %262 = vst [vmem:[%s152 + $0xd8] sm:$0xf] %v261
                %v263 = vld [vmem:[%s151 + $0x1ac] sm:$0xf]
                %264 = vst [vmem:[%s152 + $0xdc] sm:$0xf] %v263
                %v265 = vld [vmem:[%s151 + $0x1b0] sm:$0xf]
                %266 = vst [vmem:[%s152 + $0xe0] sm:$0xf] %v265
                %v267 = vld [vmem:[%s151 + $0x1b4] sm:$0xf]
                %268 = vst [vmem:[%s152 + $0xe4] sm:$0xf] %v267
                %v269 = vld [vmem:[%s151 + $0x1b8] sm:$0xf]
                %270 = vst [vmem:[%s152 + $0xe8] sm:$0xf] %v269
                %v271 = vld [vmem:[%s151 + $0x1bc] sm:$0xf]
                %272 = vst [vmem:[%s152 + $0xec] sm:$0xf] %v271
                %v273 = vld [vmem:[%s151 + $0x1c0] sm:$0xf]
                %274 = vst [vmem:[%s152 + $0xf0] sm:$0xf] %v273
                %v275 = vld [vmem:[%s151 + $0x1c4] sm:$0xf]
                %276 = vst [vmem:[%s152 + $0xf4] sm:$0xf] %v275
                %v277 = vld [vmem:[%s151 + $0x1c8] sm:$0xf]
                %278 = vst [vmem:[%s152 + $0xf8] sm:$0xf] %v277
                %v279 = vld [vmem:[%s151 + $0x1cc] sm:$0xf]
                %280 = vst [vmem:[%s152 + $0xfc] sm:$0xf] %v279
                %v281 = vld [vmem:[%s151 + $0x1d0] sm:$0xf]
                %282 = vst [vmem:[%s152 + $0x100] sm:$0xf] %v281
                %v283 = vld [vmem:[%s151 + $0x1d4] sm:$0xf]
                %284 = vst [vmem:[%s152 + $0x104] sm:$0xf] %v283
                %v285 = vld [vmem:[%s151 + $0x1d8] sm:$0xf]
                %286 = vst [vmem:[%s152 + $0x108] sm:$0xf] %v285
                %v287 = vld [vmem:[%s151 + $0x1dc] sm:$0xf]
                %288 = vst [vmem:[%s152 + $0x10c] sm:$0xf] %v287
                %v289 = vld [vmem:[%s151 + $0x1e0] sm:$0xf]
                %290 = vst [vmem:[%s152 + $0x110] sm:$0xf] %v289
                %v291 = vld [vmem:[%s151 + $0x1e4] sm:$0xf]
                %292 = vst [vmem:[%s152 + $0x114] sm:$0xf] %v291
                %v293 = vld [vmem:[%s151 + $0x1e8] sm:$0xf]
                %294 = vst [vmem:[%s152 + $0x118] sm:$0xf] %v293
                %v295 = vld [vmem:[%s151 + $0x1ec] sm:$0xf]
                %296 = vst [vmem:[%s152 + $0x11c] sm:$0xf] %v295
                %v297 = vld [vmem:[%s151 + $0x1f0] sm:$0xf]
                %298 = vst [vmem:[%s152 + $0x120] sm:$0xf] %v297
                %v299 = vld [vmem:[%s151 + $0x1f4] sm:$0xf]
                %300 = vst [vmem:[%s152 + $0x124] sm:$0xf] %v299
                %v301 = vld [vmem:[%s151 + $0x1f8] sm:$0xf]
                %302 = vst [vmem:[%s152 + $0x128] sm:$0xf] %v301
                %v303 = vld [vmem:[%s151 + $0x1fc] sm:$0xf]
                %304 = vst [vmem:[%s152 + $0x12c] sm:$0xf] %v303
                %v305 = vld [vmem:[%s151 + $0x200] sm:$0xf]
                %306 = vst [vmem:[%s152 + $0x130] sm:$0xf] %v305
                %v307 = vld [vmem:[%s151 + $0x204] sm:$0xf]
                %308 = vst [vmem:[%s152 + $0x134] sm:$0xf] %v307
                %v309 = vld [vmem:[%s151 + $0x270] sm:$0xf]
                %310 = vst [vmem:[%s152 + $0x138] sm:$0xf] %v309
                %v311 = vld [vmem:[%s151 + $0x274] sm:$0xf]
                %312 = vst [vmem:[%s152 + $0x13c] sm:$0xf] %v311
                %v313 = vld [vmem:[%s151 + $0x278] sm:$0xf]
                %314 = vst [vmem:[%s152 + $0x140] sm:$0xf] %v313
                %v315 = vld [vmem:[%s151 + $0x27c] sm:$0xf]
                %316 = vst [vmem:[%s152 + $0x144] sm:$0xf] %v315
                %v317 = vld [vmem:[%s151 + $0x280] sm:$0xf]
                %318 = vst [vmem:[%s152 + $0x148] sm:$0xf] %v317
                %v319 = vld [vmem:[%s151 + $0x284] sm:$0xf]
                %320 = vst [vmem:[%s152 + $0x14c] sm:$0xf] %v319
                %v321 = vld [vmem:[%s151 + $0x288] sm:$0xf]
                %322 = vst [vmem:[%s152 + $0x150] sm:$0xf] %v321
                %v323 = vld [vmem:[%s151 + $0x28c] sm:$0xf]
                %324 = vst [vmem:[%s152 + $0x154] sm:$0xf] %v323
                %v325 = vld [vmem:[%s151 + $0x290] sm:$0xf]
                %326 = vst [vmem:[%s152 + $0x158] sm:$0xf] %v325
                %v327 = vld [vmem:[%s151 + $0x294] sm:$0xf]
                %328 = vst [vmem:[%s152 + $0x15c] sm:$0xf] %v327
                %v329 = vld [vmem:[%s151 + $0x298] sm:$0xf]
                %330 = vst [vmem:[%s152 + $0x160] sm:$0xf] %v329
                %v331 = vld [vmem:[%s151 + $0x29c] sm:$0xf]
                %332 = vst [vmem:[%s152 + $0x164] sm:$0xf] %v331
                %v333 = vld [vmem:[%s151 + $0x2a0] sm:$0xf]
                %334 = vst [vmem:[%s152 + $0x168] sm:$0xf] %v333
                %v335 = vld [vmem:[%s151 + $0x2a4] sm:$0xf]
                %336 = vst [vmem:[%s152 + $0x16c] sm:$0xf] %v335
                %v337 = vld [vmem:[%s151 + $0x2a8] sm:$0xf]
                %338 = vst [vmem:[%s152 + $0x170] sm:$0xf] %v337
                %v339 = vld [vmem:[%s151 + $0x2ac] sm:$0xf]
                %340 = vst [vmem:[%s152 + $0x174] sm:$0xf] %v339
                %v341 = vld [vmem:[%s151 + $0x2b0] sm:$0xf]
                %342 = vst [vmem:[%s152 + $0x178] sm:$0xf] %v341
                %v343 = vld [vmem:[%s151 + $0x2b4] sm:$0xf]
                %344 = vst [vmem:[%s152 + $0x17c] sm:$0xf] %v343
                %v345 = vld [vmem:[%s151 + $0x2b8] sm:$0xf]
                %346 = vst [vmem:[%s152 + $0x180] sm:$0xf] %v345
                %v347 = vld [vmem:[%s151 + $0x2bc] sm:$0xf]
                %348 = vst [vmem:[%s152 + $0x184] sm:$0xf] %v347
                %v349 = vld [vmem:[%s151 + $0x2c0] sm:$0xf]
                %350 = vst [vmem:[%s152 + $0x188] sm:$0xf] %v349
                %v351 = vld [vmem:[%s151 + $0x2c4] sm:$0xf]
                %352 = vst [vmem:[%s152 + $0x18c] sm:$0xf] %v351
                %v353 = vld [vmem:[%s151 + $0x2c8] sm:$0xf]
                %354 = vst [vmem:[%s152 + $0x190] sm:$0xf] %v353
                %v355 = vld [vmem:[%s151 + $0x2cc] sm:$0xf]
                %356 = vst [vmem:[%s152 + $0x194] sm:$0xf] %v355
                %v357 = vld [vmem:[%s151 + $0x2d0] sm:$0xf]
                %358 = vst [vmem:[%s152 + $0x198] sm:$0xf] %v357
                %v359 = vld [vmem:[%s151 + $0x2d4] sm:$0xf]
                %360 = vst [vmem:[%s152 + $0x19c] sm:$0xf] %v359
              $region45: #{follower_cifar_forward.3} parent=39 // loop_footer
                %s150 = sadd.s32 1, %s146
              $region46: #{follower_cifar_forward.3} parent=39 // loop_footer_branch
                %145 = sbr.rel target = $region42
              $region47: #{follower_cifar_forward.3} parent=39 // loop_exit
                _
            $region40: #{follower_cifar_forward.3} parent=31 // pred_fallthru
              _
          $region32: #{follower_cifar_forward.3} parent=27 // pred_fallthru
            _
          %588 = vnop
        $region28: #{follower_cifar_forward.3} parent=23 // pred_fallthru
          _
      $region24: #{follower_cifar_forward.3} parent=5 // pred_fallthru
        _
      %p589 = scmp.le.s32.totalorder 1, %s9
      %p590 = scmp.lt.s32.totalorder %s9, 3
      %p591 = pnand %p589, %p590
      %p592 = pneg %p591
      // Predicated region
      $region66: #{follower_cifar_forward.3} parent=5 // pred_check
        _
      $region67: #{follower_cifar_forward.3} parent=5 // pred_check_branch
        %594 = sbr.rel (%p591) target = $region69
      $region68: #{follower_cifar_forward.3} parent=5 // pred_region
        %s595 = ssub.s32 %s9, 1
        %s596 = sand.u32 %s22, 1
        %s597 = sand.u32 %s22, 1
        %s598 = smul.addr %s597, 416
        %s599 = scalar_lea.vmem [#allocation2], %s598
        // Predicated region
        $region70: #{follower_cifar_forward.3} parent=68 // pred_check
          %p600 = pneg %p35
        $region71: #{follower_cifar_forward.3} parent=68 // pred_check_branch
          %602 = sbr.rel (%p600) target = $region73
        $region72: #{follower_cifar_forward.3} parent=68 // pred_region
          _
        $region73: #{follower_cifar_forward.3} parent=68 // pred_fallthru
          _
        %s603 = sand.u32 %s22, 1
        %s604 = sand.u32 %s22, 1
        %s605 = smul.addr %s604, 416
        %s606 = scalar_lea.vmem [#allocation2], %s605
        %p607 = pneg %p35
        %p608 = pneg %p32
        %p609 = pneg %p56
        %p610 = pneg %p53
        %p611 = pneg %p77
        %p612 = pneg %p74
        %p613 = pneg %p103
        %p614 = pneg %p100
        %s615 = smul.u32 26, %s14
        %p616 = scmp.lt.s32.totalorder %s615, 51
        %s617 = scalar_select %p616, %s615, 51
        %s618 = smul.addr %s617, 4
        %s619 = scalar_lea.vmem %s3, %s618
        %s620 = smul.u32 26, %s14
        %s621 = smul.u32 26, %s14
        %p622 = scmp.lt.s32.totalorder %s621, 51
        %s623 = scalar_select %p622, %s621, 51
        %s624 = smul.addr %s623, 4
        %s625 = scalar_lea.vmem %s3, %s624
        %s626 = smul.u32 26, %s14
        %v628 = vld [vmem:[%s1] sm:$0xf]
        %v629 = vld [vmem:[%s1 + $0x4] sm:$0xf]
        %v630 = vld [vmem:[%s1 + $0x8] sm:$0xf]
        %v631 = vld [vmem:[%s1 + $0xc] sm:$0xf]
        %v632 = vld [vmem:[%s1 + $0x10] sm:$0xf]
        %v633 = vld [vmem:[%s1 + $0x14] sm:$0xf]
        %v634 = vld [vmem:[%s1 + $0x18] sm:$0xf]
        %v635 = vld [vmem:[%s1 + $0x1c] sm:$0xf]
        %v636 = vld [vmem:[%s1 + $0x20] sm:$0xf]
        %v637 = vld [vmem:[%s1 + $0x24] sm:$0xf]
        %v638 = vld [vmem:[%s1 + $0x28] sm:$0xf]
        %v639 = vld [vmem:[%s1 + $0x2c] sm:$0xf]
        %v640 = vld [vmem:[%s1 + $0x30] sm:$0xf]
        %v641 = vld [vmem:[%s1 + $0x34] sm:$0xf]
        %v642 = vld [vmem:[%s1 + $0x38] sm:$0xf]
        %v643 = vld [vmem:[%s1 + $0x3c] sm:$0xf]
        %v644 = vld [vmem:[%s2] sm:$0x1]
        %v645 = vld [vmem:[%s599] sm:$0xf]
        %v646 = vld [vmem:[%s599 + $0x4] sm:$0xf]
        %v647 = vld [vmem:[%s599 + $0x8] sm:$0xf]
        %v648 = vld [vmem:[%s599 + $0xc] sm:$0xf]
        %v649 = vld [vmem:[%s599 + $0x10] sm:$0xf]
        %v650 = vld [vmem:[%s599 + $0x14] sm:$0xf]
        %v651 = vld [vmem:[%s599 + $0x18] sm:$0xf]
        %v652 = vld [vmem:[%s599 + $0x1c] sm:$0xf]
        %v653 = vld [vmem:[%s599 + $0x20] sm:$0xf]
        %v654 = vld [vmem:[%s599 + $0x24] sm:$0xf]
        %v655 = vld [vmem:[%s599 + $0x28] sm:$0xf]
        %v656 = vld [vmem:[%s599 + $0x2c] sm:$0xf]
        %v657 = vld [vmem:[%s599 + $0x30] sm:$0xf]
        %v658 = vld [vmem:[%s599 + $0x34] sm:$0xf]
        %v659 = vld [vmem:[%s599 + $0x38] sm:$0xf]
        %v660 = vld [vmem:[%s599 + $0x3c] sm:$0xf]
        %v661 = vld [vmem:[%s599 + $0x40] sm:$0xf]
        %v662 = vld [vmem:[%s599 + $0x44] sm:$0xf]
        %v663 = vld [vmem:[%s599 + $0x48] sm:$0xf]
        %v664 = vld [vmem:[%s599 + $0x4c] sm:$0xf]
        %v665 = vld [vmem:[%s599 + $0x50] sm:$0xf]
        %v666 = vld [vmem:[%s599 + $0x54] sm:$0xf]
        %v667 = vld [vmem:[%s599 + $0x58] sm:$0xf]
        %v668 = vld [vmem:[%s599 + $0x5c] sm:$0xf]
        %v669 = vld [vmem:[%s599 + $0x60] sm:$0xf]
        %v670 = vld [vmem:[%s599 + $0x64] sm:$0xf]
        %v697 = vunpack.c.l.b16 %v645
        %v698 = vunpack.c.l.b16 %v646
        %v699 = vunpack.c.l.b16 %v647
        %v700 = vunpack.c.l.b16 %v648
        %v701 = vunpack.c.l.b16 %v649
        %v702 = vunpack.c.l.b16 %v650
        %v703 = vunpack.c.l.b16 %v651
        %v704 = vunpack.c.l.b16 %v652
        %v705 = vunpack.c.l.b16 %v653
        %v706 = vunpack.c.l.b16 %v654
        %v707 = vunpack.c.l.b16 %v655
        %v708 = vunpack.c.l.b16 %v656
        %v709 = vunpack.c.l.b16 %v657
        %v710 = vunpack.c.l.b16 %v658
        %v711 = vunpack.c.l.b16 %v659
        %v712 = vunpack.c.l.b16 %v660
        %v713 = vunpack.c.l.b16 %v661
        %v714 = vunpack.c.l.b16 %v662
        %v715 = vunpack.c.l.b16 %v663
        %v716 = vunpack.c.l.b16 %v664
        %v717 = vunpack.c.l.b16 %v665
        %v718 = vunpack.c.l.b16 %v666
        %v719 = vunpack.c.l.b16 %v667
        %v720 = vunpack.c.l.b16 %v668
        %v721 = vunpack.c.l.b16 %v669
        %v722 = vunpack.c.l.b16 %v670
        %v723 = vpack.c.b16 %v698, %v697
        %v724 = vpack.c.b16 %v700, %v699
        %v725 = vpack.c.b16 %v702, %v701
        %v726 = vpack.c.b16 %v704, %v703
        %v727 = vpack.c.b16 %v706, %v705
        %v728 = vpack.c.b16 %v708, %v707
        %v729 = vpack.c.b16 %v710, %v709
        %v730 = vpack.c.b16 %v712, %v711
        %v731 = vpack.c.b16 %v714, %v713
        %v732 = vpack.c.b16 %v716, %v715
        %v733 = vpack.c.b16 %v718, %v717
        %v734 = vpack.c.b16 %v720, %v719
        %v735 = vpack.c.b16 %v722, %v721
        %v765 = vunpack.c.l.b16 %v628
        %v766 = vunpack.c.l.b16 %v629
        %v767 = vunpack.c.l.b16 %v630
        %v768 = vunpack.c.l.b16 %v631
        %v769 = vunpack.c.l.b16 %v632
        %v770 = vunpack.c.l.b16 %v633
        %v771 = vunpack.c.l.b16 %v634
        %v772 = vunpack.c.l.b16 %v635
        %v773 = vunpack.c.l.b16 %v636
        %v774 = vunpack.c.l.b16 %v637
        %v775 = vunpack.c.l.b16 %v638
        %v776 = vunpack.c.l.b16 %v639
        %v777 = vunpack.c.l.b16 %v640
        %v778 = vunpack.c.l.b16 %v641
        %v779 = vunpack.c.l.b16 %v642
        %v780 = vunpack.c.l.b16 %v643
        %v781 = vpack.c.b16 %v766, %v765
        %v782 = vpack.c.b16 %v768, %v767
        %v783 = vpack.c.b16 %v770, %v769
        %v784 = vpack.c.b16 %v772, %v771
        %v785 = vpack.c.b16 %v774, %v773
        %v786 = vpack.c.b16 %v776, %v775
        %v787 = vpack.c.b16 %v778, %v777
        %v788 = vpack.c.b16 %v780, %v779
        %797 = vmatprep.subr.bf16.mxu0 0
        %798 = vmatpush1.bf16.msra.mxu0 %v781
        %799 = vmatprep.subr.bf16.mxu0 0
        %800 = vmatpush1.bf16.msra.mxu0 %v782
        %801 = vmatprep.subr.bf16.mxu0 0
        %802 = vmatpush1.bf16.msra.mxu0 %v783
        %803 = vmatprep.subr.bf16.mxu0 0
        %804 = vmatpush1.bf16.msra.mxu0 %v784
        %805 = vmatprep.subr.bf16.mxu0 0
        %806 = vmatpush1.bf16.msra.mxu0 %v785
        %807 = vmatprep.subr.bf16.mxu0 0
        %808 = vmatpush1.bf16.msra.mxu0 %v786
        %809 = vmatprep.subr.bf16.mxu0 0
        %810 = vmatpush1.bf16.msra.mxu0 %v787
        %811 = vmatprep.subr.bf16.mxu0 0
        %812 = vmatpush1.bf16.msra.mxu0 %v788
        %813 = vmatprep.subr.bf16.mxu0 0
        %814 = vmatpush1.bf16.msra.mxu0 0
        %815 = vmatprep.subr.bf16.mxu0 0
        %816 = vmatpush1.bf16.msra.mxu0 0
        %817 = vmatprep.subr.bf16.mxu0 0
        %818 = vmatpush1.bf16.msra.mxu0 0
        %819 = vmatprep.subr.bf16.mxu0 0
        %820 = vmatpush1.bf16.msra.mxu0 0
        %821 = vmatprep.subr.bf16.mxu0 0
        %822 = vmatpush1.bf16.msra.mxu0 0
        %823 = vmatprep.subr.bf16.mxu0 0
        %824 = vmatpush1.bf16.msra.mxu0 0
        %825 = vmatprep.subr.bf16.mxu0 0
        %826 = vmatpush1.bf16.msra.mxu0 0
        %827 = vmatprep.subr.bf16.mxu0 0
        %828 = vmatpush1.bf16.msra.mxu0 0
        %829 = vmatprep.mubr.bf16.mxu0 0
        %830 = vmatmul.mubr.bf16.gmra.mrb[0].mxu0 %v723
        %v831 = vpop.f32.mrb[0].mxu0
        %v832 = vadd.f32 0.0, %v831
        %v833 = vpop.f32.mrb[0].mxu0
        %v834 = vpop.f32.mrb[0].mxu0
        %v835 = vadd.f32 0.0, %v834
        %v836 = vpop.f32.mrb[0].mxu0
        %837 = vmatprep.mubr.bf16.mxu0 0
        %838 = vmatmul.mubr.bf16.gmra.mrb[0].mxu0 %v724
        %v839 = vpop.f32.mrb[0].mxu0
        %v840 = vadd.f32 0.0, %v839
        %v841 = vpop.f32.mrb[0].mxu0
        %v842 = vpop.f32.mrb[0].mxu0
        %v843 = vadd.f32 0.0, %v842
        %v844 = vpop.f32.mrb[0].mxu0
        %845 = vmatprep.mubr.bf16.mxu0 0
        %846 = vmatmul.mubr.bf16.gmra.mrb[0].mxu0 %v725
        %v847 = vpop.f32.mrb[0].mxu0
        %v848 = vadd.f32 0.0, %v847
        %v849 = vpop.f32.mrb[0].mxu0
        %v850 = vpop.f32.mrb[0].mxu0
        %v851 = vadd.f32 0.0, %v850
        %v852 = vpop.f32.mrb[0].mxu0
        %853 = vmatprep.mubr.bf16.mxu0 0
        %854 = vmatmul.mubr.bf16.gmra.mrb[0].mxu0 %v726
        %v855 = vpop.f32.mrb[0].mxu0
        %v856 = vadd.f32 0.0, %v855
        %v857 = vpop.f32.mrb[0].mxu0
        %v858 = vpop.f32.mrb[0].mxu0
        %v859 = vadd.f32 0.0, %v858
        %v860 = vpop.f32.mrb[0].mxu0
        %861 = vmatprep.mubr.bf16.mxu0 0
        %862 = vmatmul.mubr.bf16.gmra.mrb[0].mxu0 %v727
        %v863 = vpop.f32.mrb[0].mxu0
        %v864 = vadd.f32 0.0, %v863
        %v865 = vpop.f32.mrb[0].mxu0
        %v866 = vpop.f32.mrb[0].mxu0
        %v867 = vadd.f32 0.0, %v866
        %v868 = vpop.f32.mrb[0].mxu0
        %869 = vmatprep.mubr.bf16.mxu0 0
        %870 = vmatmul.mubr.bf16.gmra.mrb[0].mxu0 %v728
        %v871 = vpop.f32.mrb[0].mxu0
        %v872 = vadd.f32 0.0, %v871
        %v873 = vpop.f32.mrb[0].mxu0
        %v874 = vpop.f32.mrb[0].mxu0
        %v875 = vadd.f32 0.0, %v874
        %v876 = vpop.f32.mrb[0].mxu0
        %877 = vmatprep.mubr.bf16.mxu0 0
        %878 = vmatmul.mubr.bf16.gmra.mrb[0].mxu0 %v729
        %v879 = vpop.f32.mrb[0].mxu0
        %v880 = vadd.f32 0.0, %v879
        %v881 = vpop.f32.mrb[0].mxu0
        %v882 = vpop.f32.mrb[0].mxu0
        %v883 = vadd.f32 0.0, %v882
        %v884 = vpop.f32.mrb[0].mxu0
        %885 = vmatprep.mubr.bf16.mxu0 0
        %886 = vmatmul.mubr.bf16.gmra.mrb[0].mxu0 %v730
        %v887 = vpop.f32.mrb[0].mxu0
        %v888 = vadd.f32 0.0, %v887
        %v889 = vpop.f32.mrb[0].mxu0
        %v890 = vpop.f32.mrb[0].mxu0
        %v891 = vadd.f32 0.0, %v890
        %v892 = vpop.f32.mrb[0].mxu0
        %893 = vmatprep.mubr.bf16.mxu0 0
        %894 = vmatmul.mubr.bf16.gmra.mrb[0].mxu0 %v731
        %v895 = vpop.f32.mrb[0].mxu0
        %v896 = vadd.f32 0.0, %v895
        %v897 = vpop.f32.mrb[0].mxu0
        %v898 = vpop.f32.mrb[0].mxu0
        %v899 = vadd.f32 0.0, %v898
        %v900 = vpop.f32.mrb[0].mxu0
        %901 = vmatprep.mubr.bf16.mxu0 0
        %902 = vmatmul.mubr.bf16.gmra.mrb[0].mxu0 %v732
        %v903 = vpop.f32.mrb[0].mxu0
        %v904 = vadd.f32 0.0, %v903
        %v905 = vpop.f32.mrb[0].mxu0
        %v906 = vpop.f32.mrb[0].mxu0
        %v907 = vadd.f32 0.0, %v906
        %v908 = vpop.f32.mrb[0].mxu0
        %909 = vmatprep.mubr.bf16.mxu0 0
        %910 = vmatmul.mubr.bf16.gmra.mrb[0].mxu0 %v733
        %v911 = vpop.f32.mrb[0].mxu0
        %v912 = vadd.f32 0.0, %v911
        %v913 = vpop.f32.mrb[0].mxu0
        %v914 = vpop.f32.mrb[0].mxu0
        %v915 = vadd.f32 0.0, %v914
        %v916 = vpop.f32.mrb[0].mxu0
        %917 = vmatprep.mubr.bf16.mxu0 0
        %918 = vmatmul.mubr.bf16.gmra.mrb[0].mxu0 %v734
        %v919 = vpop.f32.mrb[0].mxu0
        %v920 = vadd.f32 0.0, %v919
        %v921 = vpop.f32.mrb[0].mxu0
        %v922 = vpop.f32.mrb[0].mxu0
        %v923 = vadd.f32 0.0, %v922
        %v924 = vpop.f32.mrb[0].mxu0
        %925 = vmatprep.mubr.bf16.mxu0 0
        %926 = vmatmul.mubr.bf16.gmra.mrb[0].mxu0 %v735
        %v927 = vpop.f32.mrb[0].mxu0
        %v928 = vadd.f32 0.0, %v927
        %v929 = vpop.f32.mrb[0].mxu0
        %v930 = vpop.f32.mrb[0].mxu0
        %v931 = vadd.f32 0.0, %v930
        %v932 = vpop.f32.mrb[0].mxu0
        %933 = vdwg.mxu0
        %s934 = scalar_lea.vmem %s599, 104 [#allocation2]
        %v935 = vld [vmem:[%s934] sm:$0xf]
        %v936 = vld [vmem:[%s934 + $0x4] sm:$0xf]
        %v937 = vld [vmem:[%s934 + $0x8] sm:$0xf]
        %v938 = vld [vmem:[%s934 + $0xc] sm:$0xf]
        %v939 = vld [vmem:[%s934 + $0x10] sm:$0xf]
        %v940 = vld [vmem:[%s934 + $0x14] sm:$0xf]
        %v941 = vld [vmem:[%s934 + $0x18] sm:$0xf]
        %v942 = vld [vmem:[%s934 + $0x1c] sm:$0xf]
        %v943 = vld [vmem:[%s934 + $0x20] sm:$0xf]
        %v944 = vld [vmem:[%s934 + $0x24] sm:$0xf]
        %v945 = vld [vmem:[%s934 + $0x28] sm:$0xf]
        %v946 = vld [vmem:[%s934 + $0x2c] sm:$0xf]
        %v947 = vld [vmem:[%s934 + $0x30] sm:$0xf]
        %v948 = vld [vmem:[%s934 + $0x34] sm:$0xf]
        %v949 = vld [vmem:[%s934 + $0x38] sm:$0xf]
        %v950 = vld [vmem:[%s934 + $0x3c] sm:$0xf]
        %v951 = vld [vmem:[%s934 + $0x40] sm:$0xf]
        %v952 = vld [vmem:[%s934 + $0x44] sm:$0xf]
        %v953 = vld [vmem:[%s934 + $0x48] sm:$0xf]
        %v954 = vld [vmem:[%s934 + $0x4c] sm:$0xf]
        %v955 = vld [vmem:[%s934 + $0x50] sm:$0xf]
        %v956 = vld [vmem:[%s934 + $0x54] sm:$0xf]
        %v957 = vld [vmem:[%s934 + $0x58] sm:$0xf]
        %v958 = vld [vmem:[%s934 + $0x5c] sm:$0xf]
        %v959 = vld [vmem:[%s934 + $0x60] sm:$0xf]
        %v960 = vld [vmem:[%s934 + $0x64] sm:$0xf]
        %v987 = vunpack.c.l.b16 %v935
        %v988 = vunpack.c.l.b16 %v936
        %v989 = vunpack.c.l.b16 %v937
        %v990 = vunpack.c.l.b16 %v938
        %v991 = vunpack.c.l.b16 %v939
        %v992 = vunpack.c.l.b16 %v940
        %v993 = vunpack.c.l.b16 %v941
        %v994 = vunpack.c.l.b16 %v942
        %v995 = vunpack.c.l.b16 %v943
        %v996 = vunpack.c.l.b16 %v944
        %v997 = vunpack.c.l.b16 %v945
        %v998 = vunpack.c.l.b16 %v946
        %v999 = vunpack.c.l.b16 %v947
        %v1000 = vunpack.c.l.b16 %v948
        %v1001 = vunpack.c.l.b16 %v949
        %v1002 = vunpack.c.l.b16 %v950
        %v1003 = vunpack.c.l.b16 %v951
        %v1004 = vunpack.c.l.b16 %v952
        %v1005 = vunpack.c.l.b16 %v953
        %v1006 = vunpack.c.l.b16 %v954
        %v1007 = vunpack.c.l.b16 %v955
        %v1008 = vunpack.c.l.b16 %v956
        %v1009 = vunpack.c.l.b16 %v957
        %v1010 = vunpack.c.l.b16 %v958
        %v1011 = vunpack.c.l.b16 %v959
        %v1012 = vunpack.c.l.b16 %v960
        %v1013 = vpack.c.b16 %v988, %v987
        %v1014 = vpack.c.b16 %v990, %v989
        %v1015 = vpack.c.b16 %v992, %v991
        %v1016 = vpack.c.b16 %v994, %v993
        %v1017 = vpack.c.b16 %v996, %v995
        %v1018 = vpack.c.b16 %v998, %v997
        %v1019 = vpack.c.b16 %v1000, %v999
        %v1020 = vpack.c.b16 %v1002, %v1001
        %v1021 = vpack.c.b16 %v1004, %v1003
        %v1022 = vpack.c.b16 %v1006, %v1005
        %v1023 = vpack.c.b16 %v1008, %v1007
        %v1024 = vpack.c.b16 %v1010, %v1009
        %v1025 = vpack.c.b16 %v1012, %v1011
        %1039 = vmatprep.subr.bf16.mxu0 0
        %1040 = vmatpush1.bf16.msra.mxu0 %v781
        %1041 = vmatprep.subr.bf16.mxu0 0
        %1042 = vmatpush1.bf16.msra.mxu0 %v782
        %1043 = vmatprep.subr.bf16.mxu0 0
        %1044 = vmatpush1.bf16.msra.mxu0 %v783
        %1045 = vmatprep.subr.bf16.mxu0 0
        %1046 = vmatpush1.bf16.msra.mxu0 %v784
        %1047 = vmatprep.subr.bf16.mxu0 0
        %1048 = vmatpush1.bf16.msra.mxu0 %v785
        %1049 = vmatprep.subr.bf16.mxu0 0
        %1050 = vmatpush1.bf16.msra.mxu0 %v786
        %1051 = vmatprep.subr.bf16.mxu0 0
        %1052 = vmatpush1.bf16.msra.mxu0 %v787
        %1053 = vmatprep.subr.bf16.mxu0 0
        %1054 = vmatpush1.bf16.msra.mxu0 %v788
        %1055 = vmatprep.subr.bf16.mxu0 0
        %1056 = vmatpush1.bf16.msra.mxu0 0
        %1057 = vmatprep.subr.bf16.mxu0 0
        %1058 = vmatpush1.bf16.msra.mxu0 0
        %1059 = vmatprep.subr.bf16.mxu0 0
        %1060 = vmatpush1.bf16.msra.mxu0 0
        %1061 = vmatprep.subr.bf16.mxu0 0
        %1062 = vmatpush1.bf16.msra.mxu0 0
        %1063 = vmatprep.subr.bf16.mxu0 0
        %1064 = vmatpush1.bf16.msra.mxu0 0
        %1065 = vmatprep.subr.bf16.mxu0 0
        %1066 = vmatpush1.bf16.msra.mxu0 0
        %1067 = vmatprep.subr.bf16.mxu0 0
        %1068 = vmatpush1.bf16.msra.mxu0 0
        %1069 = vmatprep.subr.bf16.mxu0 0
        %1070 = vmatpush1.bf16.msra.mxu0 0
        %1071 = vmatprep.mubr.bf16.mxu0 0
        %1072 = vmatmul.mubr.bf16.gmra.mrb[0].mxu0 %v1013
        %v1073 = vpop.f32.mrb[0].mxu0
        %v1074 = vadd.f32 0.0, %v1073
        %v1075 = vpop.f32.mrb[0].mxu0
        %v1076 = vpop.f32.mrb[0].mxu0
        %v1077 = vadd.f32 0.0, %v1076
        %v1078 = vpop.f32.mrb[0].mxu0
        %1079 = vmatprep.mubr.bf16.mxu0 0
        %1080 = vmatmul.mubr.bf16.gmra.mrb[0].mxu0 %v1014
        %v1081 = vpop.f32.mrb[0].mxu0
        %v1082 = vadd.f32 0.0, %v1081
        %v1083 = vpop.f32.mrb[0].mxu0
        %v1084 = vpop.f32.mrb[0].mxu0
        %v1085 = vadd.f32 0.0, %v1084
        %v1086 = vpop.f32.mrb[0].mxu0
        %1087 = vmatprep.mubr.bf16.mxu0 0
        %1088 = vmatmul.mubr.bf16.gmra.mrb[0].mxu0 %v1015
        %v1089 = vpop.f32.mrb[0].mxu0
        %v1090 = vadd.f32 0.0, %v1089
        %v1091 = vpop.f32.mrb[0].mxu0
        %v1092 = vpop.f32.mrb[0].mxu0
        %v1093 = vadd.f32 0.0, %v1092
        %v1094 = vpop.f32.mrb[0].mxu0
        %1095 = vmatprep.mubr.bf16.mxu0 0
        %1096 = vmatmul.mubr.bf16.gmra.mrb[0].mxu0 %v1016
        %v1097 = vpop.f32.mrb[0].mxu0
        %v1098 = vadd.f32 0.0, %v1097
        %v1099 = vpop.f32.mrb[0].mxu0
        %v1100 = vpop.f32.mrb[0].mxu0
        %v1101 = vadd.f32 0.0, %v1100
        %v1102 = vpop.f32.mrb[0].mxu0
        %1103 = vmatprep.mubr.bf16.mxu0 0
        %1104 = vmatmul.mubr.bf16.gmra.mrb[0].mxu0 %v1017
        %v1105 = vpop.f32.mrb[0].mxu0
        %v1106 = vadd.f32 0.0, %v1105
        %v1107 = vpop.f32.mrb[0].mxu0
        %v1108 = vpop.f32.mrb[0].mxu0
        %v1109 = vadd.f32 0.0, %v1108
        %v1110 = vpop.f32.mrb[0].mxu0
        %1111 = vmatprep.mubr.bf16.mxu0 0
        %1112 = vmatmul.mubr.bf16.gmra.mrb[0].mxu0 %v1018
        %v1113 = vpop.f32.mrb[0].mxu0
        %v1114 = vadd.f32 0.0, %v1113
        %v1115 = vpop.f32.mrb[0].mxu0
        %v1116 = vpop.f32.mrb[0].mxu0
        %v1117 = vadd.f32 0.0, %v1116
        %v1118 = vpop.f32.mrb[0].mxu0
        %1119 = vmatprep.mubr.bf16.mxu0 0
        %1120 = vmatmul.mubr.bf16.gmra.mrb[0].mxu0 %v1019
        %v1121 = vpop.f32.mrb[0].mxu0
        %v1122 = vadd.f32 0.0, %v1121
        %v1123 = vpop.f32.mrb[0].mxu0
        %v1124 = vpop.f32.mrb[0].mxu0
        %v1125 = vadd.f32 0.0, %v1124
        %v1126 = vpop.f32.mrb[0].mxu0
        %1127 = vmatprep.mubr.bf16.mxu0 0
        %1128 = vmatmul.mubr.bf16.gmra.mrb[0].mxu0 %v1020
        %v1129 = vpop.f32.mrb[0].mxu0
        %v1130 = vadd.f32 0.0, %v1129
        %v1131 = vpop.f32.mrb[0].mxu0
        %v1132 = vpop.f32.mrb[0].mxu0
        %v1133 = vadd.f32 0.0, %v1132
        %v1134 = vpop.f32.mrb[0].mxu0
        %1135 = vmatprep.mubr.bf16.mxu0 0
        %1136 = vmatmul.mubr.bf16.gmra.mrb[0].mxu0 %v1021
        %v1137 = vpop.f32.mrb[0].mxu0
        %v1138 = vadd.f32 0.0, %v1137
        %v1139 = vpop.f32.mrb[0].mxu0
        %v1140 = vpop.f32.mrb[0].mxu0
        %v1141 = vadd.f32 0.0, %v1140
        %v1142 = vpop.f32.mrb[0].mxu0
        %1143 = vmatprep.mubr.bf16.mxu0 0
        %1144 = vmatmul.mubr.bf16.gmra.mrb[0].mxu0 %v1022
        %v1145 = vpop.f32.mrb[0].mxu0
        %v1146 = vadd.f32 0.0, %v1145
        %v1147 = vpop.f32.mrb[0].mxu0
        %v1148 = vpop.f32.mrb[0].mxu0
        %v1149 = vadd.f32 0.0, %v1148
        %v1150 = vpop.f32.mrb[0].mxu0
        %1151 = vmatprep.mubr.bf16.mxu0 0
        %1152 = vmatmul.mubr.bf16.gmra.mrb[0].mxu0 %v1023
        %v1153 = vpop.f32.mrb[0].mxu0
        %v1154 = vadd.f32 0.0, %v1153
        %v1155 = vpop.f32.mrb[0].mxu0
        %v1156 = vpop.f32.mrb[0].mxu0
        %v1157 = vadd.f32 0.0, %v1156
        %v1158 = vpop.f32.mrb[0].mxu0
        %1159 = vmatprep.mubr.bf16.mxu0 0
        %1160 = vmatmul.mubr.bf16.gmra.mrb[0].mxu0 %v1024
        %v1161 = vpop.f32.mrb[0].mxu0
        %v1162 = vadd.f32 0.0, %v1161
        %v1163 = vpop.f32.mrb[0].mxu0
        %v1164 = vpop.f32.mrb[0].mxu0
        %v1165 = vadd.f32 0.0, %v1164
        %v1166 = vpop.f32.mrb[0].mxu0
        %1167 = vmatprep.mubr.bf16.mxu0 0
        %1168 = vmatmul.mubr.bf16.gmra.mrb[0].mxu0 %v1025
        %v1169 = vpop.f32.mrb[0].mxu0
        %v1170 = vadd.f32 0.0, %v1169
        %v1171 = vpop.f32.mrb[0].mxu0
        %v1172 = vpop.f32.mrb[0].mxu0
        %v1173 = vadd.f32 0.0, %v1172
        %v1174 = vpop.f32.mrb[0].mxu0
        %1175 = vdwg.mxu0
        %s1176 = scalar_lea.vmem %s599, 208 [#allocation2]
        %v1177 = vld [vmem:[%s1176] sm:$0xf]
        %v1178 = vld [vmem:[%s1176 + $0x4] sm:$0xf]
        %v1179 = vld [vmem:[%s1176 + $0x8] sm:$0xf]
        %v1180 = vld [vmem:[%s1176 + $0xc] sm:$0xf]
        %v1181 = vld [vmem:[%s1176 + $0x10] sm:$0xf]
        %v1182 = vld [vmem:[%s1176 + $0x14] sm:$0xf]
        %v1183 = vld [vmem:[%s1176 + $0x18] sm:$0xf]
        %v1184 = vld [vmem:[%s1176 + $0x1c] sm:$0xf]
        %v1185 = vld [vmem:[%s1176 + $0x20] sm:$0xf]
        %v1186 = vld [vmem:[%s1176 + $0x24] sm:$0xf]
        %v1187 = vld [vmem:[%s1176 + $0x28] sm:$0xf]
        %v1188 = vld [vmem:[%s1176 + $0x2c] sm:$0xf]
        %v1189 = vld [vmem:[%s1176 + $0x30] sm:$0xf]
        %v1190 = vld [vmem:[%s1176 + $0x34] sm:$0xf]
        %v1191 = vld [vmem:[%s1176 + $0x38] sm:$0xf]
        %v1192 = vld [vmem:[%s1176 + $0x3c] sm:$0xf]
        %v1193 = vld [vmem:[%s1176 + $0x40] sm:$0xf]
        %v1194 = vld [vmem:[%s1176 + $0x44] sm:$0xf]
        %v1195 = vld [vmem:[%s1176 + $0x48] sm:$0xf]
        %v1196 = vld [vmem:[%s1176 + $0x4c] sm:$0xf]
        %v1197 = vld [vmem:[%s1176 + $0x50] sm:$0xf]
        %v1198 = vld [vmem:[%s1176 + $0x54] sm:$0xf]
        %v1199 = vld [vmem:[%s1176 + $0x58] sm:$0xf]
        %v1200 = vld [vmem:[%s1176 + $0x5c] sm:$0xf]
        %v1201 = vld [vmem:[%s1176 + $0x60] sm:$0xf]
        %v1202 = vld [vmem:[%s1176 + $0x64] sm:$0xf]
        %v1229 = vunpack.c.l.b16 %v1177
        %v1230 = vunpack.c.l.b16 %v1178
        %v1231 = vunpack.c.l.b16 %v1179
        %v1232 = vunpack.c.l.b16 %v1180
        %v1233 = vunpack.c.l.b16 %v1181
        %v1234 = vunpack.c.l.b16 %v1182
        %v1235 = vunpack.c.l.b16 %v1183
        %v1236 = vunpack.c.l.b16 %v1184
        %v1237 = vunpack.c.l.b16 %v1185
        %v1238 = vunpack.c.l.b16 %v1186
        %v1239 = vunpack.c.l.b16 %v1187
        %v1240 = vunpack.c.l.b16 %v1188
        %v1241 = vunpack.c.l.b16 %v1189
        %v1242 = vunpack.c.l.b16 %v1190
        %v1243 = vunpack.c.l.b16 %v1191
        %v1244 = vunpack.c.l.b16 %v1192
        %v1245 = vunpack.c.l.b16 %v1193
        %v1246 = vunpack.c.l.b16 %v1194
        %v1247 = vunpack.c.l.b16 %v1195
        %v1248 = vunpack.c.l.b16 %v1196
        %v1249 = vunpack.c.l.b16 %v1197
        %v1250 = vunpack.c.l.b16 %v1198
        %v1251 = vunpack.c.l.b16 %v1199
        %v1252 = vunpack.c.l.b16 %v1200
        %v1253 = vunpack.c.l.b16 %v1201
        %v1254 = vunpack.c.l.b16 %v1202
        %v1255 = vpack.c.b16 %v1230, %v1229
        %v1256 = vpack.c.b16 %v1232, %v1231
        %v1257 = vpack.c.b16 %v1234, %v1233
        %v1258 = vpack.c.b16 %v1236, %v1235
        %v1259 = vpack.c.b16 %v1238, %v1237
        %v1260 = vpack.c.b16 %v1240, %v1239
        %v1261 = vpack.c.b16 %v1242, %v1241
        %v1262 = vpack.c.b16 %v1244, %v1243
        %v1263 = vpack.c.b16 %v1246, %v1245
        %v1264 = vpack.c.b16 %v1248, %v1247
        %v1265 = vpack.c.b16 %v1250, %v1249
        %v1266 = vpack.c.b16 %v1252, %v1251
        %v1267 = vpack.c.b16 %v1254, %v1253
        %1281 = vmatprep.subr.bf16.mxu0 0
        %1282 = vmatpush1.bf16.msra.mxu0 %v781
        %1283 = vmatprep.subr.bf16.mxu0 0
        %1284 = vmatpush1.bf16.msra.mxu0 %v782
        %1285 = vmatprep.subr.bf16.mxu0 0
        %1286 = vmatpush1.bf16.msra.mxu0 %v783
        %1287 = vmatprep.subr.bf16.mxu0 0
        %1288 = vmatpush1.bf16.msra.mxu0 %v784
        %1289 = vmatprep.subr.bf16.mxu0 0
        %1290 = vmatpush1.bf16.msra.mxu0 %v785
        %1291 = vmatprep.subr.bf16.mxu0 0
        %1292 = vmatpush1.bf16.msra.mxu0 %v786
        %1293 = vmatprep.subr.bf16.mxu0 0
        %1294 = vmatpush1.bf16.msra.mxu0 %v787
        %1295 = vmatprep.subr.bf16.mxu0 0
        %1296 = vmatpush1.bf16.msra.mxu0 %v788
        %1297 = vmatprep.subr.bf16.mxu0 0
        %1298 = vmatpush1.bf16.msra.mxu0 0
        %1299 = vmatprep.subr.bf16.mxu0 0
        %1300 = vmatpush1.bf16.msra.mxu0 0
        %1301 = vmatprep.subr.bf16.mxu0 0
        %1302 = vmatpush1.bf16.msra.mxu0 0
        %1303 = vmatprep.subr.bf16.mxu0 0
        %1304 = vmatpush1.bf16.msra.mxu0 0
        %1305 = vmatprep.subr.bf16.mxu0 0
        %1306 = vmatpush1.bf16.msra.mxu0 0
        %1307 = vmatprep.subr.bf16.mxu0 0
        %1308 = vmatpush1.bf16.msra.mxu0 0
        %1309 = vmatprep.subr.bf16.mxu0 0
        %1310 = vmatpush1.bf16.msra.mxu0 0
        %1311 = vmatprep.subr.bf16.mxu0 0
        %1312 = vmatpush1.bf16.msra.mxu0 0
        %1313 = vmatprep.mubr.bf16.mxu0 0
        %1314 = vmatmul.mubr.bf16.gmra.mrb[0].mxu0 %v1255
        %v1315 = vpop.f32.mrb[0].mxu0
        %v1316 = vadd.f32 0.0, %v1315
        %v1317 = vpop.f32.mrb[0].mxu0
        %v1318 = vpop.f32.mrb[0].mxu0
        %v1319 = vadd.f32 0.0, %v1318
        %v1320 = vpop.f32.mrb[0].mxu0
        %1321 = vmatprep.mubr.bf16.mxu0 0
        %1322 = vmatmul.mubr.bf16.gmra.mrb[0].mxu0 %v1256
        %v1323 = vpop.f32.mrb[0].mxu0
        %v1324 = vadd.f32 0.0, %v1323
        %v1325 = vpop.f32.mrb[0].mxu0
        %v1326 = vpop.f32.mrb[0].mxu0
        %v1327 = vadd.f32 0.0, %v1326
        %v1328 = vpop.f32.mrb[0].mxu0
        %1329 = vmatprep.mubr.bf16.mxu0 0
        %1330 = vmatmul.mubr.bf16.gmra.mrb[0].mxu0 %v1257
        %v1331 = vpop.f32.mrb[0].mxu0
        %v1332 = vadd.f32 0.0, %v1331
        %v1333 = vpop.f32.mrb[0].mxu0
        %v1334 = vpop.f32.mrb[0].mxu0
        %v1335 = vadd.f32 0.0, %v1334
        %v1336 = vpop.f32.mrb[0].mxu0
        %1337 = vmatprep.mubr.bf16.mxu0 0
        %1338 = vmatmul.mubr.bf16.gmra.mrb[0].mxu0 %v1258
        %v1339 = vpop.f32.mrb[0].mxu0
        %v1340 = vadd.f32 0.0, %v1339
        %v1341 = vpop.f32.mrb[0].mxu0
        %v1342 = vpop.f32.mrb[0].mxu0
        %v1343 = vadd.f32 0.0, %v1342
        %v1344 = vpop.f32.mrb[0].mxu0
        %1345 = vmatprep.mubr.bf16.mxu0 0
        %1346 = vmatmul.mubr.bf16.gmra.mrb[0].mxu0 %v1259
        %v1347 = vpop.f32.mrb[0].mxu0
        %v1348 = vadd.f32 0.0, %v1347
        %v1349 = vpop.f32.mrb[0].mxu0
        %v1350 = vpop.f32.mrb[0].mxu0
        %v1351 = vadd.f32 0.0, %v1350
        %v1352 = vpop.f32.mrb[0].mxu0
        %1353 = vmatprep.mubr.bf16.mxu0 0
        %1354 = vmatmul.mubr.bf16.gmra.mrb[0].mxu0 %v1260
        %v1355 = vpop.f32.mrb[0].mxu0
        %v1356 = vadd.f32 0.0, %v1355
        %v1357 = vpop.f32.mrb[0].mxu0
        %v1358 = vpop.f32.mrb[0].mxu0
        %v1359 = vadd.f32 0.0, %v1358
        %v1360 = vpop.f32.mrb[0].mxu0
        %1361 = vmatprep.mubr.bf16.mxu0 0
        %1362 = vmatmul.mubr.bf16.gmra.mrb[0].mxu0 %v1261
        %v1363 = vpop.f32.mrb[0].mxu0
        %v1364 = vadd.f32 0.0, %v1363
        %v1365 = vpop.f32.mrb[0].mxu0
        %v1366 = vpop.f32.mrb[0].mxu0
        %v1367 = vadd.f32 0.0, %v1366
        %v1368 = vpop.f32.mrb[0].mxu0
        %1369 = vmatprep.mubr.bf16.mxu0 0
        %1370 = vmatmul.mubr.bf16.gmra.mrb[0].mxu0 %v1262
        %v1371 = vpop.f32.mrb[0].mxu0
        %v1372 = vadd.f32 0.0, %v1371
        %v1373 = vpop.f32.mrb[0].mxu0
        %v1374 = vpop.f32.mrb[0].mxu0
        %v1375 = vadd.f32 0.0, %v1374
        %v1376 = vpop.f32.mrb[0].mxu0
        %1377 = vmatprep.mubr.bf16.mxu0 0
        %1378 = vmatmul.mubr.bf16.gmra.mrb[0].mxu0 %v1263
        %v1379 = vpop.f32.mrb[0].mxu0
        %v1380 = vadd.f32 0.0, %v1379
        %v1381 = vpop.f32.mrb[0].mxu0
        %v1382 = vpop.f32.mrb[0].mxu0
        %v1383 = vadd.f32 0.0, %v1382
        %v1384 = vpop.f32.mrb[0].mxu0
        %1385 = vmatprep.mubr.bf16.mxu0 0
        %1386 = vmatmul.mubr.bf16.gmra.mrb[0].mxu0 %v1264
        %v1387 = vpop.f32.mrb[0].mxu0
        %v1388 = vadd.f32 0.0, %v1387
        %v1389 = vpop.f32.mrb[0].mxu0
        %v1390 = vpop.f32.mrb[0].mxu0
        %v1391 = vadd.f32 0.0, %v1390
        %v1392 = vpop.f32.mrb[0].mxu0
        %1393 = vmatprep.mubr.bf16.mxu0 0
        %1394 = vmatmul.mubr.bf16.gmra.mrb[0].mxu0 %v1265
        %v1395 = vpop.f32.mrb[0].mxu0
        %v1396 = vadd.f32 0.0, %v1395
        %v1397 = vpop.f32.mrb[0].mxu0
        %v1398 = vpop.f32.mrb[0].mxu0
        %v1399 = vadd.f32 0.0, %v1398
        %v1400 = vpop.f32.mrb[0].mxu0
        %1401 = vmatprep.mubr.bf16.mxu0 0
        %1402 = vmatmul.mubr.bf16.gmra.mrb[0].mxu0 %v1266
        %v1403 = vpop.f32.mrb[0].mxu0
        %v1404 = vadd.f32 0.0, %v1403
        %v1405 = vpop.f32.mrb[0].mxu0
        %v1406 = vpop.f32.mrb[0].mxu0
        %v1407 = vadd.f32 0.0, %v1406
        %v1408 = vpop.f32.mrb[0].mxu0
        %1409 = vmatprep.mubr.bf16.mxu0 0
        %1410 = vmatmul.mubr.bf16.gmra.mrb[0].mxu0 %v1267
        %v1411 = vpop.f32.mrb[0].mxu0
        %v1412 = vadd.f32 0.0, %v1411
        %v1413 = vpop.f32.mrb[0].mxu0
        %v1414 = vpop.f32.mrb[0].mxu0
        %v1415 = vadd.f32 0.0, %v1414
        %v1416 = vpop.f32.mrb[0].mxu0
        %1417 = vdwg.mxu0
        %s1418 = scalar_lea.vmem %s599, 312 [#allocation2]
        %v1419 = vld [vmem:[%s1418] sm:$0xf]
        %v1420 = vld [vmem:[%s1418 + $0x4] sm:$0xf]
        %v1421 = vld [vmem:[%s1418 + $0x8] sm:$0xf]
        %v1422 = vld [vmem:[%s1418 + $0xc] sm:$0xf]
        %v1423 = vld [vmem:[%s1418 + $0x10] sm:$0xf]
        %v1424 = vld [vmem:[%s1418 + $0x14] sm:$0xf]
        %v1425 = vld [vmem:[%s1418 + $0x18] sm:$0xf]
        %v1426 = vld [vmem:[%s1418 + $0x1c] sm:$0xf]
        %v1427 = vld [vmem:[%s1418 + $0x20] sm:$0xf]
        %v1428 = vld [vmem:[%s1418 + $0x24] sm:$0xf]
        %v1429 = vld [vmem:[%s1418 + $0x28] sm:$0xf]
        %v1430 = vld [vmem:[%s1418 + $0x2c] sm:$0xf]
        %v1431 = vld [vmem:[%s1418 + $0x30] sm:$0xf]
        %v1432 = vld [vmem:[%s1418 + $0x34] sm:$0xf]
        %v1433 = vld [vmem:[%s1418 + $0x38] sm:$0xf]
        %v1434 = vld [vmem:[%s1418 + $0x3c] sm:$0xf]
        %v1435 = vld [vmem:[%s1418 + $0x40] sm:$0xf]
        %v1436 = vld [vmem:[%s1418 + $0x44] sm:$0xf]
        %v1437 = vld [vmem:[%s1418 + $0x48] sm:$0xf]
        %v1438 = vld [vmem:[%s1418 + $0x4c] sm:$0xf]
        %v1439 = vld [vmem:[%s1418 + $0x50] sm:$0xf]
        %v1440 = vld [vmem:[%s1418 + $0x54] sm:$0xf]
        %v1441 = vld [vmem:[%s1418 + $0x58] sm:$0xf]
        %v1442 = vld [vmem:[%s1418 + $0x5c] sm:$0xf]
        %v1443 = vld [vmem:[%s1418 + $0x60] sm:$0xf]
        %v1444 = vld [vmem:[%s1418 + $0x64] sm:$0xf]
        %v1471 = vunpack.c.l.b16 %v1419
        %v1472 = vunpack.c.l.b16 %v1420
        %v1473 = vunpack.c.l.b16 %v1421
        %v1474 = vunpack.c.l.b16 %v1422
        %v1475 = vunpack.c.l.b16 %v1423
        %v1476 = vunpack.c.l.b16 %v1424
        %v1477 = vunpack.c.l.b16 %v1425
        %v1478 = vunpack.c.l.b16 %v1426
        %v1479 = vunpack.c.l.b16 %v1427
        %v1480 = vunpack.c.l.b16 %v1428
        %v1481 = vunpack.c.l.b16 %v1429
        %v1482 = vunpack.c.l.b16 %v1430
        %v1483 = vunpack.c.l.b16 %v1431
        %v1484 = vunpack.c.l.b16 %v1432
        %v1485 = vunpack.c.l.b16 %v1433
        %v1486 = vunpack.c.l.b16 %v1434
        %v1487 = vunpack.c.l.b16 %v1435
        %v1488 = vunpack.c.l.b16 %v1436
        %v1489 = vunpack.c.l.b16 %v1437
        %v1490 = vunpack.c.l.b16 %v1438
        %v1491 = vunpack.c.l.b16 %v1439
        %v1492 = vunpack.c.l.b16 %v1440
        %v1493 = vunpack.c.l.b16 %v1441
        %v1494 = vunpack.c.l.b16 %v1442
        %v1495 = vunpack.c.l.b16 %v1443
        %v1496 = vunpack.c.l.b16 %v1444
        %v1497 = vpack.c.b16 %v1472, %v1471
        %v1498 = vpack.c.b16 %v1474, %v1473
        %v1499 = vpack.c.b16 %v1476, %v1475
        %v1500 = vpack.c.b16 %v1478, %v1477
        %v1501 = vpack.c.b16 %v1480, %v1479
        %v1502 = vpack.c.b16 %v1482, %v1481
        %v1503 = vpack.c.b16 %v1484, %v1483
        %v1504 = vpack.c.b16 %v1486, %v1485
        %v1505 = vpack.c.b16 %v1488, %v1487
        %v1506 = vpack.c.b16 %v1490, %v1489
        %v1507 = vpack.c.b16 %v1492, %v1491
        %v1508 = vpack.c.b16 %v1494, %v1493
        %v1509 = vpack.c.b16 %v1496, %v1495
        %1523 = vmatprep.subr.bf16.mxu0 0
        %1524 = vmatpush1.bf16.msra.mxu0 %v781
        %1525 = vmatprep.subr.bf16.mxu0 0
        %1526 = vmatpush1.bf16.msra.mxu0 %v782
        %1527 = vmatprep.subr.bf16.mxu0 0
        %1528 = vmatpush1.bf16.msra.mxu0 %v783
        %1529 = vmatprep.subr.bf16.mxu0 0
        %1530 = vmatpush1.bf16.msra.mxu0 %v784
        %1531 = vmatprep.subr.bf16.mxu0 0
        %1532 = vmatpush1.bf16.msra.mxu0 %v785
        %1533 = vmatprep.subr.bf16.mxu0 0
        %1534 = vmatpush1.bf16.msra.mxu0 %v786
        %1535 = vmatprep.subr.bf16.mxu0 0
        %1536 = vmatpush1.bf16.msra.mxu0 %v787
        %1537 = vmatprep.subr.bf16.mxu0 0
        %1538 = vmatpush1.bf16.msra.mxu0 %v788
        %1539 = vmatprep.subr.bf16.mxu0 0
        %1540 = vmatpush1.bf16.msra.mxu0 0
        %1541 = vmatprep.subr.bf16.mxu0 0
        %1542 = vmatpush1.bf16.msra.mxu0 0
        %1543 = vmatprep.subr.bf16.mxu0 0
        %1544 = vmatpush1.bf16.msra.mxu0 0
        %1545 = vmatprep.subr.bf16.mxu0 0
        %1546 = vmatpush1.bf16.msra.mxu0 0
        %1547 = vmatprep.subr.bf16.mxu0 0
        %1548 = vmatpush1.bf16.msra.mxu0 0
        %1549 = vmatprep.subr.bf16.mxu0 0
        %1550 = vmatpush1.bf16.msra.mxu0 0
        %1551 = vmatprep.subr.bf16.mxu0 0
        %1552 = vmatpush1.bf16.msra.mxu0 0
        %1553 = vmatprep.subr.bf16.mxu0 0
        %1554 = vmatpush1.bf16.msra.mxu0 0
        %1555 = vmatprep.mubr.bf16.mxu0 0
        %1556 = vmatmul.mubr.bf16.gmra.mrb[0].mxu0 %v1497
        %v1557 = vpop.f32.mrb[0].mxu0
        %v1558 = vadd.f32 0.0, %v1557
        %v1559 = vpop.f32.mrb[0].mxu0
        %v1560 = vpop.f32.mrb[0].mxu0
        %v1561 = vadd.f32 0.0, %v1560
        %v1562 = vpop.f32.mrb[0].mxu0
        %1563 = vmatprep.mubr.bf16.mxu0 0
        %1564 = vmatmul.mubr.bf16.gmra.mrb[0].mxu0 %v1498
        %v1565 = vpop.f32.mrb[0].mxu0
        %v1566 = vadd.f32 0.0, %v1565
        %v1567 = vpop.f32.mrb[0].mxu0
        %v1568 = vpop.f32.mrb[0].mxu0
        %v1569 = vadd.f32 0.0, %v1568
        %v1570 = vpop.f32.mrb[0].mxu0
        %1571 = vmatprep.mubr.bf16.mxu0 0
        %1572 = vmatmul.mubr.bf16.gmra.mrb[0].mxu0 %v1499
        %v1573 = vpop.f32.mrb[0].mxu0
        %v1574 = vadd.f32 0.0, %v1573
        %v1575 = vpop.f32.mrb[0].mxu0
        %v1576 = vpop.f32.mrb[0].mxu0
        %v1577 = vadd.f32 0.0, %v1576
        %v1578 = vpop.f32.mrb[0].mxu0
        %1579 = vmatprep.mubr.bf16.mxu0 0
        %1580 = vmatmul.mubr.bf16.gmra.mrb[0].mxu0 %v1500
        %v1581 = vpop.f32.mrb[0].mxu0
        %v1582 = vadd.f32 0.0, %v1581
        %v1583 = vpop.f32.mrb[0].mxu0
        %v1584 = vpop.f32.mrb[0].mxu0
        %v1585 = vadd.f32 0.0, %v1584
        %v1586 = vpop.f32.mrb[0].mxu0
        %1587 = vmatprep.mubr.bf16.mxu0 0
        %1588 = vmatmul.mubr.bf16.gmra.mrb[0].mxu0 %v1501
        %v1589 = vpop.f32.mrb[0].mxu0
        %v1590 = vadd.f32 0.0, %v1589
        %v1591 = vpop.f32.mrb[0].mxu0
        %v1592 = vpop.f32.mrb[0].mxu0
        %v1593 = vadd.f32 0.0, %v1592
        %v1594 = vpop.f32.mrb[0].mxu0
        %1595 = vmatprep.mubr.bf16.mxu0 0
        %1596 = vmatmul.mubr.bf16.gmra.mrb[0].mxu0 %v1502
        %v1597 = vpop.f32.mrb[0].mxu0
        %v1598 = vadd.f32 0.0, %v1597
        %v1599 = vpop.f32.mrb[0].mxu0
        %v1600 = vpop.f32.mrb[0].mxu0
        %v1601 = vadd.f32 0.0, %v1600
        %v1602 = vpop.f32.mrb[0].mxu0
        %1603 = vmatprep.mubr.bf16.mxu0 0
        %1604 = vmatmul.mubr.bf16.gmra.mrb[0].mxu0 %v1503
        %v1605 = vpop.f32.mrb[0].mxu0
        %v1606 = vadd.f32 0.0, %v1605
        %v1607 = vpop.f32.mrb[0].mxu0
        %v1608 = vpop.f32.mrb[0].mxu0
        %v1609 = vadd.f32 0.0, %v1608
        %v1610 = vpop.f32.mrb[0].mxu0
        %1611 = vmatprep.mubr.bf16.mxu0 0
        %1612 = vmatmul.mubr.bf16.gmra.mrb[0].mxu0 %v1504
        %v1613 = vpop.f32.mrb[0].mxu0
        %v1614 = vadd.f32 0.0, %v1613
        %v1615 = vpop.f32.mrb[0].mxu0
        %v1616 = vpop.f32.mrb[0].mxu0
        %v1617 = vadd.f32 0.0, %v1616
        %v1618 = vpop.f32.mrb[0].mxu0
        %1619 = vmatprep.mubr.bf16.mxu0 0
        %1620 = vmatmul.mubr.bf16.gmra.mrb[0].mxu0 %v1505
        %v1621 = vpop.f32.mrb[0].mxu0
        %v1622 = vadd.f32 0.0, %v1621
        %v1623 = vpop.f32.mrb[0].mxu0
        %v1624 = vpop.f32.mrb[0].mxu0
        %v1625 = vadd.f32 0.0, %v1624
        %v1626 = vpop.f32.mrb[0].mxu0
        %1627 = vmatprep.mubr.bf16.mxu0 0
        %1628 = vmatmul.mubr.bf16.gmra.mrb[0].mxu0 %v1506
        %v1629 = vpop.f32.mrb[0].mxu0
        %v1630 = vadd.f32 0.0, %v1629
        %v1631 = vpop.f32.mrb[0].mxu0
        %v1632 = vpop.f32.mrb[0].mxu0
        %v1633 = vadd.f32 0.0, %v1632
        %v1634 = vpop.f32.mrb[0].mxu0
        %1635 = vmatprep.mubr.bf16.mxu0 0
        %1636 = vmatmul.mubr.bf16.gmra.mrb[0].mxu0 %v1507
        %v1637 = vpop.f32.mrb[0].mxu0
        %v1638 = vadd.f32 0.0, %v1637
        %v1639 = vpop.f32.mrb[0].mxu0
        %v1640 = vpop.f32.mrb[0].mxu0
        %v1641 = vadd.f32 0.0, %v1640
        %v1642 = vpop.f32.mrb[0].mxu0
        %1643 = vmatprep.mubr.bf16.mxu0 0
        %1644 = vmatmul.mubr.bf16.gmra.mrb[0].mxu0 %v1508
        %v1645 = vpop.f32.mrb[0].mxu0
        %v1646 = vadd.f32 0.0, %v1645
        %v1647 = vpop.f32.mrb[0].mxu0
        %v1648 = vpop.f32.mrb[0].mxu0
        %v1649 = vadd.f32 0.0, %v1648
        %v1650 = vpop.f32.mrb[0].mxu0
        %1651 = vmatprep.mubr.bf16.mxu0 0
        %1652 = vmatmul.mubr.bf16.gmra.mrb[0].mxu0 %v1509
        %v1653 = vpop.f32.mrb[0].mxu0
        %v1654 = vadd.f32 0.0, %v1653
        %v1655 = vpop.f32.mrb[0].mxu0
        %v1656 = vpop.f32.mrb[0].mxu0
        %v1657 = vadd.f32 0.0, %v1656
        %v1658 = vpop.f32.mrb[0].mxu0
        %1659 = vdwg.mxu0
        %v1660 = vmax.f32 %v832, %v1074
        %v1661 = vmax.f32 %v835, %v1077
        %v1662 = vmax.f32 %v840, %v1082
        %v1663 = vmax.f32 %v843, %v1085
        %v1664 = vmax.f32 %v848, %v1090
        %v1665 = vmax.f32 %v851, %v1093
        %v1666 = vmax.f32 %v856, %v1098
        %v1667 = vmax.f32 %v859, %v1101
        %v1668 = vmax.f32 %v864, %v1106
        %v1669 = vmax.f32 %v867, %v1109
        %v1670 = vmax.f32 %v872, %v1114
        %v1671 = vmax.f32 %v875, %v1117
        %v1672 = vmax.f32 %v880, %v1122
        %v1673 = vmax.f32 %v883, %v1125
        %v1674 = vmax.f32 %v888, %v1130
        %v1675 = vmax.f32 %v891, %v1133
        %v1676 = vmax.f32 %v896, %v1138
        %v1677 = vmax.f32 %v899, %v1141
        %v1678 = vmax.f32 %v904, %v1146
        %v1679 = vmax.f32 %v907, %v1149
        %v1680 = vmax.f32 %v912, %v1154
        %v1681 = vmax.f32 %v915, %v1157
        %v1682 = vmax.f32 %v920, %v1162
        %v1683 = vmax.f32 %v923, %v1165
        %v1684 = vmax.f32 %v928, %v1170
        %v1685 = vmax.f32 %v931, %v1173
        %v1686 = vmax.f32 %v1316, %v1558
        %v1687 = vmax.f32 %v1319, %v1561
        %v1688 = vmax.f32 %v1324, %v1566
        %v1689 = vmax.f32 %v1327, %v1569
        %v1690 = vmax.f32 %v1332, %v1574
        %v1691 = vmax.f32 %v1335, %v1577
        %v1692 = vmax.f32 %v1340, %v1582
        %v1693 = vmax.f32 %v1343, %v1585
        %v1694 = vmax.f32 %v1348, %v1590
        %v1695 = vmax.f32 %v1351, %v1593
        %v1696 = vmax.f32 %v1356, %v1598
        %v1697 = vmax.f32 %v1359, %v1601
        %v1698 = vmax.f32 %v1364, %v1606
        %v1699 = vmax.f32 %v1367, %v1609
        %v1700 = vmax.f32 %v1372, %v1614
        %v1701 = vmax.f32 %v1375, %v1617
        %v1702 = vmax.f32 %v1380, %v1622
        %v1703 = vmax.f32 %v1383, %v1625
        %v1704 = vmax.f32 %v1388, %v1630
        %v1705 = vmax.f32 %v1391, %v1633
        %v1706 = vmax.f32 %v1396, %v1638
        %v1707 = vmax.f32 %v1399, %v1641
        %v1708 = vmax.f32 %v1404, %v1646
        %v1709 = vmax.f32 %v1407, %v1649
        %v1710 = vmax.f32 %v1412, %v1654
        %v1711 = vmax.f32 %v1415, %v1657
        %v1712 = vmax.f32 %v1660, %v1686
        %v1713 = vmax.f32 %v1661, %v1687
        %v1714 = vmax.f32 %v1662, %v1688
        %v1715 = vmax.f32 %v1663, %v1689
        %v1716 = vmax.f32 %v1664, %v1690
        %v1717 = vmax.f32 %v1665, %v1691
        %v1718 = vmax.f32 %v1666, %v1692
        %v1719 = vmax.f32 %v1667, %v1693
        %v1720 = vmax.f32 %v1668, %v1694
        %v1721 = vmax.f32 %v1669, %v1695
        %v1722 = vmax.f32 %v1670, %v1696
        %v1723 = vmax.f32 %v1671, %v1697
        %v1724 = vmax.f32 %v1672, %v1698
        %v1725 = vmax.f32 %v1673, %v1699
        %v1726 = vmax.f32 %v1674, %v1700
        %v1727 = vmax.f32 %v1675, %v1701
        %v1728 = vmax.f32 %v1676, %v1702
        %v1729 = vmax.f32 %v1677, %v1703
        %v1730 = vmax.f32 %v1678, %v1704
        %v1731 = vmax.f32 %v1679, %v1705
        %v1732 = vmax.f32 %v1680, %v1706
        %v1733 = vmax.f32 %v1681, %v1707
        %v1734 = vmax.f32 %v1682, %v1708
        %v1735 = vmax.f32 %v1683, %v1709
        %v1736 = vmax.f32 %v1684, %v1710
        %v1737 = vmax.f32 %v1685, %v1711
        %v1739 = vlaneseq
        %v1740 = vshrl.u32 %v1739, 7
        %v1741 = vsub.s32 0, %v1740
        %v1742 = vrot.slane %v644, %v1741
        %v1744 = vadd.f32 %v1712, %v1742
        %v1745 = vadd.f32 %v1713, %v1742
        %v1746 = vadd.f32 %v1714, %v1742
        %v1747 = vadd.f32 %v1715, %v1742
        %v1748 = vadd.f32 %v1716, %v1742
        %v1749 = vadd.f32 %v1717, %v1742
        %v1750 = vadd.f32 %v1718, %v1742
        %v1751 = vadd.f32 %v1719, %v1742
        %v1752 = vadd.f32 %v1720, %v1742
        %v1753 = vadd.f32 %v1721, %v1742
        %v1754 = vadd.f32 %v1722, %v1742
        %v1755 = vadd.f32 %v1723, %v1742
        %v1756 = vadd.f32 %v1724, %v1742
        %v1757 = vadd.f32 %v1725, %v1742
        %v1758 = vadd.f32 %v1726, %v1742
        %v1759 = vadd.f32 %v1727, %v1742
        %v1760 = vadd.f32 %v1728, %v1742
        %v1761 = vadd.f32 %v1729, %v1742
        %v1762 = vadd.f32 %v1730, %v1742
        %v1763 = vadd.f32 %v1731, %v1742
        %v1764 = vadd.f32 %v1732, %v1742
        %v1765 = vadd.f32 %v1733, %v1742
        %v1766 = vadd.f32 %v1734, %v1742
        %v1767 = vadd.f32 %v1735, %v1742
        %v1768 = vadd.f32 %v1736, %v1742
        %v1769 = vadd.f32 %v1737, %v1742
        %v1770 = vmax.f32 %v1744, 0.0
        %v1771 = vmax.f32 %v1745, 0.0
        %v1772 = vmax.f32 %v1746, 0.0
        %v1773 = vmax.f32 %v1747, 0.0
        %v1774 = vmax.f32 %v1748, 0.0
        %v1775 = vmax.f32 %v1749, 0.0
        %v1776 = vmax.f32 %v1750, 0.0
        %v1777 = vmax.f32 %v1751, 0.0
        %v1778 = vmax.f32 %v1752, 0.0
        %v1779 = vmax.f32 %v1753, 0.0
        %v1780 = vmax.f32 %v1754, 0.0
        %v1781 = vmax.f32 %v1755, 0.0
        %v1782 = vmax.f32 %v1756, 0.0
        %v1783 = vmax.f32 %v1757, 0.0
        %v1784 = vmax.f32 %v1758, 0.0
        %v1785 = vmax.f32 %v1759, 0.0
        %v1786 = vmax.f32 %v1760, 0.0
        %v1787 = vmax.f32 %v1761, 0.0
        %v1788 = vmax.f32 %v1762, 0.0
        %v1789 = vmax.f32 %v1763, 0.0
        %v1790 = vmax.f32 %v1764, 0.0
        %v1791 = vmax.f32 %v1765, 0.0
        %v1792 = vmax.f32 %v1766, 0.0
        %v1793 = vmax.f32 %v1767, 0.0
        %v1794 = vmax.f32 %v1768, 0.0
        %v1795 = vmax.f32 %v1769, 0.0
        %v1796 = vpack.c.bf16 %v1771, %v1770
        %v1797 = vpack.c.bf16 %v1773, %v1772
        %v1798 = vpack.c.bf16 %v1775, %v1774
        %v1799 = vpack.c.bf16 %v1777, %v1776
        %v1800 = vpack.c.bf16 %v1779, %v1778
        %v1801 = vpack.c.bf16 %v1781, %v1780
        %v1802 = vpack.c.bf16 %v1783, %v1782
        %v1803 = vpack.c.bf16 %v1785, %v1784
        %v1804 = vpack.c.bf16 %v1787, %v1786
        %v1805 = vpack.c.bf16 %v1789, %v1788
        %v1806 = vpack.c.bf16 %v1791, %v1790
        %v1807 = vpack.c.bf16 %v1793, %v1792
        %v1808 = vpack.c.bf16 %v1795, %v1794
        %v1822 = vunpack.c.l.b16 %v1796
        %v1823 = vunpack.c.h.b16 %v1796
        %v1824 = vunpack.c.l.b16 %v1797
        %v1825 = vunpack.c.h.b16 %v1797
        %v1826 = vunpack.c.l.b16 %v1798
        %v1827 = vunpack.c.h.b16 %v1798
        %v1828 = vunpack.c.l.b16 %v1799
        %v1829 = vunpack.c.h.b16 %v1799
        %v1830 = vunpack.c.l.b16 %v1800
        %v1831 = vunpack.c.h.b16 %v1800
        %v1832 = vunpack.c.l.b16 %v1801
        %v1833 = vunpack.c.h.b16 %v1801
        %v1834 = vunpack.c.l.b16 %v1802
        %v1835 = vunpack.c.h.b16 %v1802
        %v1836 = vunpack.c.l.b16 %v1803
        %v1837 = vunpack.c.h.b16 %v1803
        %v1838 = vunpack.c.l.b16 %v1804
        %v1839 = vunpack.c.h.b16 %v1804
        %v1840 = vunpack.c.l.b16 %v1805
        %v1841 = vunpack.c.h.b16 %v1805
        %v1842 = vunpack.c.l.b16 %v1806
        %v1843 = vunpack.c.h.b16 %v1806
        %v1844 = vunpack.c.l.b16 %v1807
        %v1845 = vunpack.c.h.b16 %v1807
        %v1846 = vunpack.c.l.b16 %v1808
        %v1847 = vunpack.c.h.b16 %v1808
        %v1848 = vpack.c.b16 %v1822, %v1822
        %v1849 = vpack.c.b16 %v1823, %v1823
        %v1850 = vpack.c.b16 %v1824, %v1824
        %v1851 = vpack.c.b16 %v1825, %v1825
        %v1852 = vpack.c.b16 %v1826, %v1826
        %v1853 = vpack.c.b16 %v1827, %v1827
        %v1854 = vpack.c.b16 %v1828, %v1828
        %v1855 = vpack.c.b16 %v1829, %v1829
        %v1856 = vpack.c.b16 %v1830, %v1830
        %v1857 = vpack.c.b16 %v1831, %v1831
        %v1858 = vpack.c.b16 %v1832, %v1832
        %v1859 = vpack.c.b16 %v1833, %v1833
        %v1860 = vpack.c.b16 %v1834, %v1834
        %v1861 = vpack.c.b16 %v1835, %v1835
        %v1862 = vpack.c.b16 %v1836, %v1836
        %v1863 = vpack.c.b16 %v1837, %v1837
        %v1864 = vpack.c.b16 %v1838, %v1838
        %v1865 = vpack.c.b16 %v1839, %v1839
        %v1866 = vpack.c.b16 %v1840, %v1840
        %v1867 = vpack.c.b16 %v1841, %v1841
        %v1868 = vpack.c.b16 %v1842, %v1842
        %v1869 = vpack.c.b16 %v1843, %v1843
        %v1870 = vpack.c.b16 %v1844, %v1844
        %v1871 = vpack.c.b16 %v1845, %v1845
        %v1872 = vpack.c.b16 %v1846, %v1846
        %v1873 = vpack.c.b16 %v1847, %v1847
        %1900 = vst [vmem:[%s625] sm:$0xf] %v1848
        %1901 = vst [vmem:[%s625 + $0x4] sm:$0xf] %v1849
        %1902 = vst [vmem:[%s625 + $0x8] sm:$0xf] %v1850
        %1903 = vst [vmem:[%s625 + $0xc] sm:$0xf] %v1851
        %1904 = vst [vmem:[%s625 + $0x10] sm:$0xf] %v1852
        %1905 = vst [vmem:[%s625 + $0x14] sm:$0xf] %v1853
        %1906 = vst [vmem:[%s625 + $0x18] sm:$0xf] %v1854
        %1907 = vst [vmem:[%s625 + $0x1c] sm:$0xf] %v1855
        %1908 = vst [vmem:[%s625 + $0x20] sm:$0xf] %v1856
        %1909 = vst [vmem:[%s625 + $0x24] sm:$0xf] %v1857
        %1910 = vst [vmem:[%s625 + $0x28] sm:$0xf] %v1858
        %1911 = vst [vmem:[%s625 + $0x2c] sm:$0xf] %v1859
        %1912 = vst [vmem:[%s625 + $0x30] sm:$0xf] %v1860
        %1913 = vst [vmem:[%s625 + $0x34] sm:$0xf] %v1861
        %1914 = vst [vmem:[%s625 + $0x38] sm:$0xf] %v1862
        %1915 = vst [vmem:[%s625 + $0x3c] sm:$0xf] %v1863
        %1916 = vst [vmem:[%s625 + $0x40] sm:$0xf] %v1864
        %1917 = vst [vmem:[%s625 + $0x44] sm:$0xf] %v1865
        %1918 = vst [vmem:[%s625 + $0x48] sm:$0xf] %v1866
        %1919 = vst [vmem:[%s625 + $0x4c] sm:$0xf] %v1867
        %1920 = vst [vmem:[%s625 + $0x50] sm:$0xf] %v1868
        %1921 = vst [vmem:[%s625 + $0x54] sm:$0xf] %v1869
        %1922 = vst [vmem:[%s625 + $0x58] sm:$0xf] %v1870
        %1923 = vst [vmem:[%s625 + $0x5c] sm:$0xf] %v1871
        %1924 = vst [vmem:[%s625 + $0x60] sm:$0xf] %v1872
        %1925 = vst [vmem:[%s625 + $0x64] sm:$0xf] %v1873
        %s1926 = smul.u32 26, %s14
        %p1927 = scmp.lt.s32.totalorder %s1926, 51
        %s1928 = scalar_select %p1927, %s1926, 51
        %s1929 = smul.addr %s1928, 4
        %s1930 = scalar_lea.vmem %s3, %s1929
        // Predicated region
        $region74: #{follower_cifar_forward.3} parent=68 // pred_check
          %p1931 = pneg %p100
        $region75: #{follower_cifar_forward.3} parent=68 // pred_check_branch
          %1933 = sbr.rel (%p1931) target = $region77
        $region76: #{follower_cifar_forward.3} parent=68 // pred_region
          %s1934 = smul.u32 26, %s14
        $region77: #{follower_cifar_forward.3} parent=68 // pred_fallthru
          _
      $region69: #{follower_cifar_forward.3} parent=5 // pred_fallthru
        _
      %p1935 = scmp.le.s32.totalorder 2, %s9
      // Predicated region
      $region78: #{follower_cifar_forward.3} parent=5 // pred_check
        %p1936 = pneg %p1935
      $region79: #{follower_cifar_forward.3} parent=5 // pred_check_branch
        %1938 = sbr.rel (%p1936) target = $region81
      $region80: #{follower_cifar_forward.3} parent=5 // pred_region
        %s1939 = ssub.s32 %s9, 2
        // Predicated region
        $region82: #{follower_cifar_forward.3} parent=80 // pred_check
          %p1940 = pneg %p106
        $region83: #{follower_cifar_forward.3} parent=80 // pred_check_branch
          %1942 = sbr.rel (%p1940) target = $region85
        $region84: #{follower_cifar_forward.3} parent=80 // pred_region
          %s1943 = smul.u32 26, %s15
          %p1944 = scmp.lt.s32.totalorder %s1943, 51
          %s1945 = scalar_select %p1944, %s1943, 51
          %s1946 = smul.addr %s1945, 4
          %s1947 = scalar_lea.vmem %s3, %s1946
        $region85: #{follower_cifar_forward.3} parent=80 // pred_fallthru
          _
      $region81: #{follower_cifar_forward.3} parent=5 // pred_fallthru
        _
    $region6: #{follower_cifar_forward.3} parent=1 // loop_footer
      %s13 = sadd.s32 1, %s9
    $region7: #{follower_cifar_forward.3} parent=1 // loop_footer_branch
      %8 = sbr.rel target = $region3
    $region8: #{follower_cifar_forward.3} parent=1 // loop_exit
      _

// kernel: follower_cifar_forward.4
$region0: #{follower_cifar_forward.4}
  #allocation0 [shape = 'u32[]', space=smem, size = 0x4, offset = 0x4, fixed_abs, tag = 'smem constant byte address 0x4 - core index']
  #allocation1 [shape = 'u32[144,128]{1,0:T(1,128)}', space=vmem, size = 0x12000, scoped, tag = 'internal scratch']
  %s0 = inlined_call_operand.vmem [shape: bf16[4,64,256], index: 0, kind: input, shape index: {}]
  %s1 = inlined_call_operand.vmem [shape: bf16[256,128], index: 1, kind: input, shape index: {}]
  %s2 = inlined_call_operand.vmem [shape: f32[1,128], index: 2, kind: input, shape index: {}]
  %s3 = inlined_call_operand.vmem [shape: bf16[64,128], index: 3, kind: output, shape index: {}]
  %s4 = sld [smem:[#allocation0]]
  $region22: #{follower_cifar_forward.4} parent=0
    _
  %s6 = ssub.s32 1, %s4
  %s7 = scalar_select 0, %s6, %s4
  // Predicated region
  $region2: #{follower_cifar_forward.4} parent=0 // pred_check
    _
  $region3: #{follower_cifar_forward.4} parent=0 // pred_check_branch
    %9 = sbr.rel (0) target = $region5
  $region4: #{follower_cifar_forward.4} parent=0 // pred_region
    _
  $region5: #{follower_cifar_forward.4} parent=0 // pred_fallthru
    _
  // Predicated region
  $region6: #{follower_cifar_forward.4} parent=0 // pred_check
    _
  $region7: #{follower_cifar_forward.4} parent=0 // pred_check_branch
    %11 = sbr.rel (0) target = $region9
  $region8: #{follower_cifar_forward.4} parent=0 // pred_region
    _
  $region9: #{follower_cifar_forward.4} parent=0 // pred_fallthru
    _
  // Predicated region
  $region10: #{follower_cifar_forward.4} parent=0 // pred_check
    _
  $region11: #{follower_cifar_forward.4} parent=0 // pred_check_branch
    %13 = sbr.rel (0) target = $region13
  $region12: #{follower_cifar_forward.4} parent=0 // pred_region
    _
  $region13: #{follower_cifar_forward.4} parent=0 // pred_fallthru
    _
  %v15 = vld [vmem:[%s1] sm:$0xf]
  %v16 = vld [vmem:[%s1 + $0x4] sm:$0xf]
  %v17 = vld [vmem:[%s1 + $0x8] sm:$0xf]
  %v18 = vld [vmem:[%s1 + $0xc] sm:$0xf]
  %v19 = vld [vmem:[%s1 + $0x10] sm:$0xf]
  %v20 = vld [vmem:[%s1 + $0x14] sm:$0xf]
  %v21 = vld [vmem:[%s1 + $0x18] sm:$0xf]
  %v22 = vld [vmem:[%s1 + $0x1c] sm:$0xf]
  %v23 = vld [vmem:[%s1 + $0x20] sm:$0xf]
  %v24 = vld [vmem:[%s1 + $0x24] sm:$0xf]
  %v25 = vld [vmem:[%s1 + $0x28] sm:$0xf]
  %v26 = vld [vmem:[%s1 + $0x2c] sm:$0xf]
  %v27 = vld [vmem:[%s1 + $0x30] sm:$0xf]
  %v28 = vld [vmem:[%s1 + $0x34] sm:$0xf]
  %v29 = vld [vmem:[%s1 + $0x38] sm:$0xf]
  %v30 = vld [vmem:[%s1 + $0x3c] sm:$0xf]
  %v31 = vld [vmem:[%s1 + $0x40] sm:$0xf]
  %v32 = vld [vmem:[%s1 + $0x44] sm:$0xf]
  %v33 = vld [vmem:[%s1 + $0x48] sm:$0xf]
  %v34 = vld [vmem:[%s1 + $0x4c] sm:$0xf]
  %v35 = vld [vmem:[%s1 + $0x50] sm:$0xf]
  %v36 = vld [vmem:[%s1 + $0x54] sm:$0xf]
  %v37 = vld [vmem:[%s1 + $0x58] sm:$0xf]
  %v38 = vld [vmem:[%s1 + $0x5c] sm:$0xf]
  %v39 = vld [vmem:[%s1 + $0x60] sm:$0xf]
  %v40 = vld [vmem:[%s1 + $0x64] sm:$0xf]
  %v41 = vld [vmem:[%s1 + $0x68] sm:$0xf]
  %v42 = vld [vmem:[%s1 + $0x6c] sm:$0xf]
  %v43 = vld [vmem:[%s1 + $0x70] sm:$0xf]
  %v44 = vld [vmem:[%s1 + $0x74] sm:$0xf]
  %v45 = vld [vmem:[%s1 + $0x78] sm:$0xf]
  %v46 = vld [vmem:[%s1 + $0x7c] sm:$0xf]
  %v47 = vld [vmem:[%s2] sm:$0x1]
  %v48 = vld [vmem:[%s0] sm:$0xff]
  %v49 = vld [vmem:[%s0 + $0x8] sm:$0xff]
  %v50 = vld [vmem:[%s0 + $0x10] sm:$0xff]
  %v51 = vld [vmem:[%s0 + $0x18] sm:$0xff]
  %v52 = vld [vmem:[%s0 + $0x20] sm:$0xff]
  %v53 = vld [vmem:[%s0 + $0x28] sm:$0xff]
  %v54 = vld [vmem:[%s0 + $0x30] sm:$0xff]
  %v55 = vld [vmem:[%s0 + $0x38] sm:$0xff]
  %v64 = vunpack.c.l.b16 %v48
  %v65 = vunpack.c.h.b16 %v48
  %v66 = vunpack.c.l.b16 %v49
  %v67 = vunpack.c.h.b16 %v49
  %v68 = vunpack.c.l.b16 %v50
  %v69 = vunpack.c.h.b16 %v50
  %v70 = vunpack.c.l.b16 %v51
  %v71 = vunpack.c.h.b16 %v51
  %v72 = vunpack.c.l.b16 %v52
  %v73 = vunpack.c.h.b16 %v52
  %v74 = vunpack.c.l.b16 %v53
  %v75 = vunpack.c.h.b16 %v53
  %v76 = vunpack.c.l.b16 %v54
  %v77 = vunpack.c.h.b16 %v54
  %v78 = vunpack.c.l.b16 %v55
  %v79 = vunpack.c.h.b16 %v55
  %v80 = vpack.c.b16 %v66, %v64
  %v81 = vpack.c.b16 %v67, %v65
  %v82 = vpack.c.b16 %v70, %v68
  %v83 = vpack.c.b16 %v71, %v69
  %v84 = vpack.c.b16 %v74, %v72
  %v85 = vpack.c.b16 %v75, %v73
  %v86 = vpack.c.b16 %v78, %v76
  %v87 = vpack.c.b16 %v79, %v77
  %v128 = vunpack.c.l.b16 %v15
  %v129 = vunpack.c.l.b16 %v16
  %v130 = vunpack.c.l.b16 %v17
  %v131 = vunpack.c.l.b16 %v18
  %v132 = vunpack.c.l.b16 %v19
  %v133 = vunpack.c.l.b16 %v20
  %v134 = vunpack.c.l.b16 %v21
  %v135 = vunpack.c.l.b16 %v22
  %v136 = vunpack.c.l.b16 %v23
  %v137 = vunpack.c.l.b16 %v24
  %v138 = vunpack.c.l.b16 %v25
  %v139 = vunpack.c.l.b16 %v26
  %v140 = vunpack.c.l.b16 %v27
  %v141 = vunpack.c.l.b16 %v28
  %v142 = vunpack.c.l.b16 %v29
  %v143 = vunpack.c.l.b16 %v30
  %v144 = vunpack.c.l.b16 %v31
  %v145 = vunpack.c.l.b16 %v32
  %v146 = vunpack.c.l.b16 %v33
  %v147 = vunpack.c.l.b16 %v34
  %v148 = vunpack.c.l.b16 %v35
  %v149 = vunpack.c.l.b16 %v36
  %v150 = vunpack.c.l.b16 %v37
  %v151 = vunpack.c.l.b16 %v38
  %v152 = vunpack.c.l.b16 %v39
  %v153 = vunpack.c.l.b16 %v40
  %v154 = vunpack.c.l.b16 %v41
  %v155 = vunpack.c.l.b16 %v42
  %v156 = vunpack.c.l.b16 %v43
  %v157 = vunpack.c.l.b16 %v44
  %v158 = vunpack.c.l.b16 %v45
  %v159 = vunpack.c.l.b16 %v46
  %v160 = vpack.c.b16 %v129, %v128
  %v161 = vpack.c.b16 %v131, %v130
  %v162 = vpack.c.b16 %v133, %v132
  %v163 = vpack.c.b16 %v135, %v134
  %v164 = vpack.c.b16 %v137, %v136
  %v165 = vpack.c.b16 %v139, %v138
  %v166 = vpack.c.b16 %v141, %v140
  %v167 = vpack.c.b16 %v143, %v142
  %v168 = vpack.c.b16 %v145, %v144
  %v169 = vpack.c.b16 %v147, %v146
  %v170 = vpack.c.b16 %v149, %v148
  %v171 = vpack.c.b16 %v151, %v150
  %v172 = vpack.c.b16 %v153, %v152
  %v173 = vpack.c.b16 %v155, %v154
  %v174 = vpack.c.b16 %v157, %v156
  %v175 = vpack.c.b16 %v159, %v158
  %192 = vmatprep.subr.bf16.mxu0 0
  %193 = vmatpush1.bf16.msra.mxu0 %v160
  %194 = vmatprep.subr.bf16.mxu0 0
  %195 = vmatpush1.bf16.msra.mxu0 %v161
  %196 = vmatprep.subr.bf16.mxu0 0
  %197 = vmatpush1.bf16.msra.mxu0 %v162
  %198 = vmatprep.subr.bf16.mxu0 0
  %199 = vmatpush1.bf16.msra.mxu0 %v163
  %200 = vmatprep.subr.bf16.mxu0 0
  %201 = vmatpush1.bf16.msra.mxu0 %v164
  %202 = vmatprep.subr.bf16.mxu0 0
  %203 = vmatpush1.bf16.msra.mxu0 %v165
  %204 = vmatprep.subr.bf16.mxu0 0
  %205 = vmatpush1.bf16.msra.mxu0 %v166
  %206 = vmatprep.subr.bf16.mxu0 0
  %207 = vmatpush1.bf16.msra.mxu0 %v167
  %208 = vmatprep.subr.bf16.mxu0 0
  %209 = vmatpush1.bf16.msra.mxu0 %v168
  %210 = vmatprep.subr.bf16.mxu0 0
  %211 = vmatpush1.bf16.msra.mxu0 %v169
  %212 = vmatprep.subr.bf16.mxu0 0
  %213 = vmatpush1.bf16.msra.mxu0 %v170
  %214 = vmatprep.subr.bf16.mxu0 0
  %215 = vmatpush1.bf16.msra.mxu0 %v171
  %216 = vmatprep.subr.bf16.mxu0 0
  %217 = vmatpush1.bf16.msra.mxu0 %v172
  %218 = vmatprep.subr.bf16.mxu0 0
  %219 = vmatpush1.bf16.msra.mxu0 %v173
  %220 = vmatprep.subr.bf16.mxu0 0
  %221 = vmatpush1.bf16.msra.mxu0 %v174
  %222 = vmatprep.subr.bf16.mxu0 0
  %223 = vmatpush1.bf16.msra.mxu0 %v175
  %224 = vmatprep.mubr.bf16.mxu0 %v81
  %225 = vmatmul.mubr.bf16.gmra.mrb[0].mxu0 %v80
  %v226 = vpop.f32.mrb[0].mxu0
  %v227 = vadd.f32 0.0, %v226
  %v228 = vpop.f32.mrb[0].mxu0
  %v229 = vpop.f32.mrb[0].mxu0
  %v230 = vadd.f32 0.0, %v229
  %v231 = vpop.f32.mrb[0].mxu0
  %232 = vmatprep.mubr.bf16.mxu0 %v83
  %233 = vmatmul.mubr.bf16.gmra.mrb[0].mxu0 %v82
  %v234 = vpop.f32.mrb[0].mxu0
  %v235 = vadd.f32 0.0, %v234
  %v236 = vpop.f32.mrb[0].mxu0
  %v237 = vpop.f32.mrb[0].mxu0
  %v238 = vadd.f32 0.0, %v237
  %v239 = vpop.f32.mrb[0].mxu0
  %240 = vmatprep.mubr.bf16.mxu0 %v85
  %241 = vmatmul.mubr.bf16.gmra.mrb[0].mxu0 %v84
  %v242 = vpop.f32.mrb[0].mxu0
  %v243 = vadd.f32 0.0, %v242
  %v244 = vpop.f32.mrb[0].mxu0
  %v245 = vpop.f32.mrb[0].mxu0
  %v246 = vadd.f32 0.0, %v245
  %v247 = vpop.f32.mrb[0].mxu0
  %248 = vmatprep.mubr.bf16.mxu0 %v87
  %249 = vmatmul.mubr.bf16.gmra.mrb[0].mxu0 %v86
  %v250 = vpop.f32.mrb[0].mxu0
  %v251 = vadd.f32 0.0, %v250
  %v252 = vpop.f32.mrb[0].mxu0
  %v253 = vpop.f32.mrb[0].mxu0
  %v254 = vadd.f32 0.0, %v253
  %v255 = vpop.f32.mrb[0].mxu0
  %256 = vdwg.mxu0
  %s257 = scalar_lea.vmem %s0, 64
  %v258 = vld [vmem:[%s257] sm:$0xff]
  %v259 = vld [vmem:[%s257 + $0x8] sm:$0xff]
  %v260 = vld [vmem:[%s257 + $0x10] sm:$0xff]
  %v261 = vld [vmem:[%s257 + $0x18] sm:$0xff]
  %v262 = vld [vmem:[%s257 + $0x20] sm:$0xff]
  %v263 = vld [vmem:[%s257 + $0x28] sm:$0xff]
  %v264 = vld [vmem:[%s257 + $0x30] sm:$0xff]
  %v265 = vld [vmem:[%s257 + $0x38] sm:$0xff]
  %v274 = vunpack.c.l.b16 %v258
  %v275 = vunpack.c.h.b16 %v258
  %v276 = vunpack.c.l.b16 %v259
  %v277 = vunpack.c.h.b16 %v259
  %v278 = vunpack.c.l.b16 %v260
  %v279 = vunpack.c.h.b16 %v260
  %v280 = vunpack.c.l.b16 %v261
  %v281 = vunpack.c.h.b16 %v261
  %v282 = vunpack.c.l.b16 %v262
  %v283 = vunpack.c.h.b16 %v262
  %v284 = vunpack.c.l.b16 %v263
  %v285 = vunpack.c.h.b16 %v263
  %v286 = vunpack.c.l.b16 %v264
  %v287 = vunpack.c.h.b16 %v264
  %v288 = vunpack.c.l.b16 %v265
  %v289 = vunpack.c.h.b16 %v265
  %v290 = vpack.c.b16 %v276, %v274
  %v291 = vpack.c.b16 %v277, %v275
  %v292 = vpack.c.b16 %v280, %v278
  %v293 = vpack.c.b16 %v281, %v279
  %v294 = vpack.c.b16 %v284, %v282
  %v295 = vpack.c.b16 %v285, %v283
  %v296 = vpack.c.b16 %v288, %v286
  %v297 = vpack.c.b16 %v289, %v287
  %306 = vmatprep.subr.bf16.mxu0 0
  %307 = vmatpush1.bf16.msra.mxu0 %v160
  %308 = vmatprep.subr.bf16.mxu0 0
  %309 = vmatpush1.bf16.msra.mxu0 %v161
  %310 = vmatprep.subr.bf16.mxu0 0
  %311 = vmatpush1.bf16.msra.mxu0 %v162
  %312 = vmatprep.subr.bf16.mxu0 0
  %313 = vmatpush1.bf16.msra.mxu0 %v163
  %314 = vmatprep.subr.bf16.mxu0 0
  %315 = vmatpush1.bf16.msra.mxu0 %v164
  %316 = vmatprep.subr.bf16.mxu0 0
  %317 = vmatpush1.bf16.msra.mxu0 %v165
  %318 = vmatprep.subr.bf16.mxu0 0
  %319 = vmatpush1.bf16.msra.mxu0 %v166
  %320 = vmatprep.subr.bf16.mxu0 0
  %321 = vmatpush1.bf16.msra.mxu0 %v167
  %322 = vmatprep.subr.bf16.mxu0 0
  %323 = vmatpush1.bf16.msra.mxu0 %v168
  %324 = vmatprep.subr.bf16.mxu0 0
  %325 = vmatpush1.bf16.msra.mxu0 %v169
  %326 = vmatprep.subr.bf16.mxu0 0
  %327 = vmatpush1.bf16.msra.mxu0 %v170
  %328 = vmatprep.subr.bf16.mxu0 0
  %329 = vmatpush1.bf16.msra.mxu0 %v171
  %330 = vmatprep.subr.bf16.mxu0 0
  %331 = vmatpush1.bf16.msra.mxu0 %v172
  %332 = vmatprep.subr.bf16.mxu0 0
  %333 = vmatpush1.bf16.msra.mxu0 %v173
  %334 = vmatprep.subr.bf16.mxu0 0
  %335 = vmatpush1.bf16.msra.mxu0 %v174
  %336 = vmatprep.subr.bf16.mxu0 0
  %337 = vmatpush1.bf16.msra.mxu0 %v175
  %338 = vmatprep.mubr.bf16.mxu0 %v291
  %339 = vmatmul.mubr.bf16.gmra.mrb[0].mxu0 %v290
  %v340 = vpop.f32.mrb[0].mxu0
  %v341 = vadd.f32 0.0, %v340
  %v342 = vpop.f32.mrb[0].mxu0
  %v343 = vpop.f32.mrb[0].mxu0
  %v344 = vadd.f32 0.0, %v343
  %v345 = vpop.f32.mrb[0].mxu0
  %346 = vmatprep.mubr.bf16.mxu0 %v293
  %347 = vmatmul.mubr.bf16.gmra.mrb[0].mxu0 %v292
  %v348 = vpop.f32.mrb[0].mxu0
  %v349 = vadd.f32 0.0, %v348
  %v350 = vpop.f32.mrb[0].mxu0
  %v351 = vpop.f32.mrb[0].mxu0
  %v352 = vadd.f32 0.0, %v351
  %v353 = vpop.f32.mrb[0].mxu0
  %354 = vmatprep.mubr.bf16.mxu0 %v295
  %355 = vmatmul.mubr.bf16.gmra.mrb[0].mxu0 %v294
  %v356 = vpop.f32.mrb[0].mxu0
  %v357 = vadd.f32 0.0, %v356
  %v358 = vpop.f32.mrb[0].mxu0
  %v359 = vpop.f32.mrb[0].mxu0
  %v360 = vadd.f32 0.0, %v359
  %v361 = vpop.f32.mrb[0].mxu0
  %362 = vmatprep.mubr.bf16.mxu0 %v297
  %363 = vmatmul.mubr.bf16.gmra.mrb[0].mxu0 %v296
  %v364 = vpop.f32.mrb[0].mxu0
  %v365 = vadd.f32 0.0, %v364
  %v366 = vpop.f32.mrb[0].mxu0
  %v367 = vpop.f32.mrb[0].mxu0
  %v368 = vadd.f32 0.0, %v367
  %v369 = vpop.f32.mrb[0].mxu0
  %370 = vdwg.mxu0
  %s371 = scalar_lea.vmem %s0, 128
  %v372 = vld [vmem:[%s371] sm:$0xff]
  %v373 = vld [vmem:[%s371 + $0x8] sm:$0xff]
  %v374 = vld [vmem:[%s371 + $0x10] sm:$0xff]
  %v375 = vld [vmem:[%s371 + $0x18] sm:$0xff]
  %v376 = vld [vmem:[%s371 + $0x20] sm:$0xff]
  %v377 = vld [vmem:[%s371 + $0x28] sm:$0xff]
  %v378 = vld [vmem:[%s371 + $0x30] sm:$0xff]
  %v379 = vld [vmem:[%s371 + $0x38] sm:$0xff]
  %v388 = vunpack.c.l.b16 %v372
  %v389 = vunpack.c.h.b16 %v372
  %v390 = vunpack.c.l.b16 %v373
  %v391 = vunpack.c.h.b16 %v373
  %v392 = vunpack.c.l.b16 %v374
  %v393 = vunpack.c.h.b16 %v374
  %v394 = vunpack.c.l.b16 %v375
  %v395 = vunpack.c.h.b16 %v375
  %v396 = vunpack.c.l.b16 %v376
  %v397 = vunpack.c.h.b16 %v376
  %v398 = vunpack.c.l.b16 %v377
  %v399 = vunpack.c.h.b16 %v377
  %v400 = vunpack.c.l.b16 %v378
  %v401 = vunpack.c.h.b16 %v378
  %v402 = vunpack.c.l.b16 %v379
  %v403 = vunpack.c.h.b16 %v379
  %v404 = vpack.c.b16 %v390, %v388
  %v405 = vpack.c.b16 %v391, %v389
  %v406 = vpack.c.b16 %v394, %v392
  %v407 = vpack.c.b16 %v395, %v393
  %v408 = vpack.c.b16 %v398, %v396
  %v409 = vpack.c.b16 %v399, %v397
  %v410 = vpack.c.b16 %v402, %v400
  %v411 = vpack.c.b16 %v403, %v401
  %420 = vmatprep.subr.bf16.mxu0 0
  %421 = vmatpush1.bf16.msra.mxu0 %v160
  %422 = vmatprep.subr.bf16.mxu0 0
  %423 = vmatpush1.bf16.msra.mxu0 %v161
  %424 = vmatprep.subr.bf16.mxu0 0
  %425 = vmatpush1.bf16.msra.mxu0 %v162
  %426 = vmatprep.subr.bf16.mxu0 0
  %427 = vmatpush1.bf16.msra.mxu0 %v163
  %428 = vmatprep.subr.bf16.mxu0 0
  %429 = vmatpush1.bf16.msra.mxu0 %v164
  %430 = vmatprep.subr.bf16.mxu0 0
  %431 = vmatpush1.bf16.msra.mxu0 %v165
  %432 = vmatprep.subr.bf16.mxu0 0
  %433 = vmatpush1.bf16.msra.mxu0 %v166
  %434 = vmatprep.subr.bf16.mxu0 0
  %435 = vmatpush1.bf16.msra.mxu0 %v167
  %436 = vmatprep.subr.bf16.mxu0 0
  %437 = vmatpush1.bf16.msra.mxu0 %v168
  %438 = vmatprep.subr.bf16.mxu0 0
  %439 = vmatpush1.bf16.msra.mxu0 %v169
  %440 = vmatprep.subr.bf16.mxu0 0
  %441 = vmatpush1.bf16.msra.mxu0 %v170
  %442 = vmatprep.subr.bf16.mxu0 0
  %443 = vmatpush1.bf16.msra.mxu0 %v171
  %444 = vmatprep.subr.bf16.mxu0 0
  %445 = vmatpush1.bf16.msra.mxu0 %v172
  %446 = vmatprep.subr.bf16.mxu0 0
  %447 = vmatpush1.bf16.msra.mxu0 %v173
  %448 = vmatprep.subr.bf16.mxu0 0
  %449 = vmatpush1.bf16.msra.mxu0 %v174
  %450 = vmatprep.subr.bf16.mxu0 0
  %451 = vmatpush1.bf16.msra.mxu0 %v175
  %452 = vmatprep.mubr.bf16.mxu0 %v405
  %453 = vmatmul.mubr.bf16.gmra.mrb[0].mxu0 %v404
  %v454 = vpop.f32.mrb[0].mxu0
  %v455 = vadd.f32 0.0, %v454
  %v456 = vpop.f32.mrb[0].mxu0
  %v457 = vpop.f32.mrb[0].mxu0
  %v458 = vadd.f32 0.0, %v457
  %v459 = vpop.f32.mrb[0].mxu0
  %460 = vmatprep.mubr.bf16.mxu0 %v407
  %461 = vmatmul.mubr.bf16.gmra.mrb[0].mxu0 %v406
  %v462 = vpop.f32.mrb[0].mxu0
  %v463 = vadd.f32 0.0, %v462
  %v464 = vpop.f32.mrb[0].mxu0
  %v465 = vpop.f32.mrb[0].mxu0
  %v466 = vadd.f32 0.0, %v465
  %v467 = vpop.f32.mrb[0].mxu0
  %468 = vmatprep.mubr.bf16.mxu0 %v409
  %469 = vmatmul.mubr.bf16.gmra.mrb[0].mxu0 %v408
  %v470 = vpop.f32.mrb[0].mxu0
  %v471 = vadd.f32 0.0, %v470
  %v472 = vpop.f32.mrb[0].mxu0
  %v473 = vpop.f32.mrb[0].mxu0
  %v474 = vadd.f32 0.0, %v473
  %v475 = vpop.f32.mrb[0].mxu0
  %476 = vmatprep.mubr.bf16.mxu0 %v411
  %477 = vmatmul.mubr.bf16.gmra.mrb[0].mxu0 %v410
  %v478 = vpop.f32.mrb[0].mxu0
  %v479 = vadd.f32 0.0, %v478
  %v480 = vpop.f32.mrb[0].mxu0
  %v481 = vpop.f32.mrb[0].mxu0
  %v482 = vadd.f32 0.0, %v481
  %v483 = vpop.f32.mrb[0].mxu0
  %484 = vdwg.mxu0
  %s485 = scalar_lea.vmem %s0, 192
  %v486 = vld [vmem:[%s485] sm:$0xff]
  %v487 = vld [vmem:[%s485 + $0x8] sm:$0xff]
  %v488 = vld [vmem:[%s485 + $0x10] sm:$0xff]
  %v489 = vld [vmem:[%s485 + $0x18] sm:$0xff]
  %v490 = vld [vmem:[%s485 + $0x20] sm:$0xff]
  %v491 = vld [vmem:[%s485 + $0x28] sm:$0xff]
  %v492 = vld [vmem:[%s485 + $0x30] sm:$0xff]
  %v493 = vld [vmem:[%s485 + $0x38] sm:$0xff]
  %v502 = vunpack.c.l.b16 %v486
  %v503 = vunpack.c.h.b16 %v486
  %v504 = vunpack.c.l.b16 %v487
  %v505 = vunpack.c.h.b16 %v487
  %v506 = vunpack.c.l.b16 %v488
  %v507 = vunpack.c.h.b16 %v488
  %v508 = vunpack.c.l.b16 %v489
  %v509 = vunpack.c.h.b16 %v489
  %v510 = vunpack.c.l.b16 %v490
  %v511 = vunpack.c.h.b16 %v490
  %v512 = vunpack.c.l.b16 %v491
  %v513 = vunpack.c.h.b16 %v491
  %v514 = vunpack.c.l.b16 %v492
  %v515 = vunpack.c.h.b16 %v492
  %v516 = vunpack.c.l.b16 %v493
  %v517 = vunpack.c.h.b16 %v493
  %v518 = vpack.c.b16 %v504, %v502
  %v519 = vpack.c.b16 %v505, %v503
  %v520 = vpack.c.b16 %v508, %v506
  %v521 = vpack.c.b16 %v509, %v507
  %v522 = vpack.c.b16 %v512, %v510
  %v523 = vpack.c.b16 %v513, %v511
  %v524 = vpack.c.b16 %v516, %v514
  %v525 = vpack.c.b16 %v517, %v515
  %534 = vmatprep.subr.bf16.mxu0 0
  %535 = vmatpush1.bf16.msra.mxu0 %v160
  %536 = vmatprep.subr.bf16.mxu0 0
  %537 = vmatpush1.bf16.msra.mxu0 %v161
  %538 = vmatprep.subr.bf16.mxu0 0
  %539 = vmatpush1.bf16.msra.mxu0 %v162
  %540 = vmatprep.subr.bf16.mxu0 0
  %541 = vmatpush1.bf16.msra.mxu0 %v163
  %542 = vmatprep.subr.bf16.mxu0 0
  %543 = vmatpush1.bf16.msra.mxu0 %v164
  %544 = vmatprep.subr.bf16.mxu0 0
  %545 = vmatpush1.bf16.msra.mxu0 %v165
  %546 = vmatprep.subr.bf16.mxu0 0
  %547 = vmatpush1.bf16.msra.mxu0 %v166
  %548 = vmatprep.subr.bf16.mxu0 0
  %549 = vmatpush1.bf16.msra.mxu0 %v167
  %550 = vmatprep.subr.bf16.mxu0 0
  %551 = vmatpush1.bf16.msra.mxu0 %v168
  %552 = vmatprep.subr.bf16.mxu0 0
  %553 = vmatpush1.bf16.msra.mxu0 %v169
  %554 = vmatprep.subr.bf16.mxu0 0
  %555 = vmatpush1.bf16.msra.mxu0 %v170
  %556 = vmatprep.subr.bf16.mxu0 0
  %557 = vmatpush1.bf16.msra.mxu0 %v171
  %558 = vmatprep.subr.bf16.mxu0 0
  %559 = vmatpush1.bf16.msra.mxu0 %v172
  %560 = vmatprep.subr.bf16.mxu0 0
  %561 = vmatpush1.bf16.msra.mxu0 %v173
  %562 = vmatprep.subr.bf16.mxu0 0
  %563 = vmatpush1.bf16.msra.mxu0 %v174
  %564 = vmatprep.subr.bf16.mxu0 0
  %565 = vmatpush1.bf16.msra.mxu0 %v175
  %566 = vmatprep.mubr.bf16.mxu0 %v519
  %567 = vmatmul.mubr.bf16.gmra.mrb[0].mxu0 %v518
  %v568 = vpop.f32.mrb[0].mxu0
  %v569 = vadd.f32 0.0, %v568
  %v570 = vpop.f32.mrb[0].mxu0
  %v571 = vpop.f32.mrb[0].mxu0
  %v572 = vadd.f32 0.0, %v571
  %v573 = vpop.f32.mrb[0].mxu0
  %574 = vmatprep.mubr.bf16.mxu0 %v521
  %575 = vmatmul.mubr.bf16.gmra.mrb[0].mxu0 %v520
  %v576 = vpop.f32.mrb[0].mxu0
  %v577 = vadd.f32 0.0, %v576
  %v578 = vpop.f32.mrb[0].mxu0
  %v579 = vpop.f32.mrb[0].mxu0
  %v580 = vadd.f32 0.0, %v579
  %v581 = vpop.f32.mrb[0].mxu0
  %582 = vmatprep.mubr.bf16.mxu0 %v523
  %583 = vmatmul.mubr.bf16.gmra.mrb[0].mxu0 %v522
  %v584 = vpop.f32.mrb[0].mxu0
  %v585 = vadd.f32 0.0, %v584
  %v586 = vpop.f32.mrb[0].mxu0
  %v587 = vpop.f32.mrb[0].mxu0
  %v588 = vadd.f32 0.0, %v587
  %v589 = vpop.f32.mrb[0].mxu0
  %590 = vmatprep.mubr.bf16.mxu0 %v525
  %591 = vmatmul.mubr.bf16.gmra.mrb[0].mxu0 %v524
  %v592 = vpop.f32.mrb[0].mxu0
  %v593 = vadd.f32 0.0, %v592
  %v594 = vpop.f32.mrb[0].mxu0
  %v595 = vpop.f32.mrb[0].mxu0
  %v596 = vadd.f32 0.0, %v595
  %v597 = vpop.f32.mrb[0].mxu0
  %598 = vdwg.mxu0
  %v599 = vmax.f32 %v227, %v341
  %v600 = vmax.f32 %v230, %v344
  %v601 = vmax.f32 %v235, %v349
  %v602 = vmax.f32 %v238, %v352
  %v603 = vmax.f32 %v243, %v357
  %v604 = vmax.f32 %v246, %v360
  %v605 = vmax.f32 %v251, %v365
  %v606 = vmax.f32 %v254, %v368
  %v607 = vmax.f32 %v455, %v569
  %v608 = vmax.f32 %v458, %v572
  %v609 = vmax.f32 %v463, %v577
  %v610 = vmax.f32 %v466, %v580
  %v611 = vmax.f32 %v471, %v585
  %v612 = vmax.f32 %v474, %v588
  %v613 = vmax.f32 %v479, %v593
  %v614 = vmax.f32 %v482, %v596
  %v615 = vmax.f32 %v599, %v607
  %v616 = vmax.f32 %v600, %v608
  %v617 = vmax.f32 %v601, %v609
  %v618 = vmax.f32 %v602, %v610
  %v619 = vmax.f32 %v603, %v611
  %v620 = vmax.f32 %v604, %v612
  %v621 = vmax.f32 %v605, %v613
  %v622 = vmax.f32 %v606, %v614
  %v624 = vlaneseq
  %v625 = vshrl.u32 %v624, 7
  %v626 = vsub.s32 0, %v625
  %v627 = vrot.slane %v47, %v626
  %v629 = vadd.f32 %v615, %v627
  %v630 = vadd.f32 %v616, %v627
  %v631 = vadd.f32 %v617, %v627
  %v632 = vadd.f32 %v618, %v627
  %v633 = vadd.f32 %v619, %v627
  %v634 = vadd.f32 %v620, %v627
  %v635 = vadd.f32 %v621, %v627
  %v636 = vadd.f32 %v622, %v627
  %v637 = vmax.f32 %v629, 0.0
  %v638 = vmax.f32 %v630, 0.0
  %v639 = vmax.f32 %v631, 0.0
  %v640 = vmax.f32 %v632, 0.0
  %v641 = vmax.f32 %v633, 0.0
  %v642 = vmax.f32 %v634, 0.0
  %v643 = vmax.f32 %v635, 0.0
  %v644 = vmax.f32 %v636, 0.0
  %v645 = vpack.c.bf16 %v638, %v637
  %v646 = vpack.c.bf16 %v640, %v639
  %v647 = vpack.c.bf16 %v642, %v641
  %v648 = vpack.c.bf16 %v644, %v643
  %v653 = vunpack.c.l.b16 %v645
  %v654 = vunpack.c.h.b16 %v645
  %v655 = vunpack.c.l.b16 %v646
  %v656 = vunpack.c.h.b16 %v646
  %v657 = vunpack.c.l.b16 %v647
  %v658 = vunpack.c.h.b16 %v647
  %v659 = vunpack.c.l.b16 %v648
  %v660 = vunpack.c.h.b16 %v648
  %v661 = vpack.c.b16 %v653, %v653
  %v662 = vpack.c.b16 %v654, %v654
  %v663 = vpack.c.b16 %v655, %v655
  %v664 = vpack.c.b16 %v656, %v656
  %v665 = vpack.c.b16 %v657, %v657
  %v666 = vpack.c.b16 %v658, %v658
  %v667 = vpack.c.b16 %v659, %v659
  %v668 = vpack.c.b16 %v660, %v660
  %677 = vst [vmem:[%s3] sm:$0xf] %v661
  %678 = vst [vmem:[%s3 + $0x4] sm:$0xf] %v662
  %679 = vst [vmem:[%s3 + $0x8] sm:$0xf] %v663
  %680 = vst [vmem:[%s3 + $0xc] sm:$0xf] %v664
  %681 = vst [vmem:[%s3 + $0x10] sm:$0xf] %v665
  %682 = vst [vmem:[%s3 + $0x14] sm:$0xf] %v666
  %683 = vst [vmem:[%s3 + $0x18] sm:$0xf] %v667
  %684 = vst [vmem:[%s3 + $0x1c] sm:$0xf] %v668
  // Predicated region
  $region14: #{follower_cifar_forward.4} parent=0 // pred_check
    _
  $region15: #{follower_cifar_forward.4} parent=0 // pred_check_branch
    %686 = sbr.rel (0) target = $region17
  $region16: #{follower_cifar_forward.4} parent=0 // pred_region
    _
  $region17: #{follower_cifar_forward.4} parent=0 // pred_fallthru
    _
  // Predicated region
  $region18: #{follower_cifar_forward.4} parent=0 // pred_check
    _
  $region19: #{follower_cifar_forward.4} parent=0 // pred_check_branch
    %688 = sbr.rel (0) target = $region21
  $region20: #{follower_cifar_forward.4} parent=0 // pred_region
    _
  $region21: #{follower_cifar_forward.4} parent=0 // pred_fallthru
    _

// kernel: follower_cifar_forward.5
$region0: #{follower_cifar_forward.5}
  #allocation0 [shape = 'u32[]', space=smem, size = 0x4, offset = 0x4, fixed_abs, tag = 'smem constant byte address 0x4 - core index']
  #allocation1 [shape = 'u32[144,128]{1,0:T(1,128)}', space=vmem, size = 0x12000, scoped, tag = 'internal scratch']
  %s0 = inlined_call_operand.vmem [shape: bf16[16,512], index: 0, kind: input, shape index: {}]
  %s1 = inlined_call_operand.vmem [shape: bf16[512,128], index: 1, kind: input, shape index: {}]
  %s2 = inlined_call_operand.vmem [shape: f32[1,128], index: 2, kind: input, shape index: {}]
  %s3 = inlined_call_operand.vmem [shape: bf16[128,128], index: 3, kind: input, shape index: {}]
  %s4 = inlined_call_operand.vmem [shape: f32[1,128], index: 4, kind: input, shape index: {}]
  %s5 = inlined_call_operand.vmem [shape: bf16[128,128], index: 5, kind: input, shape index: {}]
  %s6 = inlined_call_operand.vmem [shape: f32[1,128], index: 6, kind: input, shape index: {}]
  %s7 = inlined_call_operand.vmem [shape: f32[16,128], index: 7, kind: output, shape index: {}]
  %s8 = sld [smem:[#allocation0]]
  $region38: #{follower_cifar_forward.5} parent=0
    _
  %s10 = ssub.s32 1, %s8
  %s11 = scalar_select 0, %s10, %s8
  // Predicated region
  $region2: #{follower_cifar_forward.5} parent=0 // pred_check
    _
  $region3: #{follower_cifar_forward.5} parent=0 // pred_check_branch
    %13 = sbr.rel (0) target = $region5
  $region4: #{follower_cifar_forward.5} parent=0 // pred_region
    _
  $region5: #{follower_cifar_forward.5} parent=0 // pred_fallthru
    _
  // Predicated region
  $region6: #{follower_cifar_forward.5} parent=0 // pred_check
    _
  $region7: #{follower_cifar_forward.5} parent=0 // pred_check_branch
    %15 = sbr.rel (0) target = $region9
  $region8: #{follower_cifar_forward.5} parent=0 // pred_region
    _
  $region9: #{follower_cifar_forward.5} parent=0 // pred_fallthru
    _
  // Predicated region
  $region10: #{follower_cifar_forward.5} parent=0 // pred_check
    _
  $region11: #{follower_cifar_forward.5} parent=0 // pred_check_branch
    %17 = sbr.rel (0) target = $region13
  $region12: #{follower_cifar_forward.5} parent=0 // pred_region
    _
  $region13: #{follower_cifar_forward.5} parent=0 // pred_fallthru
    _
  // Predicated region
  $region14: #{follower_cifar_forward.5} parent=0 // pred_check
    _
  $region15: #{follower_cifar_forward.5} parent=0 // pred_check_branch
    %19 = sbr.rel (0) target = $region17
  $region16: #{follower_cifar_forward.5} parent=0 // pred_region
    _
  $region17: #{follower_cifar_forward.5} parent=0 // pred_fallthru
    _
  // Predicated region
  $region18: #{follower_cifar_forward.5} parent=0 // pred_check
    _
  $region19: #{follower_cifar_forward.5} parent=0 // pred_check_branch
    %21 = sbr.rel (0) target = $region21
  $region20: #{follower_cifar_forward.5} parent=0 // pred_region
    _
  $region21: #{follower_cifar_forward.5} parent=0 // pred_fallthru
    _
  // Predicated region
  $region22: #{follower_cifar_forward.5} parent=0 // pred_check
    _
  $region23: #{follower_cifar_forward.5} parent=0 // pred_check_branch
    %23 = sbr.rel (0) target = $region25
  $region24: #{follower_cifar_forward.5} parent=0 // pred_region
    _
  $region25: #{follower_cifar_forward.5} parent=0 // pred_fallthru
    _
  // Predicated region
  $region26: #{follower_cifar_forward.5} parent=0 // pred_check
    _
  $region27: #{follower_cifar_forward.5} parent=0 // pred_check_branch
    %25 = sbr.rel (0) target = $region29
  $region28: #{follower_cifar_forward.5} parent=0 // pred_region
    _
  $region29: #{follower_cifar_forward.5} parent=0 // pred_fallthru
    _
  %v27 = vld [vmem:[%s0] sm:$0xff]
  %v28 = vld [vmem:[%s0 + $0x8] sm:$0xff]
  %v29 = vld [vmem:[%s0 + $0x10] sm:$0xff]
  %v30 = vld [vmem:[%s0 + $0x18] sm:$0xff]
  %v31 = vld [vmem:[%s1] sm:$0xf]
  %v32 = vld [vmem:[%s1 + $0x4] sm:$0xf]
  %v33 = vld [vmem:[%s1 + $0x8] sm:$0xf]
  %v34 = vld [vmem:[%s1 + $0xc] sm:$0xf]
  %v35 = vld [vmem:[%s1 + $0x10] sm:$0xf]
  %v36 = vld [vmem:[%s1 + $0x14] sm:$0xf]
  %v37 = vld [vmem:[%s1 + $0x18] sm:$0xf]
  %v38 = vld [vmem:[%s1 + $0x1c] sm:$0xf]
  %v39 = vld [vmem:[%s1 + $0x20] sm:$0xf]
  %v40 = vld [vmem:[%s1 + $0x24] sm:$0xf]
  %v41 = vld [vmem:[%s1 + $0x28] sm:$0xf]
  %v42 = vld [vmem:[%s1 + $0x2c] sm:$0xf]
  %v43 = vld [vmem:[%s1 + $0x30] sm:$0xf]
  %v44 = vld [vmem:[%s1 + $0x34] sm:$0xf]
  %v45 = vld [vmem:[%s1 + $0x38] sm:$0xf]
  %v46 = vld [vmem:[%s1 + $0x3c] sm:$0xf]
  %v47 = vld [vmem:[%s1 + $0x40] sm:$0xf]
  %v48 = vld [vmem:[%s1 + $0x44] sm:$0xf]
  %v49 = vld [vmem:[%s1 + $0x48] sm:$0xf]
  %v50 = vld [vmem:[%s1 + $0x4c] sm:$0xf]
  %v51 = vld [vmem:[%s1 + $0x50] sm:$0xf]
  %v52 = vld [vmem:[%s1 + $0x54] sm:$0xf]
  %v53 = vld [vmem:[%s1 + $0x58] sm:$0xf]
  %v54 = vld [vmem:[%s1 + $0x5c] sm:$0xf]
  %v55 = vld [vmem:[%s1 + $0x60] sm:$0xf]
  %v56 = vld [vmem:[%s1 + $0x64] sm:$0xf]
  %v57 = vld [vmem:[%s1 + $0x68] sm:$0xf]
  %v58 = vld [vmem:[%s1 + $0x6c] sm:$0xf]
  %v59 = vld [vmem:[%s1 + $0x70] sm:$0xf]
  %v60 = vld [vmem:[%s1 + $0x74] sm:$0xf]
  %v61 = vld [vmem:[%s1 + $0x78] sm:$0xf]
  %v62 = vld [vmem:[%s1 + $0x7c] sm:$0xf]
  %v63 = vld [vmem:[%s1 + $0x80] sm:$0xf]
  %v64 = vld [vmem:[%s1 + $0x84] sm:$0xf]
  %v65 = vld [vmem:[%s1 + $0x88] sm:$0xf]
  %v66 = vld [vmem:[%s1 + $0x8c] sm:$0xf]
  %v67 = vld [vmem:[%s1 + $0x90] sm:$0xf]
  %v68 = vld [vmem:[%s1 + $0x94] sm:$0xf]
  %v69 = vld [vmem:[%s1 + $0x98] sm:$0xf]
  %v70 = vld [vmem:[%s1 + $0x9c] sm:$0xf]
  %v71 = vld [vmem:[%s1 + $0xa0] sm:$0xf]
  %v72 = vld [vmem:[%s1 + $0xa4] sm:$0xf]
  %v73 = vld [vmem:[%s1 + $0xa8] sm:$0xf]
  %v74 = vld [vmem:[%s1 + $0xac] sm:$0xf]
  %v75 = vld [vmem:[%s1 + $0xb0] sm:$0xf]
  %v76 = vld [vmem:[%s1 + $0xb4] sm:$0xf]
  %v77 = vld [vmem:[%s1 + $0xb8] sm:$0xf]
  %v78 = vld [vmem:[%s1 + $0xbc] sm:$0xf]
  %v79 = vld [vmem:[%s1 + $0xc0] sm:$0xf]
  %v80 = vld [vmem:[%s1 + $0xc4] sm:$0xf]
  %v81 = vld [vmem:[%s1 + $0xc8] sm:$0xf]
  %v82 = vld [vmem:[%s1 + $0xcc] sm:$0xf]
  %v83 = vld [vmem:[%s1 + $0xd0] sm:$0xf]
  %v84 = vld [vmem:[%s1 + $0xd4] sm:$0xf]
  %v85 = vld [vmem:[%s1 + $0xd8] sm:$0xf]
  %v86 = vld [vmem:[%s1 + $0xdc] sm:$0xf]
  %v87 = vld [vmem:[%s1 + $0xe0] sm:$0xf]
  %v88 = vld [vmem:[%s1 + $0xe4] sm:$0xf]
  %v89 = vld [vmem:[%s1 + $0xe8] sm:$0xf]
  %v90 = vld [vmem:[%s1 + $0xec] sm:$0xf]
  %v91 = vld [vmem:[%s1 + $0xf0] sm:$0xf]
  %v92 = vld [vmem:[%s1 + $0xf4] sm:$0xf]
  %v93 = vld [vmem:[%s1 + $0xf8] sm:$0xf]
  %v94 = vld [vmem:[%s1 + $0xfc] sm:$0xf]
  %v95 = vld [vmem:[%s2] sm:$0x1]
  %v97 = vlaneseq
  %v98 = vshrl.u32 %v97, 7
  %v99 = vsub.s32 0, %v98
  %v100 = vrot.slane %v95, %v99
  %v106 = vunpack.c.l.b16 %v27
  %v107 = vunpack.c.h.b16 %v27
  %v108 = vunpack.c.l.b16 %v28
  %v109 = vunpack.c.h.b16 %v28
  %v110 = vunpack.c.l.b16 %v29
  %v111 = vunpack.c.h.b16 %v29
  %v112 = vunpack.c.l.b16 %v30
  %v113 = vunpack.c.h.b16 %v30
  %v114 = vpack.c.b16 %v110, %v106
  %v115 = vpack.c.b16 %v111, %v107
  %v116 = vpack.c.b16 %v112, %v108
  %v117 = vpack.c.b16 %v113, %v109
  %v186 = vunpack.c.l.b16 %v31
  %v187 = vunpack.c.l.b16 %v32
  %v188 = vunpack.c.l.b16 %v33
  %v189 = vunpack.c.l.b16 %v34
  %v190 = vunpack.c.l.b16 %v35
  %v191 = vunpack.c.l.b16 %v36
  %v192 = vunpack.c.l.b16 %v37
  %v193 = vunpack.c.l.b16 %v38
  %v194 = vunpack.c.l.b16 %v39
  %v195 = vunpack.c.l.b16 %v40
  %v196 = vunpack.c.l.b16 %v41
  %v197 = vunpack.c.l.b16 %v42
  %v198 = vunpack.c.l.b16 %v43
  %v199 = vunpack.c.l.b16 %v44
  %v200 = vunpack.c.l.b16 %v45
  %v201 = vunpack.c.l.b16 %v46
  %v202 = vunpack.c.l.b16 %v47
  %v203 = vunpack.c.l.b16 %v48
  %v204 = vunpack.c.l.b16 %v49
  %v205 = vunpack.c.l.b16 %v50
  %v206 = vunpack.c.l.b16 %v51
  %v207 = vunpack.c.l.b16 %v52
  %v208 = vunpack.c.l.b16 %v53
  %v209 = vunpack.c.l.b16 %v54
  %v210 = vunpack.c.l.b16 %v55
  %v211 = vunpack.c.l.b16 %v56
  %v212 = vunpack.c.l.b16 %v57
  %v213 = vunpack.c.l.b16 %v58
  %v214 = vunpack.c.l.b16 %v59
  %v215 = vunpack.c.l.b16 %v60
  %v216 = vunpack.c.l.b16 %v61
  %v217 = vunpack.c.l.b16 %v62
  %v218 = vunpack.c.l.b16 %v63
  %v219 = vunpack.c.l.b16 %v64
  %v220 = vunpack.c.l.b16 %v65
  %v221 = vunpack.c.l.b16 %v66
  %v222 = vunpack.c.l.b16 %v67
  %v223 = vunpack.c.l.b16 %v68
  %v224 = vunpack.c.l.b16 %v69
  %v225 = vunpack.c.l.b16 %v70
  %v226 = vunpack.c.l.b16 %v71
  %v227 = vunpack.c.l.b16 %v72
  %v228 = vunpack.c.l.b16 %v73
  %v229 = vunpack.c.l.b16 %v74
  %v230 = vunpack.c.l.b16 %v75
  %v231 = vunpack.c.l.b16 %v76
  %v232 = vunpack.c.l.b16 %v77
  %v233 = vunpack.c.l.b16 %v78
  %v234 = vunpack.c.l.b16 %v79
  %v235 = vunpack.c.l.b16 %v80
  %v236 = vunpack.c.l.b16 %v81
  %v237 = vunpack.c.l.b16 %v82
  %v238 = vunpack.c.l.b16 %v83
  %v239 = vunpack.c.l.b16 %v84
  %v240 = vunpack.c.l.b16 %v85
  %v241 = vunpack.c.l.b16 %v86
  %v242 = vunpack.c.l.b16 %v87
  %v243 = vunpack.c.l.b16 %v88
  %v244 = vunpack.c.l.b16 %v89
  %v245 = vunpack.c.l.b16 %v90
  %v246 = vunpack.c.l.b16 %v91
  %v247 = vunpack.c.l.b16 %v92
  %v248 = vunpack.c.l.b16 %v93
  %v249 = vunpack.c.l.b16 %v94
  %v250 = vpack.c.b16 %v187, %v186
  %v251 = vpack.c.b16 %v189, %v188
  %v252 = vpack.c.b16 %v191, %v190
  %v253 = vpack.c.b16 %v193, %v192
  %v254 = vpack.c.b16 %v195, %v194
  %v255 = vpack.c.b16 %v197, %v196
  %v256 = vpack.c.b16 %v199, %v198
  %v257 = vpack.c.b16 %v201, %v200
  %v258 = vpack.c.b16 %v203, %v202
  %v259 = vpack.c.b16 %v205, %v204
  %v260 = vpack.c.b16 %v207, %v206
  %v261 = vpack.c.b16 %v209, %v208
  %v262 = vpack.c.b16 %v211, %v210
  %v263 = vpack.c.b16 %v213, %v212
  %v264 = vpack.c.b16 %v215, %v214
  %v265 = vpack.c.b16 %v217, %v216
  %v266 = vpack.c.b16 %v219, %v218
  %v267 = vpack.c.b16 %v221, %v220
  %v268 = vpack.c.b16 %v223, %v222
  %v269 = vpack.c.b16 %v225, %v224
  %v270 = vpack.c.b16 %v227, %v226
  %v271 = vpack.c.b16 %v229, %v228
  %v272 = vpack.c.b16 %v231, %v230
  %v273 = vpack.c.b16 %v233, %v232
  %v274 = vpack.c.b16 %v235, %v234
  %v275 = vpack.c.b16 %v237, %v236
  %v276 = vpack.c.b16 %v239, %v238
  %v277 = vpack.c.b16 %v241, %v240
  %v278 = vpack.c.b16 %v243, %v242
  %v279 = vpack.c.b16 %v245, %v244
  %v280 = vpack.c.b16 %v247, %v246
  %v281 = vpack.c.b16 %v249, %v248
  %314 = vmatprep.subr.bf16.mxu0 0
  %315 = vmatpush1.bf16.msra.mxu0 %v250
  %316 = vmatprep.subr.bf16.mxu0 0
  %317 = vmatpush1.bf16.msra.mxu0 %v251
  %318 = vmatprep.subr.bf16.mxu0 0
  %319 = vmatpush1.bf16.msra.mxu0 %v252
  %320 = vmatprep.subr.bf16.mxu0 0
  %321 = vmatpush1.bf16.msra.mxu0 %v253
  %322 = vmatprep.subr.bf16.mxu0 0
  %323 = vmatpush1.bf16.msra.mxu0 %v254
  %324 = vmatprep.subr.bf16.mxu0 0
  %325 = vmatpush1.bf16.msra.mxu0 %v255
  %326 = vmatprep.subr.bf16.mxu0 0
  %327 = vmatpush1.bf16.msra.mxu0 %v256
  %328 = vmatprep.subr.bf16.mxu0 0
  %329 = vmatpush1.bf16.msra.mxu0 %v257
  %330 = vmatprep.subr.bf16.mxu0 0
  %331 = vmatpush1.bf16.msra.mxu0 %v258
  %332 = vmatprep.subr.bf16.mxu0 0
  %333 = vmatpush1.bf16.msra.mxu0 %v259
  %334 = vmatprep.subr.bf16.mxu0 0
  %335 = vmatpush1.bf16.msra.mxu0 %v260
  %336 = vmatprep.subr.bf16.mxu0 0
  %337 = vmatpush1.bf16.msra.mxu0 %v261
  %338 = vmatprep.subr.bf16.mxu0 0
  %339 = vmatpush1.bf16.msra.mxu0 %v262
  %340 = vmatprep.subr.bf16.mxu0 0
  %341 = vmatpush1.bf16.msra.mxu0 %v263
  %342 = vmatprep.subr.bf16.mxu0 0
  %343 = vmatpush1.bf16.msra.mxu0 %v264
  %344 = vmatprep.subr.bf16.mxu0 0
  %345 = vmatpush1.bf16.msra.mxu0 %v265
  %346 = vmatprep.mubr.bf16.mxu0 %v115
  %347 = vmatmul.mubr.bf16.gmra.mrb[0].mxu0 %v114
  %v348 = vpop.f32.mrb[0].mxu0
  %v349 = vadd.f32 %v100, %v348
  %v350 = vpop.f32.mrb[0].mxu0
  %v351 = vpop.f32.mrb[0].mxu0
  %v352 = vadd.f32 %v100, %v351
  %v353 = vpop.f32.mrb[0].mxu0
  %354 = vdwg.mxu0
  %355 = vmatprep.subr.bf16.mxu0 0
  %356 = vmatpush1.bf16.msra.mxu0 %v266
  %357 = vmatprep.subr.bf16.mxu0 0
  %358 = vmatpush1.bf16.msra.mxu0 %v267
  %359 = vmatprep.subr.bf16.mxu0 0
  %360 = vmatpush1.bf16.msra.mxu0 %v268
  %361 = vmatprep.subr.bf16.mxu0 0
  %362 = vmatpush1.bf16.msra.mxu0 %v269
  %363 = vmatprep.subr.bf16.mxu0 0
  %364 = vmatpush1.bf16.msra.mxu0 %v270
  %365 = vmatprep.subr.bf16.mxu0 0
  %366 = vmatpush1.bf16.msra.mxu0 %v271
  %367 = vmatprep.subr.bf16.mxu0 0
  %368 = vmatpush1.bf16.msra.mxu0 %v272
  %369 = vmatprep.subr.bf16.mxu0 0
  %370 = vmatpush1.bf16.msra.mxu0 %v273
  %371 = vmatprep.subr.bf16.mxu0 0
  %372 = vmatpush1.bf16.msra.mxu0 %v274
  %373 = vmatprep.subr.bf16.mxu0 0
  %374 = vmatpush1.bf16.msra.mxu0 %v275
  %375 = vmatprep.subr.bf16.mxu0 0
  %376 = vmatpush1.bf16.msra.mxu0 %v276
  %377 = vmatprep.subr.bf16.mxu0 0
  %378 = vmatpush1.bf16.msra.mxu0 %v277
  %379 = vmatprep.subr.bf16.mxu0 0
  %380 = vmatpush1.bf16.msra.mxu0 %v278
  %381 = vmatprep.subr.bf16.mxu0 0
  %382 = vmatpush1.bf16.msra.mxu0 %v279
  %383 = vmatprep.subr.bf16.mxu0 0
  %384 = vmatpush1.bf16.msra.mxu0 %v280
  %385 = vmatprep.subr.bf16.mxu0 0
  %386 = vmatpush1.bf16.msra.mxu0 %v281
  %387 = vmatprep.mubr.bf16.mxu0 %v117
  %388 = vmatmul.mubr.bf16.gmra.mrb[0].mxu0 %v116
  %v389 = vpop.f32.mrb[0].mxu0
  %v390 = vadd.f32 %v349, %v389
  %v391 = vpop.f32.mrb[0].mxu0
  %v392 = vpop.f32.mrb[0].mxu0
  %v393 = vadd.f32 %v352, %v392
  %v394 = vpop.f32.mrb[0].mxu0
  %395 = vdwg.mxu0
  %v396 = vmax.f32 %v390, 0.0
  %v397 = vmax.f32 %v393, 0.0
  %v398 = vpack.c.bf16 %v397, %v396
  %v399 = vld [vmem:[%s3] sm:$0xf]
  %v400 = vld [vmem:[%s3 + $0x4] sm:$0xf]
  %v401 = vld [vmem:[%s3 + $0x8] sm:$0xf]
  %v402 = vld [vmem:[%s3 + $0xc] sm:$0xf]
  %v403 = vld [vmem:[%s3 + $0x10] sm:$0xf]
  %v404 = vld [vmem:[%s3 + $0x14] sm:$0xf]
  %v405 = vld [vmem:[%s3 + $0x18] sm:$0xf]
  %v406 = vld [vmem:[%s3 + $0x1c] sm:$0xf]
  %v407 = vld [vmem:[%s3 + $0x20] sm:$0xf]
  %v408 = vld [vmem:[%s3 + $0x24] sm:$0xf]
  %v409 = vld [vmem:[%s3 + $0x28] sm:$0xf]
  %v410 = vld [vmem:[%s3 + $0x2c] sm:$0xf]
  %v411 = vld [vmem:[%s3 + $0x30] sm:$0xf]
  %v412 = vld [vmem:[%s3 + $0x34] sm:$0xf]
  %v413 = vld [vmem:[%s3 + $0x38] sm:$0xf]
  %v414 = vld [vmem:[%s3 + $0x3c] sm:$0xf]
  %v415 = vld [vmem:[%s4] sm:$0x1]
  %v417 = vlaneseq
  %v418 = vshrl.u32 %v417, 7
  %v419 = vsub.s32 0, %v418
  %v420 = vrot.slane %v415, %v419
  %v438 = vunpack.c.l.b16 %v399
  %v439 = vunpack.c.l.b16 %v400
  %v440 = vunpack.c.l.b16 %v401
  %v441 = vunpack.c.l.b16 %v402
  %v442 = vunpack.c.l.b16 %v403
  %v443 = vunpack.c.l.b16 %v404
  %v444 = vunpack.c.l.b16 %v405
  %v445 = vunpack.c.l.b16 %v406
  %v446 = vunpack.c.l.b16 %v407
  %v447 = vunpack.c.l.b16 %v408
  %v448 = vunpack.c.l.b16 %v409
  %v449 = vunpack.c.l.b16 %v410
  %v450 = vunpack.c.l.b16 %v411
  %v451 = vunpack.c.l.b16 %v412
  %v452 = vunpack.c.l.b16 %v413
  %v453 = vunpack.c.l.b16 %v414
  %v454 = vpack.c.b16 %v439, %v438
  %v455 = vpack.c.b16 %v441, %v440
  %v456 = vpack.c.b16 %v443, %v442
  %v457 = vpack.c.b16 %v445, %v444
  %v458 = vpack.c.b16 %v447, %v446
  %v459 = vpack.c.b16 %v449, %v448
  %v460 = vpack.c.b16 %v451, %v450
  %v461 = vpack.c.b16 %v453, %v452
  %470 = vmatprep.subr.bf16.mxu0 0
  %471 = vmatpush1.bf16.msra.mxu0 %v454
  %472 = vmatprep.subr.bf16.mxu0 0
  %473 = vmatpush1.bf16.msra.mxu0 %v455
  %474 = vmatprep.subr.bf16.mxu0 0
  %475 = vmatpush1.bf16.msra.mxu0 %v456
  %476 = vmatprep.subr.bf16.mxu0 0
  %477 = vmatpush1.bf16.msra.mxu0 %v457
  %478 = vmatprep.subr.bf16.mxu0 0
  %479 = vmatpush1.bf16.msra.mxu0 %v458
  %480 = vmatprep.subr.bf16.mxu0 0
  %481 = vmatpush1.bf16.msra.mxu0 %v459
  %482 = vmatprep.subr.bf16.mxu0 0
  %483 = vmatpush1.bf16.msra.mxu0 %v460
  %484 = vmatprep.subr.bf16.mxu0 0
  %485 = vmatpush1.bf16.msra.mxu0 %v461
  %486 = vmatprep.subr.bf16.mxu0 0
  %487 = vmatpush1.bf16.msra.mxu0 0
  %488 = vmatprep.subr.bf16.mxu0 0
  %489 = vmatpush1.bf16.msra.mxu0 0
  %490 = vmatprep.subr.bf16.mxu0 0
  %491 = vmatpush1.bf16.msra.mxu0 0
  %492 = vmatprep.subr.bf16.mxu0 0
  %493 = vmatpush1.bf16.msra.mxu0 0
  %494 = vmatprep.subr.bf16.mxu0 0
  %495 = vmatpush1.bf16.msra.mxu0 0
  %496 = vmatprep.subr.bf16.mxu0 0
  %497 = vmatpush1.bf16.msra.mxu0 0
  %498 = vmatprep.subr.bf16.mxu0 0
  %499 = vmatpush1.bf16.msra.mxu0 0
  %500 = vmatprep.subr.bf16.mxu0 0
  %501 = vmatpush1.bf16.msra.mxu0 0
  %502 = vmatprep.mubr.bf16.mxu0 0
  %503 = vmatmul.mubr.bf16.gmra.mrb[0].mxu0 %v398
  %v504 = vpop.f32.mrb[0].mxu0
  %v505 = vadd.f32 %v420, %v504
  %v506 = vpop.f32.mrb[0].mxu0
  %v507 = vpop.f32.mrb[0].mxu0
  %v508 = vadd.f32 %v420, %v507
  %v509 = vpop.f32.mrb[0].mxu0
  %510 = vdwg.mxu0
  %v511 = vmax.f32 %v505, 0.0
  %v512 = vmax.f32 %v508, 0.0
  %v513 = vpack.c.bf16 %v512, %v511
  %v514 = vld [vmem:[%s5] sm:$0xf]
  %v515 = vld [vmem:[%s5 + $0x4] sm:$0xf]
  %v516 = vld [vmem:[%s5 + $0x8] sm:$0xf]
  %v517 = vld [vmem:[%s5 + $0xc] sm:$0xf]
  %v518 = vld [vmem:[%s5 + $0x10] sm:$0xf]
  %v519 = vld [vmem:[%s5 + $0x14] sm:$0xf]
  %v520 = vld [vmem:[%s5 + $0x18] sm:$0xf]
  %v521 = vld [vmem:[%s5 + $0x1c] sm:$0xf]
  %v522 = vld [vmem:[%s5 + $0x20] sm:$0xf]
  %v523 = vld [vmem:[%s5 + $0x24] sm:$0xf]
  %v524 = vld [vmem:[%s5 + $0x28] sm:$0xf]
  %v525 = vld [vmem:[%s5 + $0x2c] sm:$0xf]
  %v526 = vld [vmem:[%s5 + $0x30] sm:$0xf]
  %v527 = vld [vmem:[%s5 + $0x34] sm:$0xf]
  %v528 = vld [vmem:[%s5 + $0x38] sm:$0xf]
  %v529 = vld [vmem:[%s5 + $0x3c] sm:$0xf]
  %v530 = vld [vmem:[%s6] sm:$0x1]
  %v532 = vlaneseq
  %v533 = vshrl.u32 %v532, 7
  %v534 = vsub.s32 0, %v533
  %v535 = vrot.slane %v530, %v534
  %v553 = vunpack.c.l.b16 %v514
  %v554 = vunpack.c.l.b16 %v515
  %v555 = vunpack.c.l.b16 %v516
  %v556 = vunpack.c.l.b16 %v517
  %v557 = vunpack.c.l.b16 %v518
  %v558 = vunpack.c.l.b16 %v519
  %v559 = vunpack.c.l.b16 %v520
  %v560 = vunpack.c.l.b16 %v521
  %v561 = vunpack.c.l.b16 %v522
  %v562 = vunpack.c.l.b16 %v523
  %v563 = vunpack.c.l.b16 %v524
  %v564 = vunpack.c.l.b16 %v525
  %v565 = vunpack.c.l.b16 %v526
  %v566 = vunpack.c.l.b16 %v527
  %v567 = vunpack.c.l.b16 %v528
  %v568 = vunpack.c.l.b16 %v529
  %v569 = vpack.c.b16 %v554, %v553
  %v570 = vpack.c.b16 %v556, %v555
  %v571 = vpack.c.b16 %v558, %v557
  %v572 = vpack.c.b16 %v560, %v559
  %v573 = vpack.c.b16 %v562, %v561
  %v574 = vpack.c.b16 %v564, %v563
  %v575 = vpack.c.b16 %v566, %v565
  %v576 = vpack.c.b16 %v568, %v567
  %585 = vmatprep.subr.bf16.mxu0 0
  %586 = vmatpush1.bf16.msra.mxu0 %v569
  %587 = vmatprep.subr.bf16.mxu0 0
  %588 = vmatpush1.bf16.msra.mxu0 %v570
  %589 = vmatprep.subr.bf16.mxu0 0
  %590 = vmatpush1.bf16.msra.mxu0 %v571
  %591 = vmatprep.subr.bf16.mxu0 0
  %592 = vmatpush1.bf16.msra.mxu0 %v572
  %593 = vmatprep.subr.bf16.mxu0 0
  %594 = vmatpush1.bf16.msra.mxu0 %v573
  %595 = vmatprep.subr.bf16.mxu0 0
  %596 = vmatpush1.bf16.msra.mxu0 %v574
  %597 = vmatprep.subr.bf16.mxu0 0
  %598 = vmatpush1.bf16.msra.mxu0 %v575
  %599 = vmatprep.subr.bf16.mxu0 0
  %600 = vmatpush1.bf16.msra.mxu0 %v576
  %601 = vmatprep.subr.bf16.mxu0 0
  %602 = vmatpush1.bf16.msra.mxu0 0
  %603 = vmatprep.subr.bf16.mxu0 0
  %604 = vmatpush1.bf16.msra.mxu0 0
  %605 = vmatprep.subr.bf16.mxu0 0
  %606 = vmatpush1.bf16.msra.mxu0 0
  %607 = vmatprep.subr.bf16.mxu0 0
  %608 = vmatpush1.bf16.msra.mxu0 0
  %609 = vmatprep.subr.bf16.mxu0 0
  %610 = vmatpush1.bf16.msra.mxu0 0
  %611 = vmatprep.subr.bf16.mxu0 0
  %612 = vmatpush1.bf16.msra.mxu0 0
  %613 = vmatprep.subr.bf16.mxu0 0
  %614 = vmatpush1.bf16.msra.mxu0 0
  %615 = vmatprep.subr.bf16.mxu0 0
  %616 = vmatpush1.bf16.msra.mxu0 0
  %617 = vmatprep.mubr.bf16.mxu0 0
  %618 = vmatmul.mubr.bf16.gmra.mrb[0].mxu0 %v513
  %v619 = vpop.f32.mrb[0].mxu0
  %v620 = vadd.f32 %v535, %v619
  %v621 = vpop.f32.mrb[0].mxu0
  %v622 = vpop.f32.mrb[0].mxu0
  %v623 = vadd.f32 %v535, %v622
  %v624 = vpop.f32.mrb[0].mxu0
  %625 = vdwg.mxu0
  %626 = vst [vmem:[%s7] sm:$0xff] %v620
  %627 = vst [vmem:[%s7 + $0x8] sm:$0xff] %v623
  // Predicated region
  $region30: #{follower_cifar_forward.5} parent=0 // pred_check
    _
  $region31: #{follower_cifar_forward.5} parent=0 // pred_check_branch
    %629 = sbr.rel (0) target = $region33
  $region32: #{follower_cifar_forward.5} parent=0 // pred_region
    _
  $region33: #{follower_cifar_forward.5} parent=0 // pred_fallthru
    _
  // Predicated region
  $region34: #{follower_cifar_forward.5} parent=0 // pred_check
    _
  $region35: #{follower_cifar_forward.5} parent=0 // pred_check_branch
    %631 = sbr.rel (0) target = $region37
  $region36: #{follower_cifar_forward.5} parent=0 // pred_region
    _
  $region37: #{follower_cifar_forward.5} parent=0 // pred_fallthru
    _

</llo_original>
